<compile_context>
chip_gen: v6e
topology: v6e:2x2x1
jax: 0.10.0
libtpu: 0.0.40
codegen_flags: <defaults>
</compile_context>

<pallas_src>
import functools

import jax
import jax.numpy as jnp
import numpy as np
from jax import lax
from jax.experimental import pallas as pl
from jax.experimental.pallas import tpu as pltpu

_BN_EPS = 1e-5
_LANE = 128            # pad Cout to a multiple of this (lane-dense stores / MXU N)
_SUBLANE_BF16 = 16     # pad Cin to a multiple of this (bf16 packs 16 rows / vreg)
_STAT_ROWS = 8         # per-tile stats block rows: [sum, sum_sq, 6 x zero pad]
_IM2COL_MAX_K = 128    # fuse the 9 taps along K when per-tap depth <= this


def _round_up(n, m):
    return -(-n // m) * m


@functools.lru_cache(maxsize=None)
def _hw_config():
    """Returns (vmem_limit_bytes, target conv-output rows per grid step)."""
    vmem_bytes = 128 * 1024 * 1024
    try:
        vmem_bytes = int(pltpu.get_tpu_info().vmem_capacity_bytes)
    except Exception:
        pass                                # fall back to 128-MiB-class defaults
    if vmem_bytes <= 64 * 1024 * 1024:      # v7x-class: leave compiler headroom
        return 48 * 1024 * 1024, 1024
    return 64 * 1024 * 1024, 2048           # v5e / v6e (128 MiB physical VMEM)


def _compiler_params(vmem_limit):
    return pltpu.CompilerParams(
        dimension_semantics=("parallel",),
        vmem_limit_bytes=vmem_limit,
    )


# ----------------------------- in-kernel helpers -----------------------------


def _zero_halo(buf_ref):
    """Zero only the 1-pixel halo ring of a (TN, H+2, W+2, C) VMEM buffer."""
    tn, hp, wp, c = buf_ref.shape
    row0 = jnp.zeros((tn, 1, wp, c), buf_ref.dtype)
    col0 = jnp.zeros((tn, hp, 1, c), buf_ref.dtype)
    buf_ref[:, 0:1, :, :] = row0
    buf_ref[:, hp - 1:hp, :, :] = row0
    buf_ref[:, :, 0:1, :] = col0
    buf_ref[:, :, wp - 1:wp, :] = col0


def _conv3x3(taps, w_ref, use_im2col, m, cp):
    """9-tap 3x3 conv from (M, K) bf16 tap slices and a (3,3,K,cp) weight ref."""
    if use_im2col:
        k = taps[0].shape[-1]
        patch = jnp.concatenate(taps, axis=-1)            # (M, 9K) bf16
        w = w_ref[...].reshape(9 * k, cp)                 # matches tap order
        return jnp.dot(patch, w, preferred_element_type=jnp.float32)
    acc = jnp.zeros((m, cp), jnp.float32)
    for t in range(9):
        acc = acc + jnp.dot(taps[t], w_ref[t // 3, t % 3],
                            preferred_element_type=jnp.float32)
    return acc


def _emit_conv_and_stats(acc_f32, out_ref, stat_ref):
    """Store conv output (bf16) + per-tile BN partials (f32 sum / sum_sq)."""
    cp = acc_f32.shape[-1]
    out_ref[...] = acc_f32.reshape(out_ref.shape).astype(out_ref.dtype)
    stat_ref[...] = jnp.concatenate(
        [jnp.sum(acc_f32, axis=0, keepdims=True),
         jnp.sum(acc_f32 * acc_f32, axis=0, keepdims=True),
         jnp.zeros((_STAT_ROWS - 2, cp), jnp.float32)], axis=0)


# ----------------------------- Pallas kernels --------------------------------


def _conv1_kernel(*refs, stride, has_proj, use_im2col):
    """Raw 3x3 conv (+ fused 1x1 projection conv) + per-tile BN partial sums.

    stride == 1: input is the plain channel-padded bf16 tile; the zero halo is
    built in a VMEM scratch.  stride == 2: input is the phase-decomposed,
    spatially padded bf16 tile so every tap slice is contiguous.
    """
    if stride == 1:
        *refs, ybuf_ref = refs
    if has_proj:
        x_ref, w_ref, wsc_ref, z_ref, st_ref, zsc_ref, stsc_ref = refs
    else:
        x_ref, w_ref, z_ref, st_ref = refs

    tn, ho, wo, cp = z_ref.shape
    m = tn * ho * wo
    cin = x_ref.shape[-1]

    if stride == 1:
        _zero_halo(ybuf_ref)                        # ring only; interior below
        ybuf_ref[:, 1:1 + ho, 1:1 + wo, :] = x_ref[...]

        def tap(i, j):
            return ybuf_ref[:, i:i + ho, j:j + wo, :].reshape(m, cin)
    else:
        s = stride
        hph = x_ref.shape[1] // (s * s)

        def tap(i, j):
            ph = (i % s) * s + (j % s)
            r0 = ph * hph + i // s
            c0 = j // s
            return x_ref[:, r0:r0 + ho, c0:c0 + wo, :].reshape(m, cin)

    taps = [tap(i, j) for i in range(3) for j in range(3)]
    acc = _conv3x3(taps, w_ref, use_im2col, m, cp)
    _emit_conv_and_stats(acc, z_ref, st_ref)
    if has_proj:
        # 1x1 stride-s projection conv re-uses the center-tap slice.
        acc_sc = jnp.dot(taps[4], wsc_ref[...],
                         preferred_element_type=jnp.float32)
        _emit_conv_and_stats(acc_sc, zsc_ref, stsc_ref)


def _conv2_kernel(z1_ref, ab1_ref, w2_ref, z2_ref, st2_ref, ybuf_ref, *,
                  use_im2col):
    """relu(BN1(z1)) fused into the load -> zero-halo VMEM buffer -> raw 3x3
    conv (stride 1) + per-tile BN partial sums."""
    tn, ho, wo, cp = z1_ref.shape
    m = tn * ho * wo

    y1 = jnp.maximum(z1_ref[...].astype(jnp.float32) * ab1_ref[0:1, :]
                     + ab1_ref[1:2, :], 0.0)
    _zero_halo(ybuf_ref)                            # ring only; interior below
    ybuf_ref[:, 1:1 + ho, 1:1 + wo, :] = y1.astype(jnp.bfloat16)

    taps = [ybuf_ref[:, i:i + ho, j:j + wo, :].reshape(m, cp)
            for i in range(3) for j in range(3)]
    acc = _conv3x3(taps, w2_ref, use_im2col, m, cp)
    _emit_conv_and_stats(acc, z2_ref, st2_ref)


def _finalize_kernel(z2_ref, ab2_ref, sc_ref, absc_ref, o_ref):
    """out = relu(BN2(z2) + BN_sc(sc)); identity shortcut uses scale=1, bias=0."""
    main = z2_ref[...].astype(jnp.float32) * ab2_ref[0:1, :] + ab2_ref[1:2, :]
    sc = sc_ref[...].astype(jnp.float32) * absc_ref[0:1, :] + absc_ref[1:2, :]
    o_ref[...] = jnp.maximum(main + sc, 0.0)


# --------------------------- pallas_call wrappers -----------------------------


def _choose_tn(n, ho, wo, target_rows):
    """Largest divisor of n giving ~target_rows conv-output rows per grid step,
    while keeping >= 2 grid steps (pipelining + v7x megacore)."""
    tn = max(1, min(n, target_rows // max(1, ho * wo)))
    if n >= 2:
        tn = min(tn, max(1, n // 2))
    while n % tn:
        tn -= 1
    return tn


def _conv1_call(x_in, w1, wsc, tn, ho, wo, stride, use_im2col, vmem_limit):
    n = x_in.shape[0]
    cin_p = x_in.shape[-1]
    cp = w1.shape[-1]
    nt = n // tn
    has_proj = wsc is not None

    kernel = functools.partial(_conv1_kernel, stride=stride,
                               has_proj=has_proj, use_im2col=use_im2col)

    z_shape = jax.ShapeDtypeStruct((n, ho, wo, cp), jnp.bfloat16)
    st_shape = jax.ShapeDtypeStruct((_STAT_ROWS * nt, cp), jnp.float32)
    z_spec = pl.BlockSpec((tn, ho, wo, cp), lambda i: (i, 0, 0, 0))
    st_spec = pl.BlockSpec((_STAT_ROWS, cp), lambda i: (i, 0))

    in_specs = [
        pl.BlockSpec((tn,) + tuple(x_in.shape[1:]), lambda i: (i, 0, 0, 0)),
        pl.BlockSpec(tuple(w1.shape), lambda i: (0, 0, 0, 0)),   # grid-invariant
    ]
    inputs = [x_in, w1]
    out_shape = [z_shape, st_shape]
    out_specs = [z_spec, st_spec]
    if has_proj:
        in_specs.append(pl.BlockSpec(tuple(wsc.shape), lambda i: (0, 0)))
        inputs.append(wsc)
        out_shape += [z_shape, st_shape]
        out_specs += [z_spec, st_spec]

    scratch_shapes = []
    if stride == 1:
        h, w = x_in.shape[1], x_in.shape[2]
        scratch_shapes.append(pltpu.VMEM((tn, h + 2, w + 2, cin_p), jnp.bfloat16))

    n_mm = 9 + (1 if has_proj else 0)
    cost = pl.CostEstimate(
        flops=2 * n * ho * wo * cin_p * cp * n_mm,
        transcendentals=0,
        bytes_accessed=x_in.size * 2 + w1.size * 2
        + (2 if has_proj else 1) * n * ho * wo * cp * 2,
    )
    return pl.pallas_call(
        kernel,
        out_shape=tuple(out_shape),
        grid=(nt,),
        in_specs=in_specs,
        out_specs=tuple(out_specs),
        scratch_shapes=scratch_shapes,
        compiler_params=_compiler_params(vmem_limit),
        cost_estimate=cost,
    )(*inputs)


def _conv2_call(z1, ab1, w2, tn, use_im2col, vmem_limit):
    n, ho, wo, cp = z1.shape
    nt = n // tn
    kernel = functools.partial(_conv2_kernel, use_im2col=use_im2col)
    cost = pl.CostEstimate(
        flops=2 * n * ho * wo * cp * cp * 9,
        transcendentals=0,
        bytes_accessed=z1.size * 2 + w2.size * 2 + n * ho * wo * cp * 2,
    )
    return pl.pallas_call(
        kernel,
        out_shape=(jax.ShapeDtypeStruct((n, ho, wo, cp), jnp.bfloat16),
                   jax.ShapeDtypeStruct((_STAT_ROWS * nt, cp), jnp.float32)),
        grid=(nt,),
        in_specs=[
            pl.BlockSpec((tn, ho, wo, cp), lambda i: (i, 0, 0, 0)),
            pl.BlockSpec((2, cp), lambda i: (0, 0)),               # grid-invariant
            pl.BlockSpec((3, 3, cp, cp), lambda i: (0, 0, 0, 0)),  # grid-invariant
        ],
        out_specs=(
            pl.BlockSpec((tn, ho, wo, cp), lambda i: (i, 0, 0, 0)),
            pl.BlockSpec((_STAT_ROWS, cp), lambda i: (i, 0)),
        ),
        scratch_shapes=[pltpu.VMEM((tn, ho + 2, wo + 2, cp), jnp.bfloat16)],
        compiler_params=_compiler_params(vmem_limit),
        cost_estimate=cost,
    )(z1, ab1, w2)


def _finalize_call(z2, ab2, sc, absc, tn, vmem_limit):
    n, ho, wo, cp = z2.shape
    nt = n // tn
    cost = pl.CostEstimate(
        flops=5 * z2.size, transcendentals=0,
        bytes_accessed=2 * z2.size * 2 + z2.size * 4,
    )
    return pl.pallas_call(
        _finalize_kernel,
        out_shape=jax.ShapeDtypeStruct((n, ho, wo, cp), jnp.float32),
        grid=(nt,),
        in_specs=[
            pl.BlockSpec((tn, ho, wo, cp), lambda i: (i, 0, 0, 0)),
            pl.BlockSpec((2, cp), lambda i: (0, 0)),
            pl.BlockSpec((tn, ho, wo, cp), lambda i: (i, 0, 0, 0)),
            pl.BlockSpec((2, cp), lambda i: (0, 0)),
        ],
        out_specs=pl.BlockSpec((tn, ho, wo, cp), lambda i: (i, 0, 0, 0)),
        compiler_params=_compiler_params(vmem_limit),
        cost_estimate=cost,
    )(z2, ab2, sc, absc)


# ------------------------------ JAX glue --------------------------------------


def _pad_and_phase(x_nhwc, stride, ho, wo, cin_p):
    """(N,H,W,Cin) f32 -> bf16 (N, s*s*Hph, Wph, cin_p) phase-decomposed pad
    (used only for stride=2 so every in-kernel tap slice is contiguous)."""
    n, h, w, cin = x_nhwc.shape
    s = stride
    xp = jnp.pad(x_nhwc, ((0, 0), (1, 1), (1, 1), (0, cin_p - cin)))
    hph = 2 // s + ho
    wph = 2 // s + wo
    phases = []
    for pi in range(s):
        for pj in range(s):
            ph = xp[:, pi::s, pj::s, :][:, :hph, :wph, :]
            ph = jnp.pad(ph, ((0, 0), (0, hph - ph.shape[1]),
                              (0, wph - ph.shape[2]), (0, 0)))
            phases.append(ph)
    out = jnp.stack(phases, axis=1).reshape(n, s * s * hph, wph, cin_p)
    return out.astype(jnp.bfloat16)


def _prep_w3x3(w_oihw, cin_p, cp):
    cout, cin, _, _ = w_oihw.shape
    w = jnp.transpose(w_oihw, (2, 3, 1, 0))                  # (3, 3, Cin, Cout)
    w = jnp.pad(w, ((0, 0), (0, 0), (0, cin_p - cin), (0, cp - cout)))
    return w.astype(jnp.bfloat16)


def _prep_w1x1(w_oihw, cin_p, cp):
    cout, cin, _, _ = w_oihw.shape
    w = jnp.transpose(w_oihw[:, :, 0, 0], (1, 0))            # (Cin, Cout)
    w = jnp.pad(w, ((0, cin_p - cin), (0, cp - cout)))
    return w.astype(jnp.bfloat16)


def _fold_bn(stats, gamma, beta, count, cp):
    """Per-tile (sum, sum_sq) partials -> folded f32 (scale, bias), shape (2, cp)."""
    st = stats.reshape(-1, _STAT_ROWS, cp)[:, :2, :].sum(axis=0)   # (2, cp)
    gp = jnp.pad(gamma.astype(jnp.float32), (0, cp - gamma.shape[0]))
    bp = jnp.pad(beta.astype(jnp.float32), (0, cp - beta.shape[0]))
    mean = st[0] / count
    # E[z^2]-E[z]^2 can cancel for huge M; clamp keeps it non-negative.
    var = jnp.maximum(st[1] / count - mean * mean, 0.0)
    scale = gp * lax.rsqrt(var + _BN_EPS)
    bias = bp - mean * scale
    return jnp.stack([scale, bias], axis=0)


def residual_block_forward(x_nchw, params, stride):
    """Pallas-backed ResidualBlock forward. Input/output NCHW float32."""
    vmem_limit, target_rows = _hw_config()
    x = jnp.transpose(x_nchw, (0, 2, 3, 1)).astype(jnp.float32)    # NHWC
    n, h, w, cin = x.shape
    cout = params["w1"].shape[0]
    has_proj = (stride != 1) or (cin != cout)

    cp = _round_up(cout, _LANE)
    cin_p = _round_up(cin, _SUBLANE_BF16)
    ho = (h - 1) // stride + 1
    wo = (w - 1) // stride + 1
    tn = _choose_tn(n, ho, wo, target_rows)
    count = n * ho * wo                                    # BN reduction size

    # conv1 input: stride=1 -> plain channel-padded bf16 (halo built in VMEM);
    # stride=2 -> phase-decomposed spatially padded bf16 (contiguous taps).
    if stride == 1:
        x_in = jnp.pad(x, ((0, 0), (0, 0), (0, 0),
                           (0, cin_p - cin))).astype(jnp.bfloat16)
    else:
        x_in = _pad_and_phase(x, stride, ho, wo, cin_p)

    w1m = _prep_w3x3(params["w1"], cin_p, cp)
    wscm = _prep_w1x1(params["wsc"], cin_p, cp) if has_proj else None

    # conv1 (3x3, stride, pad=1) [+ fused 1x1 projection conv]: raw bf16 + stats
    res = _conv1_call(x_in, w1m, wscm, tn, ho, wo, stride,
                      cin_p <= _IM2COL_MAX_K, vmem_limit)
    if has_proj:
        z1, st1, zsc, stsc = res
    else:
        z1, st1 = res

    ab1 = _fold_bn(st1, params["bn1_g"], params["bn1_b"], count, cp)

    # conv2 (3x3, stride 1, pad=1) with BN1+ReLU fused into its input load
    w2m = _prep_w3x3(params["w2"], cp, cp)
    z2, st2 = _conv2_call(z1, ab1, w2m, tn, cp <= _IM2COL_MAX_K, vmem_limit)
    ab2 = _fold_bn(st2, params["bn2_g"], params["bn2_b"], count, cp)

    # shortcut scale/bias (projection BN or identity), then fused finalize
    if has_proj:
        absc = _fold_bn(stsc, params["bnsc_g"], params["bnsc_b"], count, cp)
        sc_raw = zsc
    else:
        absc = jnp.concatenate([jnp.ones((1, cp), jnp.float32),
                                jnp.zeros((1, cp), jnp.float32)], axis=0)
        # Reuse the already-cast bf16 activation for the identity shortcut
        # (lane-pad only; no extra f32 pad pass over x).
        sc_raw = jnp.pad(x_in, ((0, 0), (0, 0), (0, 0), (0, cp - cin_p)))

    out = _finalize_call(z2, ab2, sc_raw, absc, tn, vmem_limit)
    out = out[..., :cout]                                  # drop channel padding
    # TODO(synk): if the consumer is NHWC (e.g. the next ResidualBlock), skip
    # this slice + NCHW transpose and feed the padded NHWC activation through.
    return jnp.transpose(out, (0, 3, 1, 2))                # back to NCHW


# ------------------------- pure-JAX reference ---------------------------------


def _bn_train_ref(x_nchw, g, b, eps=_BN_EPS):
    mean = jnp.mean(x_nchw, axis=(0, 2, 3), keepdims=True)
    var = jnp.mean(jnp.square(x_nchw - mean), axis=(0, 2, 3), keepdims=True)
    return ((x_nchw - mean) * lax.rsqrt(var + eps)
            * g[None, :, None, None] + b[None, :, None, None])


def _conv_ref(x_nchw, w, stride, pad):
    return lax.conv_general_dilated(
        x_nchw, w, (stride, stride), [(pad, pad), (pad, pad)],
        dimension_numbers=("NCHW", "OIHW", "NCHW"),
        precision=lax.Precision.HIGHEST)


def residual_block_ref(x_nchw, params, stride):
    cin = x_nchw.shape[1]
    cout = params["w1"].shape[0]
    out = jax.nn.relu(_bn_train_ref(_conv_ref(x_nchw, params["w1"], stride, 1),
                                    params["bn1_g"], params["bn1_b"]))
    out = _bn_train_ref(_conv_ref(out, params["w2"], 1, 1),
                        params["bn2_g"], params["bn2_b"])
    if stride != 1 or cin != cout:
        sc = _bn_train_ref(_conv_ref(x_nchw, params["wsc"], stride, 0),
                           params["bnsc_g"], params["bnsc_b"])
    else:
        sc = x_nchw
    return jax.nn.relu(out + sc)


# --------------------------------- main ----------------------------------------


def _make_params(key, cin, cout, has_proj):
    ks = jax.random.split(key, 10)
    p = {
        "w1": 0.1 * jax.random.normal(ks[0], (cout, cin, 3, 3), jnp.float32),
        "bn1_g": jax.random.uniform(ks[1], (cout,), jnp.float32, 0.5, 1.5),
        "bn1_b": 0.1 * jax.random.normal(ks[2], (cout,), jnp.float32),
        "w2": 0.1 * jax.random.normal(ks[3], (cout, cout, 3, 3), jnp.float32),
        "bn2_g": jax.random.uniform(ks[4], (cout,), jnp.float32, 0.5, 1.5),
        "bn2_b": 0.1 * jax.random.normal(ks[5], (cout,), jnp.float32),
    }
    if has_proj:
        p.update({
            "wsc": 0.1 * jax.random.normal(ks[6], (cout, cin, 1, 1), jnp.float32),
            "bnsc_g": jax.random.uniform(ks[7], (cout,), jnp.float32, 0.5, 1.5),
            "bnsc_b": 0.1 * jax.random.normal(ks[8], (cout,), jnp.float32),
        })
    return p


if __name__ == "__main__":
    key = jax.random.PRNGKey(0)
    k1, k2, k3, k4 = jax.random.split(key, 4)

    # Tolerance reflects bf16 MXU inputs + bf16 inter-kernel activation storage
    # vs the exact-f32 reference.
    TOL = 6e-2

    # Case 1: projection shortcut (stride=2, Cin != Cout).
    N, Cin, H, W, Cout, stride = 2, 4, 16, 16, 8, 2
    params = _make_params(k1, Cin, Cout, True)
    x = jax.random.normal(k2, (N, Cin, H, W), jnp.float32)
    out = jax.jit(functools.partial(residual_block_forward, stride=stride))(x, params)
    out = jax.block_until_ready(out)
    ref = residual_block_ref(x, params, stride)
    np.testing.assert_allclose(np.asarray(out), np.asarray(ref), rtol=TOL, atol=TOL)
    assert out.shape == (N, Cout, H // stride, W // stride)

    # Case 2: identity shortcut (stride=1, Cin == Cout).
    N2, C2, H2 = 2, 8, 8
    params2 = _make_params(k3, C2, C2, False)
    x2 = jax.random.normal(k4, (N2, C2, H2, H2), jnp.float32)
    out2 = jax.block_until_ready(
        jax.jit(functools.partial(residual_block_forward, stride=1))(x2, params2))
    ref2 = residual_block_ref(x2, params2, 1)
    np.testing.assert_allclose(np.asarray(out2), np.asarray(ref2), rtol=TOL, atol=TOL)
    assert out2.shape == (N2, C2, H2, H2)

    print("KERNEL_OK")
</pallas_src>

<mosaic_0001>
module attributes {stable_mosaic.version = 11 : i64} {
  func.func @_conv1_kernel(%arg0: i32, %arg1: memref<1x36x9x16xbf16, #tpu.memory_space<vmem>>, %arg2: memref<3x3x16x128xbf16, #tpu.memory_space<vmem>>, %arg3: memref<16x128xbf16, #tpu.memory_space<vmem>>, %arg4: memref<1x8x8x128xbf16, #tpu.memory_space<vmem>>, %arg5: memref<8x128xf32, #tpu.memory_space<vmem>>, %arg6: memref<1x8x8x128xbf16, #tpu.memory_space<vmem>>, %arg7: memref<8x128xf32, #tpu.memory_space<vmem>>) attributes {dimension_semantics = [#tpu.dimension_semantics<parallel>], iteration_bounds = array<i64: 2>, scalar_prefetch = 0 : i64, scratch_operands = 0 : i64, tpu.core_type = #tpu.core_type<tc>, window_params = [{transform_indices = @transform_0, window_bounds = array<i64: 1, 36, 9, 16>}, {pipeline_mode = #tpu.pipeline_mode<synchronous>, transform_indices = @transform_1, window_bounds = array<i64: 3, 3, 16, 128>}, {pipeline_mode = #tpu.pipeline_mode<synchronous>, transform_indices = @transform_2, window_bounds = array<i64: 16, 128>}, {transform_indices = @transform_3, window_bounds = array<i64: 1, 8, 8, 128>}, {transform_indices = @transform_4, window_bounds = array<i64: 8, 128>}, {transform_indices = @transform_5, window_bounds = array<i64: 1, 8, 8, 128>}, {transform_indices = @transform_6, window_bounds = array<i64: 8, 128>}]} {
    %c0 = arith.constant 0 : index
    %c0_0 = arith.constant 0 : index
    %c0_1 = arith.constant 0 : index
    %c0_2 = arith.constant 0 : index
    %0 = vector.load %arg1[%c0, %c0_0, %c0_1, %c0_2] : memref<1x36x9x16xbf16, #tpu.memory_space<vmem>>, vector<1x8x8x16xbf16>
    %1 = vector.shape_cast %0 : vector<1x8x8x16xbf16> to vector<64x16xbf16>
    %c0_3 = arith.constant 0 : index
    %c9 = arith.constant 9 : index
    %c0_4 = arith.constant 0 : index
    %c0_5 = arith.constant 0 : index
    %2 = vector.load %arg1[%c0_3, %c9, %c0_4, %c0_5] : memref<1x36x9x16xbf16, #tpu.memory_space<vmem>>, vector<1x8x8x16xbf16>
    %3 = vector.shape_cast %2 : vector<1x8x8x16xbf16> to vector<64x16xbf16>
    %c0_6 = arith.constant 0 : index
    %c0_7 = arith.constant 0 : index
    %c1 = arith.constant 1 : index
    %c0_8 = arith.constant 0 : index
    %4 = vector.load %arg1[%c0_6, %c0_7, %c1, %c0_8] : memref<1x36x9x16xbf16, #tpu.memory_space<vmem>>, vector<1x8x8x16xbf16>
    %5 = vector.shape_cast %4 : vector<1x8x8x16xbf16> to vector<64x16xbf16>
    %c0_9 = arith.constant 0 : index
    %c18 = arith.constant 18 : index
    %c0_10 = arith.constant 0 : index
    %c0_11 = arith.constant 0 : index
    %6 = vector.load %arg1[%c0_9, %c18, %c0_10, %c0_11] : memref<1x36x9x16xbf16, #tpu.memory_space<vmem>>, vector<1x8x8x16xbf16>
    %7 = vector.shape_cast %6 : vector<1x8x8x16xbf16> to vector<64x16xbf16>
    %c0_12 = arith.constant 0 : index
    %c27 = arith.constant 27 : index
    %c0_13 = arith.constant 0 : index
    %c0_14 = arith.constant 0 : index
    %8 = vector.load %arg1[%c0_12, %c27, %c0_13, %c0_14] : memref<1x36x9x16xbf16, #tpu.memory_space<vmem>>, vector<1x8x8x16xbf16>
    %9 = vector.shape_cast %8 : vector<1x8x8x16xbf16> to vector<64x16xbf16>
    %c0_15 = arith.constant 0 : index
    %c18_16 = arith.constant 18 : index
    %c1_17 = arith.constant 1 : index
    %c0_18 = arith.constant 0 : index
    %10 = vector.load %arg1[%c0_15, %c18_16, %c1_17, %c0_18] : memref<1x36x9x16xbf16, #tpu.memory_space<vmem>>, vector<1x8x8x16xbf16>
    %11 = vector.shape_cast %10 : vector<1x8x8x16xbf16> to vector<64x16xbf16>
    %c0_19 = arith.constant 0 : index
    %c1_20 = arith.constant 1 : index
    %c0_21 = arith.constant 0 : index
    %c0_22 = arith.constant 0 : index
    %12 = vector.load %arg1[%c0_19, %c1_20, %c0_21, %c0_22] : memref<1x36x9x16xbf16, #tpu.memory_space<vmem>>, vector<1x8x8x16xbf16>
    %13 = vector.shape_cast %12 : vector<1x8x8x16xbf16> to vector<64x16xbf16>
    %c0_23 = arith.constant 0 : index
    %c10 = arith.constant 10 : index
    %c0_24 = arith.constant 0 : index
    %c0_25 = arith.constant 0 : index
    %14 = vector.load %arg1[%c0_23, %c10, %c0_24, %c0_25] : memref<1x36x9x16xbf16, #tpu.memory_space<vmem>>, vector<1x8x8x16xbf16>
    %15 = vector.shape_cast %14 : vector<1x8x8x16xbf16> to vector<64x16xbf16>
    %c0_26 = arith.constant 0 : index
    %c1_27 = arith.constant 1 : index
    %c1_28 = arith.constant 1 : index
    %c0_29 = arith.constant 0 : index
    %16 = vector.load %arg1[%c0_26, %c1_27, %c1_28, %c0_29] : memref<1x36x9x16xbf16, #tpu.memory_space<vmem>>, vector<1x8x8x16xbf16>
    %17 = vector.shape_cast %16 : vector<1x8x8x16xbf16> to vector<64x16xbf16>
    %18 = tpu.concatenate %1, %3, %5, %7, %9, %11, %13, %15, %17 in 1 : vector<64x16xbf16>, vector<64x16xbf16>, vector<64x16xbf16>, vector<64x16xbf16>, vector<64x16xbf16>, vector<64x16xbf16>, vector<64x16xbf16>, vector<64x16xbf16>, vector<64x16xbf16> -> vector<64x144xbf16>
    %c0_30 = arith.constant 0 : index
    %c0_31 = arith.constant 0 : index
    %c0_32 = arith.constant 0 : index
    %c0_33 = arith.constant 0 : index
    %19 = vector.load %arg2[%c0_30, %c0_31, %c0_32, %c0_33] : memref<3x3x16x128xbf16, #tpu.memory_space<vmem>>, vector<3x3x16x128xbf16>
    %20 = vector.shape_cast %19 : vector<3x3x16x128xbf16> to vector<144x128xbf16>
    %cst = arith.constant dense<0.000000e+00> : vector<64x128xf32>
    %21 = tpu.matmul %18, %20, %cst {dimension_numbers = #tpu.dot_dimension_numbers<[1], [0], [0], [1], [0, 0, 1, 1], [], []>} : vector<64x144xbf16>, vector<144x128xbf16>, vector<64x128xf32> -> vector<64x128xf32>
    %22 = vector.shape_cast %21 : vector<64x128xf32> to vector<1x8x8x128xf32>
    %23 = arith.truncf %22 : vector<1x8x8x128xf32> to vector<1x8x8x128xbf16>
    %c0_34 = arith.constant 0 : index
    %c0_35 = arith.constant 0 : index
    %c0_36 = arith.constant 0 : index
    %c0_37 = arith.constant 0 : index
    %24 = vector.load %arg4[%c0_34, %c0_35, %c0_36, %c0_37] : memref<1x8x8x128xbf16, #tpu.memory_space<vmem>>, vector<1x8x8x128xbf16>
    tpu.vector_store %arg4[%c0_34, %c0_35, %c0_36, %c0_37], %23 {strides = array<i32>} : memref<1x8x8x128xbf16, #tpu.memory_space<vmem>>, vector<1x8x8x128xbf16>,
    %cst_38 = arith.constant dense<0.000000e+00> : vector<128xf32>
    %25 = vector.multi_reduction <add>, %21, %cst_38 [0] : vector<64x128xf32> to vector<128xf32>
    %26 = vector.shape_cast %25 : vector<128xf32> to vector<1x128xf32>
    %27 = arith.mulf %21, %21 : vector<64x128xf32>
    %cst_39 = arith.constant dense<0.000000e+00> : vector<128xf32>
    %28 = vector.multi_reduction <add>, %27, %cst_39 [0] : vector<64x128xf32> to vector<128xf32>
    %29 = vector.shape_cast %28 : vector<128xf32> to vector<1x128xf32>
    %cst_40 = arith.constant 0.000000e+00 : f32
    %30 = vector.broadcast %cst_40 : f32 to vector<6x128xf32>
    %31 = tpu.concatenate %26, %29, %30 in 0 : vector<1x128xf32>, vector<1x128xf32>, vector<6x128xf32> -> vector<8x128xf32>
    %c0_41 = arith.constant 0 : index
    %c0_42 = arith.constant 0 : index
    %32 = vector.load %arg5[%c0_41, %c0_42] : memref<8x128xf32, #tpu.memory_space<vmem>>, vector<8x128xf32>
    tpu.vector_store %arg5[%c0_41, %c0_42], %31 {strides = array<i32>} : memref<8x128xf32, #tpu.memory_space<vmem>>, vector<8x128xf32>,
    %c0_43 = arith.constant 0 : index
    %c0_44 = arith.constant 0 : index
    %33 = vector.load %arg3[%c0_43, %c0_44] : memref<16x128xbf16, #tpu.memory_space<vmem>>, vector<16x128xbf16>
    %cst_45 = arith.constant dense<0.000000e+00> : vector<64x128xf32>
    %34 = tpu.matmul %9, %33, %cst_45 {dimension_numbers = #tpu.dot_dimension_numbers<[1], [0], [0], [1], [0, 0, 1, 1], [], []>} : vector<64x16xbf16>, vector<16x128xbf16>, vector<64x128xf32> -> vector<64x128xf32>
    %35 = vector.shape_cast %34 : vector<64x128xf32> to vector<1x8x8x128xf32>
    %36 = arith.truncf %35 : vector<1x8x8x128xf32> to vector<1x8x8x128xbf16>
    %c0_46 = arith.constant 0 : index
    %c0_47 = arith.constant 0 : index
    %c0_48 = arith.constant 0 : index
    %c0_49 = arith.constant 0 : index
    %37 = vector.load %arg6[%c0_46, %c0_47, %c0_48, %c0_49] : memref<1x8x8x128xbf16, #tpu.memory_space<vmem>>, vector<1x8x8x128xbf16>
    tpu.vector_store %arg6[%c0_46, %c0_47, %c0_48, %c0_49], %36 {strides = array<i32>} : memref<1x8x8x128xbf16, #tpu.memory_space<vmem>>, vector<1x8x8x128xbf16>,
    %cst_50 = arith.constant dense<0.000000e+00> : vector<128xf32>
    %38 = vector.multi_reduction <add>, %34, %cst_50 [0] : vector<64x128xf32> to vector<128xf32>
    %39 = vector.shape_cast %38 : vector<128xf32> to vector<1x128xf32>
    %40 = arith.mulf %34, %34 : vector<64x128xf32>
    %cst_51 = arith.constant dense<0.000000e+00> : vector<128xf32>
    %41 = vector.multi_reduction <add>, %40, %cst_51 [0] : vector<64x128xf32> to vector<128xf32>
    %42 = vector.shape_cast %41 : vector<128xf32> to vector<1x128xf32>
    %cst_52 = arith.constant 0.000000e+00 : f32
    %43 = vector.broadcast %cst_52 : f32 to vector<6x128xf32>
    %44 = tpu.concatenate %39, %42, %43 in 0 : vector<1x128xf32>, vector<1x128xf32>, vector<6x128xf32> -> vector<8x128xf32>
    %c0_53 = arith.constant 0 : index
    %c0_54 = arith.constant 0 : index
    %45 = vector.load %arg7[%c0_53, %c0_54] : memref<8x128xf32, #tpu.memory_space<vmem>>, vector<8x128xf32>
    tpu.vector_store %arg7[%c0_53, %c0_54], %44 {strides = array<i32>} : memref<8x128xf32, #tpu.memory_space<vmem>>, vector<8x128xf32>,
    return
  }
  func.func @transform_0(%arg0: i32) -> (i32, i32, i32, i32) {
    %c0_i32 = arith.constant 0 : i32
    %c0_i32_0 = arith.constant 0 : i32
    %c0_i32_1 = arith.constant 0 : i32
    %c0_i32_2 = arith.constant 0 : i32
    return %arg0, %c0_i32, %c0_i32_0, %c0_i32_1 : i32, i32, i32, i32
  }
  func.func @transform_1(%arg0: i32) -> (i32, i32, i32, i32) {
    %c0_i32 = arith.constant 0 : i32
    %c0_i32_0 = arith.constant 0 : i32
    %c0_i32_1 = arith.constant 0 : i32
    %c0_i32_2 = arith.constant 0 : i32
    %c0_i32_3 = arith.constant 0 : i32
    return %c0_i32, %c0_i32_0, %c0_i32_1, %c0_i32_2 : i32, i32, i32, i32
  }
  func.func @transform_2(%arg0: i32) -> (i32, i32) {
    %c0_i32 = arith.constant 0 : i32
    %c0_i32_0 = arith.constant 0 : i32
    %c0_i32_1 = arith.constant 0 : i32
    return %c0_i32, %c0_i32_0 : i32, i32
  }
  func.func @transform_3(%arg0: i32) -> (i32, i32, i32, i32) {
    %c0_i32 = arith.constant 0 : i32
    %c0_i32_0 = arith.constant 0 : i32
    %c0_i32_1 = arith.constant 0 : i32
    %c0_i32_2 = arith.constant 0 : i32
    return %arg0, %c0_i32, %c0_i32_0, %c0_i32_1 : i32, i32, i32, i32
  }
  func.func @transform_4(%arg0: i32) -> (i32, i32) {
    %c0_i32 = arith.constant 0 : i32
    %c0_i32_0 = arith.constant 0 : i32
    return %arg0, %c0_i32 : i32, i32
  }
  func.func @transform_5(%arg0: i32) -> (i32, i32, i32, i32) {
    %c0_i32 = arith.constant 0 : i32
    %c0_i32_0 = arith.constant 0 : i32
    %c0_i32_1 = arith.constant 0 : i32
    %c0_i32_2 = arith.constant 0 : i32
    return %arg0, %c0_i32, %c0_i32_0, %c0_i32_1 : i32, i32, i32, i32
  }
  func.func @transform_6(%arg0: i32) -> (i32, i32) {
    %c0_i32 = arith.constant 0 : i32
    %c0_i32_0 = arith.constant 0 : i32
    return %arg0, %c0_i32 : i32, i32
  }
}

module attributes {stable_mosaic.version = 11 : i64} {
  func.func @_conv2_kernel(%arg0: i32, %arg1: memref<1x8x8x128xbf16, #tpu.memory_space<vmem>>, %arg2: memref<2x128xf32, #tpu.memory_space<vmem>>, %arg3: memref<3x3x128x128xbf16, #tpu.memory_space<vmem>>, %arg4: memref<1x8x8x128xbf16, #tpu.memory_space<vmem>>, %arg5: memref<8x128xf32, #tpu.memory_space<vmem>>, %arg6: memref<1x10x10x128xbf16, #tpu.memory_space<vmem>>) attributes {dimension_semantics = [#tpu.dimension_semantics<parallel>], iteration_bounds = array<i64: 2>, scalar_prefetch = 0 : i64, scratch_operands = 1 : i64, tpu.core_type = #tpu.core_type<tc>, window_params = [{transform_indices = @transform_0, window_bounds = array<i64: 1, 8, 8, 128>}, {pipeline_mode = #tpu.pipeline_mode<synchronous>, transform_indices = @transform_1, window_bounds = array<i64: 2, 128>}, {pipeline_mode = #tpu.pipeline_mode<synchronous>, transform_indices = @transform_2, window_bounds = array<i64: 3, 3, 128, 128>}, {transform_indices = @transform_3, window_bounds = array<i64: 1, 8, 8, 128>}, {transform_indices = @transform_4, window_bounds = array<i64: 8, 128>}]} {
    %c0 = arith.constant 0 : index
    %c0_0 = arith.constant 0 : index
    %c0_1 = arith.constant 0 : index
    %c0_2 = arith.constant 0 : index
    %0 = vector.load %arg1[%c0, %c0_0, %c0_1, %c0_2] : memref<1x8x8x128xbf16, #tpu.memory_space<vmem>>, vector<1x8x8x128xbf16>
    %1 = arith.extf %0 : vector<1x8x8x128xbf16> to vector<1x8x8x128xf32>
    %c0_3 = arith.constant 0 : index
    %c0_4 = arith.constant 0 : index
    %2 = vector.load %arg2[%c0_3, %c0_4] : memref<2x128xf32, #tpu.memory_space<vmem>>, vector<1x128xf32>
    %3 = vector.shape_cast %2 : vector<1x128xf32> to vector<1x1x1x128xf32>
    %4 = vector.broadcast %3 : vector<1x1x1x128xf32> to vector<1x8x8x128xf32>
    %5 = arith.mulf %1, %4 : vector<1x8x8x128xf32>
    %c1 = arith.constant 1 : index
    %c0_5 = arith.constant 0 : index
    %6 = vector.load %arg2[%c1, %c0_5] : memref<2x128xf32, #tpu.memory_space<vmem>>, vector<1x128xf32>
    %7 = vector.shape_cast %6 : vector<1x128xf32> to vector<1x1x1x128xf32>
    %8 = vector.broadcast %7 : vector<1x1x1x128xf32> to vector<1x8x8x128xf32>
    %9 = arith.addf %5, %8 : vector<1x8x8x128xf32>
    %cst = arith.constant 0.000000e+00 : f32
    %10 = vector.broadcast %cst : f32 to vector<1x8x8x128xf32>
    %11 = arith.maximumf %9, %10 : vector<1x8x8x128xf32>
    %cst_6 = arith.constant 0.000000e+00 : bf16
    %12 = vector.broadcast %cst_6 : bf16 to vector<1x1x10x128xbf16>
    %cst_7 = arith.constant 0.000000e+00 : bf16
    %13 = vector.broadcast %cst_7 : bf16 to vector<1x10x1x128xbf16>
    %c0_8 = arith.constant 0 : index
    %c0_9 = arith.constant 0 : index
    %c0_10 = arith.constant 0 : index
    %c0_11 = arith.constant 0 : index
    %14 = vector.load %arg6[%c0_8, %c0_9, %c0_10, %c0_11] : memref<1x10x10x128xbf16, #tpu.memory_space<vmem>>, vector<1x1x10x128xbf16>
    tpu.vector_store %arg6[%c0_8, %c0_9, %c0_10, %c0_11], %12 {strides = array<i32>} : memref<1x10x10x128xbf16, #tpu.memory_space<vmem>>, vector<1x1x10x128xbf16>,
    %c0_12 = arith.constant 0 : index
    %c9 = arith.constant 9 : index
    %c0_13 = arith.constant 0 : index
    %c0_14 = arith.constant 0 : index
    %15 = vector.load %arg6[%c0_12, %c9, %c0_13, %c0_14] : memref<1x10x10x128xbf16, #tpu.memory_space<vmem>>, vector<1x1x10x128xbf16>
    tpu.vector_store %arg6[%c0_12, %c9, %c0_13, %c0_14], %12 {strides = array<i32>} : memref<1x10x10x128xbf16, #tpu.memory_space<vmem>>, vector<1x1x10x128xbf16>,
    %c0_15 = arith.constant 0 : index
    %c0_16 = arith.constant 0 : index
    %c0_17 = arith.constant 0 : index
    %c0_18 = arith.constant 0 : index
    %16 = vector.load %arg6[%c0_15, %c0_16, %c0_17, %c0_18] : memref<1x10x10x128xbf16, #tpu.memory_space<vmem>>, vector<1x10x1x128xbf16>
    tpu.vector_store %arg6[%c0_15, %c0_16, %c0_17, %c0_18], %13 {strides = array<i32>} : memref<1x10x10x128xbf16, #tpu.memory_space<vmem>>, vector<1x10x1x128xbf16>,
    %c0_19 = arith.constant 0 : index
    %c0_20 = arith.constant 0 : index
    %c9_21 = arith.constant 9 : index
    %c0_22 = arith.constant 0 : index
    %17 = vector.load %arg6[%c0_19, %c0_20, %c9_21, %c0_22] : memref<1x10x10x128xbf16, #tpu.memory_space<vmem>>, vector<1x10x1x128xbf16>
    tpu.vector_store %arg6[%c0_19, %c0_20, %c9_21, %c0_22], %13 {strides = array<i32>} : memref<1x10x10x128xbf16, #tpu.memory_space<vmem>>, vector<1x10x1x128xbf16>,
    %18 = arith.truncf %11 : vector<1x8x8x128xf32> to vector<1x8x8x128xbf16>
    %c0_23 = arith.constant 0 : index
    %c1_24 = arith.constant 1 : index
    %c1_25 = arith.constant 1 : index
    %c0_26 = arith.constant 0 : index
    %19 = vector.load %arg6[%c0_23, %c1_24, %c1_25, %c0_26] : memref<1x10x10x128xbf16, #tpu.memory_space<vmem>>, vector<1x8x8x128xbf16>
    tpu.vector_store %arg6[%c0_23, %c1_24, %c1_25, %c0_26], %18 {strides = array<i32>} : memref<1x10x10x128xbf16, #tpu.memory_space<vmem>>, vector<1x8x8x128xbf16>,
    %c0_27 = arith.constant 0 : index
    %c0_28 = arith.constant 0 : index
    %c0_29 = arith.constant 0 : index
    %c0_30 = arith.constant 0 : index
    %20 = vector.load %arg6[%c0_27, %c0_28, %c0_29, %c0_30] : memref<1x10x10x128xbf16, #tpu.memory_space<vmem>>, vector<1x8x8x128xbf16>
    %21 = vector.shape_cast %20 : vector<1x8x8x128xbf16> to vector<64x128xbf16>
    %c0_31 = arith.constant 0 : index
    %c0_32 = arith.constant 0 : index
    %c1_33 = arith.constant 1 : index
    %c0_34 = arith.constant 0 : index
    %22 = vector.load %arg6[%c0_31, %c0_32, %c1_33, %c0_34] : memref<1x10x10x128xbf16, #tpu.memory_space<vmem>>, vector<1x8x8x128xbf16>
    %23 = vector.shape_cast %22 : vector<1x8x8x128xbf16> to vector<64x128xbf16>
    %c0_35 = arith.constant 0 : index
    %c0_36 = arith.constant 0 : index
    %c2 = arith.constant 2 : index
    %c0_37 = arith.constant 0 : index
    %24 = vector.load %arg6[%c0_35, %c0_36, %c2, %c0_37] : memref<1x10x10x128xbf16, #tpu.memory_space<vmem>>, vector<1x8x8x128xbf16>
    %25 = vector.shape_cast %24 : vector<1x8x8x128xbf16> to vector<64x128xbf16>
    %c0_38 = arith.constant 0 : index
    %c1_39 = arith.constant 1 : index
    %c0_40 = arith.constant 0 : index
    %c0_41 = arith.constant 0 : index
    %26 = vector.load %arg6[%c0_38, %c1_39, %c0_40, %c0_41] : memref<1x10x10x128xbf16, #tpu.memory_space<vmem>>, vector<1x8x8x128xbf16>
    %27 = vector.shape_cast %26 : vector<1x8x8x128xbf16> to vector<64x128xbf16>
    %c0_42 = arith.constant 0 : index
    %c1_43 = arith.constant 1 : index
    %c1_44 = arith.constant 1 : index
    %c0_45 = arith.constant 0 : index
    %28 = vector.load %arg6[%c0_42, %c1_43, %c1_44, %c0_45] : memref<1x10x10x128xbf16, #tpu.memory_space<vmem>>, vector<1x8x8x128xbf16>
    %29 = vector.shape_cast %28 : vector<1x8x8x128xbf16> to vector<64x128xbf16>
    %c0_46 = arith.constant 0 : index
    %c1_47 = arith.constant 1 : index
    %c2_48 = arith.constant 2 : index
    %c0_49 = arith.constant 0 : index
    %30 = vector.load %arg6[%c0_46, %c1_47, %c2_48, %c0_49] : memref<1x10x10x128xbf16, #tpu.memory_space<vmem>>, vector<1x8x8x128xbf16>
    %31 = vector.shape_cast %30 : vector<1x8x8x128xbf16> to vector<64x128xbf16>
    %c0_50 = arith.constant 0 : index
    %c2_51 = arith.constant 2 : index
    %c0_52 = arith.constant 0 : index
    %c0_53 = arith.constant 0 : index
    %32 = vector.load %arg6[%c0_50, %c2_51, %c0_52, %c0_53] : memref<1x10x10x128xbf16, #tpu.memory_space<vmem>>, vector<1x8x8x128xbf16>
    %33 = vector.shape_cast %32 : vector<1x8x8x128xbf16> to vector<64x128xbf16>
    %c0_54 = arith.constant 0 : index
    %c2_55 = arith.constant 2 : index
    %c1_56 = arith.constant 1 : index
    %c0_57 = arith.constant 0 : index
    %34 = vector.load %arg6[%c0_54, %c2_55, %c1_56, %c0_57] : memref<1x10x10x128xbf16, #tpu.memory_space<vmem>>, vector<1x8x8x128xbf16>
    %35 = vector.shape_cast %34 : vector<1x8x8x128xbf16> to vector<64x128xbf16>
    %c0_58 = arith.constant 0 : index
    %c2_59 = arith.constant 2 : index
    %c2_60 = arith.constant 2 : index
    %c0_61 = arith.constant 0 : index
    %36 = vector.load %arg6[%c0_58, %c2_59, %c2_60, %c0_61] : memref<1x10x10x128xbf16, #tpu.memory_space<vmem>>, vector<1x8x8x128xbf16>
    %37 = vector.shape_cast %36 : vector<1x8x8x128xbf16> to vector<64x128xbf16>
    %38 = tpu.concatenate %21, %23, %25, %27, %29, %31, %33, %35, %37 in 1 : vector<64x128xbf16>, vector<64x128xbf16>, vector<64x128xbf16>, vector<64x128xbf16>, vector<64x128xbf16>, vector<64x128xbf16>, vector<64x128xbf16>, vector<64x128xbf16>, vector<64x128xbf16> -> vector<64x1152xbf16>
    %c0_62 = arith.constant 0 : index
    %c0_63 = arith.constant 0 : index
    %c0_64 = arith.constant 0 : index
    %c0_65 = arith.constant 0 : index
    %39 = vector.load %arg3[%c0_62, %c0_63, %c0_64, %c0_65] : memref<3x3x128x128xbf16, #tpu.memory_space<vmem>>, vector<3x3x128x128xbf16>
    %40 = vector.shape_cast %39 : vector<3x3x128x128xbf16> to vector<1152x128xbf16>
    %cst_66 = arith.constant dense<0.000000e+00> : vector<64x128xf32>
    %41 = tpu.matmul %38, %40, %cst_66 {dimension_numbers = #tpu.dot_dimension_numbers<[1], [0], [0], [1], [0, 0, 1, 1], [], []>} : vector<64x1152xbf16>, vector<1152x128xbf16>, vector<64x128xf32> -> vector<64x128xf32>
    %42 = vector.shape_cast %41 : vector<64x128xf32> to vector<1x8x8x128xf32>
    %43 = arith.truncf %42 : vector<1x8x8x128xf32> to vector<1x8x8x128xbf16>
    %c0_67 = arith.constant 0 : index
    %c0_68 = arith.constant 0 : index
    %c0_69 = arith.constant 0 : index
    %c0_70 = arith.constant 0 : index
    %44 = vector.load %arg4[%c0_67, %c0_68, %c0_69, %c0_70] : memref<1x8x8x128xbf16, #tpu.memory_space<vmem>>, vector<1x8x8x128xbf16>
    tpu.vector_store %arg4[%c0_67, %c0_68, %c0_69, %c0_70], %43 {strides = array<i32>} : memref<1x8x8x128xbf16, #tpu.memory_space<vmem>>, vector<1x8x8x128xbf16>,
    %cst_71 = arith.constant dense<0.000000e+00> : vector<128xf32>
    %45 = vector.multi_reduction <add>, %41, %cst_71 [0] : vector<64x128xf32> to vector<128xf32>
    %46 = vector.shape_cast %45 : vector<128xf32> to vector<1x128xf32>
    %47 = arith.mulf %41, %41 : vector<64x128xf32>
    %cst_72 = arith.constant dense<0.000000e+00> : vector<128xf32>
    %48 = vector.multi_reduction <add>, %47, %cst_72 [0] : vector<64x128xf32> to vector<128xf32>
    %49 = vector.shape_cast %48 : vector<128xf32> to vector<1x128xf32>
    %cst_73 = arith.constant 0.000000e+00 : f32
    %50 = vector.broadcast %cst_73 : f32 to vector<6x128xf32>
    %51 = tpu.concatenate %46, %49, %50 in 0 : vector<1x128xf32>, vector<1x128xf32>, vector<6x128xf32> -> vector<8x128xf32>
    %c0_74 = arith.constant 0 : index
    %c0_75 = arith.constant 0 : index
    %52 = vector.load %arg5[%c0_74, %c0_75] : memref<8x128xf32, #tpu.memory_space<vmem>>, vector<8x128xf32>
    tpu.vector_store %arg5[%c0_74, %c0_75], %51 {strides = array<i32>} : memref<8x128xf32, #tpu.memory_space<vmem>>, vector<8x128xf32>,
    return
  }
  func.func @transform_0(%arg0: i32) -> (i32, i32, i32, i32) {
    %c0_i32 = arith.constant 0 : i32
    %c0_i32_0 = arith.constant 0 : i32
    %c0_i32_1 = arith.constant 0 : i32
    %c0_i32_2 = arith.constant 0 : i32
    return %arg0, %c0_i32, %c0_i32_0, %c0_i32_1 : i32, i32, i32, i32
  }
  func.func @transform_1(%arg0: i32) -> (i32, i32) {
    %c0_i32 = arith.constant 0 : i32
    %c0_i32_0 = arith.constant 0 : i32
    %c0_i32_1 = arith.constant 0 : i32
    return %c0_i32, %c0_i32_0 : i32, i32
  }
  func.func @transform_2(%arg0: i32) -> (i32, i32, i32, i32) {
    %c0_i32 = arith.constant 0 : i32
    %c0_i32_0 = arith.constant 0 : i32
    %c0_i32_1 = arith.constant 0 : i32
    %c0_i32_2 = arith.constant 0 : i32
    %c0_i32_3 = arith.constant 0 : i32
    return %c0_i32, %c0_i32_0, %c0_i32_1, %c0_i32_2 : i32, i32, i32, i32
  }
  func.func @transform_3(%arg0: i32) -> (i32, i32, i32, i32) {
    %c0_i32 = arith.constant 0 : i32
    %c0_i32_0 = arith.constant 0 : i32
    %c0_i32_1 = arith.constant 0 : i32
    %c0_i32_2 = arith.constant 0 : i32
    return %arg0, %c0_i32, %c0_i32_0, %c0_i32_1 : i32, i32, i32, i32
  }
  func.func @transform_4(%arg0: i32) -> (i32, i32) {
    %c0_i32 = arith.constant 0 : i32
    %c0_i32_0 = arith.constant 0 : i32
    return %arg0, %c0_i32 : i32, i32
  }
}

module attributes {stable_mosaic.version = 11 : i64} {
  func.func @_finalize_kernel(%arg0: i32, %arg1: memref<1x8x8x128xbf16, #tpu.memory_space<vmem>>, %arg2: memref<2x128xf32, #tpu.memory_space<vmem>>, %arg3: memref<1x8x8x128xbf16, #tpu.memory_space<vmem>>, %arg4: memref<2x128xf32, #tpu.memory_space<vmem>>, %arg5: memref<1x8x8x128xf32, #tpu.memory_space<vmem>>) attributes {dimension_semantics = [#tpu.dimension_semantics<parallel>], iteration_bounds = array<i64: 2>, scalar_prefetch = 0 : i64, scratch_operands = 0 : i64, tpu.core_type = #tpu.core_type<tc>, window_params = [{transform_indices = @transform_0, window_bounds = array<i64: 1, 8, 8, 128>}, {pipeline_mode = #tpu.pipeline_mode<synchronous>, transform_indices = @transform_1, window_bounds = array<i64: 2, 128>}, {transform_indices = @transform_2, window_bounds = array<i64: 1, 8, 8, 128>}, {pipeline_mode = #tpu.pipeline_mode<synchronous>, transform_indices = @transform_3, window_bounds = array<i64: 2, 128>}, {transform_indices = @transform_4, window_bounds = array<i64: 1, 8, 8, 128>}]} {
    %c0 = arith.constant 0 : index
    %c0_0 = arith.constant 0 : index
    %c0_1 = arith.constant 0 : index
    %c0_2 = arith.constant 0 : index
    %0 = vector.load %arg1[%c0, %c0_0, %c0_1, %c0_2] : memref<1x8x8x128xbf16, #tpu.memory_space<vmem>>, vector<1x8x8x128xbf16>
    %1 = arith.extf %0 : vector<1x8x8x128xbf16> to vector<1x8x8x128xf32>
    %c0_3 = arith.constant 0 : index
    %c0_4 = arith.constant 0 : index
    %2 = vector.load %arg2[%c0_3, %c0_4] : memref<2x128xf32, #tpu.memory_space<vmem>>, vector<1x128xf32>
    %3 = vector.shape_cast %2 : vector<1x128xf32> to vector<1x1x1x128xf32>
    %4 = vector.broadcast %3 : vector<1x1x1x128xf32> to vector<1x8x8x128xf32>
    %5 = arith.mulf %1, %4 : vector<1x8x8x128xf32>
    %c1 = arith.constant 1 : index
    %c0_5 = arith.constant 0 : index
    %6 = vector.load %arg2[%c1, %c0_5] : memref<2x128xf32, #tpu.memory_space<vmem>>, vector<1x128xf32>
    %7 = vector.shape_cast %6 : vector<1x128xf32> to vector<1x1x1x128xf32>
    %8 = vector.broadcast %7 : vector<1x1x1x128xf32> to vector<1x8x8x128xf32>
    %9 = arith.addf %5, %8 : vector<1x8x8x128xf32>
    %c0_6 = arith.constant 0 : index
    %c0_7 = arith.constant 0 : index
    %c0_8 = arith.constant 0 : index
    %c0_9 = arith.constant 0 : index
    %10 = vector.load %arg3[%c0_6, %c0_7, %c0_8, %c0_9] : memref<1x8x8x128xbf16, #tpu.memory_space<vmem>>, vector<1x8x8x128xbf16>
    %11 = arith.extf %10 : vector<1x8x8x128xbf16> to vector<1x8x8x128xf32>
    %c0_10 = arith.constant 0 : index
    %c0_11 = arith.constant 0 : index
    %12 = vector.load %arg4[%c0_10, %c0_11] : memref<2x128xf32, #tpu.memory_space<vmem>>, vector<1x128xf32>
    %13 = vector.shape_cast %12 : vector<1x128xf32> to vector<1x1x1x128xf32>
    %14 = vector.broadcast %13 : vector<1x1x1x128xf32> to vector<1x8x8x128xf32>
    %15 = arith.mulf %11, %14 : vector<1x8x8x128xf32>
    %c1_12 = arith.constant 1 : index
    %c0_13 = arith.constant 0 : index
    %16 = vector.load %arg4[%c1_12, %c0_13] : memref<2x128xf32, #tpu.memory_space<vmem>>, vector<1x128xf32>
    %17 = vector.shape_cast %16 : vector<1x128xf32> to vector<1x1x1x128xf32>
    %18 = vector.broadcast %17 : vector<1x1x1x128xf32> to vector<1x8x8x128xf32>
    %19 = arith.addf %15, %18 : vector<1x8x8x128xf32>
    %20 = arith.addf %9, %19 : vector<1x8x8x128xf32>
    %cst = arith.constant 0.000000e+00 : f32
    %21 = vector.broadcast %cst : f32 to vector<1x8x8x128xf32>
    %22 = arith.maximumf %20, %21 : vector<1x8x8x128xf32>
    %c0_14 = arith.constant 0 : index
    %c0_15 = arith.constant 0 : index
    %c0_16 = arith.constant 0 : index
    %c0_17 = arith.constant 0 : index
    %23 = vector.load %arg5[%c0_14, %c0_15, %c0_16, %c0_17] : memref<1x8x8x128xf32, #tpu.memory_space<vmem>>, vector<1x8x8x128xf32>
    tpu.vector_store %arg5[%c0_14, %c0_15, %c0_16, %c0_17], %22 {strides = array<i32>} : memref<1x8x8x128xf32, #tpu.memory_space<vmem>>, vector<1x8x8x128xf32>,
    return
  }
  func.func @transform_0(%arg0: i32) -> (i32, i32, i32, i32) {
    %c0_i32 = arith.constant 0 : i32
    %c0_i32_0 = arith.constant 0 : i32
    %c0_i32_1 = arith.constant 0 : i32
    %c0_i32_2 = arith.constant 0 : i32
    return %arg0, %c0_i32, %c0_i32_0, %c0_i32_1 : i32, i32, i32, i32
  }
  func.func @transform_1(%arg0: i32) -> (i32, i32) {
    %c0_i32 = arith.constant 0 : i32
    %c0_i32_0 = arith.constant 0 : i32
    %c0_i32_1 = arith.constant 0 : i32
    return %c0_i32, %c0_i32_0 : i32, i32
  }
  func.func @transform_2(%arg0: i32) -> (i32, i32, i32, i32) {
    %c0_i32 = arith.constant 0 : i32
    %c0_i32_0 = arith.constant 0 : i32
    %c0_i32_1 = arith.constant 0 : i32
    %c0_i32_2 = arith.constant 0 : i32
    return %arg0, %c0_i32, %c0_i32_0, %c0_i32_1 : i32, i32, i32, i32
  }
  func.func @transform_3(%arg0: i32) -> (i32, i32) {
    %c0_i32 = arith.constant 0 : i32
    %c0_i32_0 = arith.constant 0 : i32
    %c0_i32_1 = arith.constant 0 : i32
    return %c0_i32, %c0_i32_0 : i32, i32
  }
  func.func @transform_4(%arg0: i32) -> (i32, i32, i32, i32) {
    %c0_i32 = arith.constant 0 : i32
    %c0_i32_0 = arith.constant 0 : i32
    %c0_i32_1 = arith.constant 0 : i32
    %c0_i32_2 = arith.constant 0 : i32
    return %arg0, %c0_i32, %c0_i32_0, %c0_i32_1 : i32, i32, i32, i32
  }
}

</mosaic_0001>

<llo_original>
// kernel: residual_block_forward.5
$region0: #{residual_block_forward.5}
  #allocation0 [shape = 'u32[]', space=smem, size = 0x4, offset = 0x4, fixed_abs, tag = 'smem constant byte address 0x4 - core index']
  #allocation1 [shape = 'u32[144,128]{1,0:T(1,128)}', space=vmem, size = 0x12000, scoped, tag = 'internal scratch']
  %s0 = inlined_call_operand.vmem [shape: bf16[2,8,8,128], index: 0, kind: input, shape index: {}]
  %s1 = inlined_call_operand.vmem [shape: f32[2,128], index: 1, kind: input, shape index: {}]
  %s2 = inlined_call_operand.vmem [shape: bf16[2,8,8,128], index: 2, kind: input, shape index: {}]
  %s3 = inlined_call_operand.vmem [shape: f32[2,128], index: 3, kind: input, shape index: {}]
  %s4 = inlined_call_operand.vmem [shape: f32[2,8,8,128], index: 4, kind: output, shape index: {}]
  %s5 = sld [smem:[#allocation0]]
  $region49: #{residual_block_forward.5} parent=0
    _
  %s7 = ssub.s32 1, %s5
  %s8 = scalar_select 0, %s7, %s5
  loop: start=0, step=1, limit=4
  $region2: #{residual_block_forward.5} parent=0 // loop_pre_header
    _
  $region3: #{residual_block_forward.5} parent=0 // loop_header
    %s10 = sphi 0, %s14
    %p11 = scmp.ge.s32.totalorder %s10, 4
    %s20 = sphi 0, %s22
    %s23 = sphi 0, %s20
    %s24 = sphi 0, %s23
    %s40 = sphi 0, %s24
    %s44 = sphi 0, %s44
    %s46 = sphi 0, %s44
    %s47 = sphi 0, %s46
    %s61 = sphi 0, %s47
    %s67 = sphi 0, %s69
    %s70 = sphi 0, %s67
    %s71 = sphi 0, %s70
    %s87 = sphi 0, %s71
    %s91 = sphi 0, %s91
    %s93 = sphi 0, %s91
    %s94 = sphi 0, %s93
    %s108 = sphi 0, %s94
    %s114 = sphi 0, %s116
    %s117 = sphi 0, %s114
    %s118 = sphi 0, %s117
    %s134 = sphi 0, %s118
  $region4: #{residual_block_forward.5} parent=0 // loop_header_branch
    %13 = sbr.rel (%p11) target = $region8
  $region5: #{residual_block_forward.5} parent=0 // loop_body
    %s15 = ssub.s32 %s10, 1
    %s16 = ssub.s32 %s10, 2
    %s17 = sadd.s32 %s10, 1
    %s18 = ssub.s32 %s10, %s17
    %p19 = scmp.eq.s32.totalorder %s18, 0
    %s21 = sadd.s32 %s20, 1
    %s22 = scalar_select %p19, %s20, %s21
    %p25 = pneg %p19
    %p26 = scmp.eq.s32.totalorder %s10, 1
    %p27 = por %p25, %p26
    %p28 = scmp.ne.s32.totalorder %s20, %s23
    %p29 = scmp.eq.s32.totalorder %s10, 0
    %p30 = por %p28, %p29
    %p31 = scmp.ne.s32.totalorder %s20, %s23
    %p32 = scmp.eq.s32.totalorder %s15, 1
    %p33 = por %p31, %p32
    %p34 = scmp.ne.s32.totalorder %s23, %s24
    %p35 = scmp.eq.s32.totalorder %s15, 0
    %p36 = por %p34, %p35
    %p37 = scmp.ne.s32.totalorder %s23, %s24
    %p38 = scmp.eq.s32.totalorder %s16, 1
    %p39 = por %p37, %p38
    %p41 = scmp.ne.s32.totalorder %s24, %s40
    %p42 = scmp.eq.s32.totalorder %s16, 0
    %p43 = por %p41, %p42
    %s45 = sadd.s32 %s44, 1
    %p48 = scmp.eq.s32.totalorder %s10, 1
    %p49 = scmp.ne.s32.totalorder %s44, %s46
    %p50 = scmp.eq.s32.totalorder %s10, 0
    %p51 = por %p49, %p50
    %p52 = scmp.ne.s32.totalorder %s44, %s46
    %p53 = scmp.eq.s32.totalorder %s15, 1
    %p54 = por %p52, %p53
    %p55 = scmp.ne.s32.totalorder %s46, %s47
    %p56 = scmp.eq.s32.totalorder %s15, 0
    %p57 = por %p55, %p56
    %p58 = scmp.ne.s32.totalorder %s46, %s47
    %p59 = scmp.eq.s32.totalorder %s16, 1
    %p60 = por %p58, %p59
    %p62 = scmp.ne.s32.totalorder %s47, %s61
    %p63 = scmp.eq.s32.totalorder %s16, 0
    %p64 = por %p62, %p63
    %s65 = ssub.s32 %s10, %s17
    %p66 = scmp.eq.s32.totalorder %s65, 0
    %s68 = sadd.s32 %s67, 1
    %s69 = scalar_select %p66, %s67, %s68
    %p72 = pneg %p66
    %p73 = scmp.eq.s32.totalorder %s10, 1
    %p74 = por %p72, %p73
    %p75 = scmp.ne.s32.totalorder %s67, %s70
    %p76 = scmp.eq.s32.totalorder %s10, 0
    %p77 = por %p75, %p76
    %p78 = scmp.ne.s32.totalorder %s67, %s70
    %p79 = scmp.eq.s32.totalorder %s15, 1
    %p80 = por %p78, %p79
    %p81 = scmp.ne.s32.totalorder %s70, %s71
    %p82 = scmp.eq.s32.totalorder %s15, 0
    %p83 = por %p81, %p82
    %p84 = scmp.ne.s32.totalorder %s70, %s71
    %p85 = scmp.eq.s32.totalorder %s16, 1
    %p86 = por %p84, %p85
    %p88 = scmp.ne.s32.totalorder %s71, %s87
    %p89 = scmp.eq.s32.totalorder %s16, 0
    %p90 = por %p88, %p89
    %s92 = sadd.s32 %s91, 1
    %p95 = scmp.eq.s32.totalorder %s10, 1
    %p96 = scmp.ne.s32.totalorder %s91, %s93
    %p97 = scmp.eq.s32.totalorder %s10, 0
    %p98 = por %p96, %p97
    %p99 = scmp.ne.s32.totalorder %s91, %s93
    %p100 = scmp.eq.s32.totalorder %s15, 1
    %p101 = por %p99, %p100
    %p102 = scmp.ne.s32.totalorder %s93, %s94
    %p103 = scmp.eq.s32.totalorder %s15, 0
    %p104 = por %p102, %p103
    %p105 = scmp.ne.s32.totalorder %s93, %s94
    %p106 = scmp.eq.s32.totalorder %s16, 1
    %p107 = por %p105, %p106
    %p109 = scmp.ne.s32.totalorder %s94, %s108
    %p110 = scmp.eq.s32.totalorder %s16, 0
    %p111 = por %p109, %p110
    %s112 = ssub.s32 %s10, %s17
    %p113 = scmp.eq.s32.totalorder %s112, 0
    %s115 = sadd.s32 %s114, 1
    %s116 = scalar_select %p113, %s114, %s115
    %p119 = pneg %p113
    %p120 = scmp.eq.s32.totalorder %s10, 1
    %p121 = por %p119, %p120
    %p122 = scmp.ne.s32.totalorder %s114, %s117
    %p123 = scmp.eq.s32.totalorder %s10, 0
    %p124 = por %p122, %p123
    %p125 = scmp.ne.s32.totalorder %s114, %s117
    %p126 = scmp.eq.s32.totalorder %s15, 1
    %p127 = por %p125, %p126
    %p128 = scmp.ne.s32.totalorder %s117, %s118
    %p129 = scmp.eq.s32.totalorder %s15, 0
    %p130 = por %p128, %p129
    %p131 = scmp.ne.s32.totalorder %s117, %s118
    %p132 = scmp.eq.s32.totalorder %s16, 1
    %p133 = por %p131, %p132
    %p135 = scmp.ne.s32.totalorder %s118, %s134
    %p136 = scmp.eq.s32.totalorder %s16, 0
    %p137 = por %p135, %p136
    %p138 = scmp.le.s32.totalorder 1, %s10
    %p139 = scmp.lt.s32.totalorder %s10, 3
    %p140 = pnand %p138, %p139
    %p141 = pneg %p140
    // Predicated region
    $region9: #{residual_block_forward.5} parent=5 // pred_check
      _
    $region10: #{residual_block_forward.5} parent=5 // pred_check_branch
      %143 = sbr.rel (%p140) target = $region12
    $region11: #{residual_block_forward.5} parent=5 // pred_region
      %s144 = ssub.s32 %s10, 1
      // Predicated region
      $region13: #{residual_block_forward.5} parent=11 // pred_check
        %p145 = pneg %p57
      $region14: #{residual_block_forward.5} parent=11 // pred_check_branch
        %147 = sbr.rel (%p145) target = $region16
      $region15: #{residual_block_forward.5} parent=11 // pred_region
        _
      $region16: #{residual_block_forward.5} parent=11 // pred_fallthru
        _
      // Predicated region
      $region17: #{residual_block_forward.5} parent=11 // pred_check
        %p148 = pneg %p104
      $region18: #{residual_block_forward.5} parent=11 // pred_check_branch
        %150 = sbr.rel (%p148) target = $region20
      $region19: #{residual_block_forward.5} parent=11 // pred_region
        _
      $region20: #{residual_block_forward.5} parent=11 // pred_fallthru
        _
    $region12: #{residual_block_forward.5} parent=5 // pred_fallthru
      _
    %p151 = scmp.lt.s32.totalorder %s10, 2
    // Predicated region
    $region21: #{residual_block_forward.5} parent=5 // pred_check
      %p152 = pneg %p151
    $region22: #{residual_block_forward.5} parent=5 // pred_check_branch
      %154 = sbr.rel (%p152) target = $region24
    $region23: #{residual_block_forward.5} parent=5 // pred_region
      // Predicated region
      $region25: #{residual_block_forward.5} parent=23 // pred_check
        %p155 = pneg %p30
      $region26: #{residual_block_forward.5} parent=23 // pred_check_branch
        %157 = sbr.rel (%p155) target = $region28
      $region27: #{residual_block_forward.5} parent=23 // pred_region
        %p158 = scmp.lt.s32.totalorder %s10, 1
        %s159 = scalar_select %p158, %s10, 1
        %s160 = smul.addr %s159, 8
        %s161 = smul.addr %s160, 4
        %s162 = scalar_lea.vmem %s0, %s161
      $region28: #{residual_block_forward.5} parent=23 // pred_fallthru
        _
      // Predicated region
      $region29: #{residual_block_forward.5} parent=23 // pred_check
        %p163 = pneg %p77
      $region30: #{residual_block_forward.5} parent=23 // pred_check_branch
        %165 = sbr.rel (%p163) target = $region32
      $region31: #{residual_block_forward.5} parent=23 // pred_region
        %p166 = scmp.lt.s32.totalorder %s10, 1
        %s167 = scalar_select %p166, %s10, 1
        %s168 = smul.addr %s167, 8
        %s169 = smul.addr %s168, 4
        %s170 = scalar_lea.vmem %s2, %s169
      $region32: #{residual_block_forward.5} parent=23 // pred_fallthru
        _
    $region24: #{residual_block_forward.5} parent=5 // pred_fallthru
      _
    %p171 = scmp.le.s32.totalorder 1, %s10
    %p172 = scmp.lt.s32.totalorder %s10, 3
    %p173 = pnand %p171, %p172
    %p174 = pneg %p173
    // Predicated region
    $region33: #{residual_block_forward.5} parent=5 // pred_check
      _
    $region34: #{residual_block_forward.5} parent=5 // pred_check_branch
      %176 = sbr.rel (%p173) target = $region36
    $region35: #{residual_block_forward.5} parent=5 // pred_region
      %s177 = ssub.s32 %s10, 1
      %p178 = scmp.lt.s32.totalorder %s15, 1
      %s179 = scalar_select %p178, %s15, 1
      %s180 = smul.addr %s179, 8
      %s181 = smul.addr %s180, 4
      %s182 = scalar_lea.vmem %s0, %s181
      %p183 = pneg %p36
      %p184 = pneg %p33
      %p185 = pneg %p57
      %p186 = pneg %p54
      %p187 = scmp.lt.s32.totalorder %s15, 1
      %s188 = scalar_select %p187, %s15, 1
      %s189 = smul.addr %s188, 8
      %s190 = smul.addr %s189, 4
      %s191 = scalar_lea.vmem %s2, %s190
      %p192 = pneg %p83
      %p193 = pneg %p80
      %p194 = pneg %p104
      %p195 = pneg %p101
      %p196 = pneg %p130
      %p197 = pneg %p127
      %p198 = scmp.lt.s32.totalorder %s15, 1
      %s199 = scalar_select %p198, %s15, 1
      %s200 = smul.addr %s199, 8
      %s201 = smul.addr %s200, 8
      %s202 = scalar_lea.vmem %s4, %s201
      %p203 = scmp.lt.s32.totalorder %s15, 1
      %s204 = scalar_select %p203, %s15, 1
      %s205 = smul.addr %s204, 8
      %s206 = smul.addr %s205, 4
      %s207 = scalar_lea.vmem %s0, %s206
      %p208 = scmp.lt.s32.totalorder %s15, 1
      %s209 = scalar_select %p208, %s15, 1
      %s210 = smul.addr %s209, 8
      %s211 = smul.addr %s210, 4
      %s212 = scalar_lea.vmem %s2, %s211
      %p213 = scmp.lt.s32.totalorder %s15, 1
      %s214 = scalar_select %p213, %s15, 1
      %s215 = smul.addr %s214, 8
      %s216 = smul.addr %s215, 8
      %s217 = scalar_lea.vmem %s4, %s216
      %v218 = vld [vmem:[%s207] sm:$0xf]
      %v219 = vld [vmem:[%s207 + $0x4] sm:$0xf]
      %v220 = vld [vmem:[%s207 + $0x8] sm:$0xf]
      %v221 = vld [vmem:[%s207 + $0xc] sm:$0xf]
      %v222 = vld [vmem:[%s207 + $0x10] sm:$0xf]
      %v223 = vld [vmem:[%s207 + $0x14] sm:$0xf]
      %v224 = vld [vmem:[%s207 + $0x18] sm:$0xf]
      %v225 = vld [vmem:[%s207 + $0x1c] sm:$0xf]
      %v226 = vunpack.c.l.bf16 %v218
      %v227 = vunpack.c.l.bf16 %v219
      %v228 = vunpack.c.l.bf16 %v220
      %v229 = vunpack.c.l.bf16 %v221
      %v230 = vunpack.c.l.bf16 %v222
      %v231 = vunpack.c.l.bf16 %v223
      %v232 = vunpack.c.l.bf16 %v224
      %v233 = vunpack.c.l.bf16 %v225
      %v234 = vld [vmem:[%s1] sm:$0x1]
      %v235 = vlaneseq
      %v236 = vshrl.u32 %v235, 7
      %v237 = vsub.s32 0, %v236
      %v238 = vrot.slane %v234, %v237
      %v239 = vmul.f32 %v226, %v238
      %v240 = vmul.f32 %v227, %v238
      %v241 = vmul.f32 %v228, %v238
      %v242 = vmul.f32 %v229, %v238
      %v243 = vmul.f32 %v230, %v238
      %v244 = vmul.f32 %v231, %v238
      %v245 = vmul.f32 %v232, %v238
      %v246 = vmul.f32 %v233, %v238
      %v247 = vld [vmem:[%s1 + $0x1] sm:$0x1]
      %v248 = vlaneseq
      %v249 = vshrl.u32 %v248, 7
      %v250 = vsub.s32 0, %v249
      %v251 = vrot.slane %v247, %v250
      %v252 = vadd.f32 %v239, %v251
      %v253 = vadd.f32 %v240, %v251
      %v254 = vadd.f32 %v241, %v251
      %v255 = vadd.f32 %v242, %v251
      %v256 = vadd.f32 %v243, %v251
      %v257 = vadd.f32 %v244, %v251
      %v258 = vadd.f32 %v245, %v251
      %v259 = vadd.f32 %v246, %v251
      %v260 = vld [vmem:[%s212] sm:$0xf]
      %v261 = vld [vmem:[%s212 + $0x4] sm:$0xf]
      %v262 = vld [vmem:[%s212 + $0x8] sm:$0xf]
      %v263 = vld [vmem:[%s212 + $0xc] sm:$0xf]
      %v264 = vld [vmem:[%s212 + $0x10] sm:$0xf]
      %v265 = vld [vmem:[%s212 + $0x14] sm:$0xf]
      %v266 = vld [vmem:[%s212 + $0x18] sm:$0xf]
      %v267 = vld [vmem:[%s212 + $0x1c] sm:$0xf]
      %v268 = vunpack.c.l.bf16 %v260
      %v269 = vunpack.c.l.bf16 %v261
      %v270 = vunpack.c.l.bf16 %v262
      %v271 = vunpack.c.l.bf16 %v263
      %v272 = vunpack.c.l.bf16 %v264
      %v273 = vunpack.c.l.bf16 %v265
      %v274 = vunpack.c.l.bf16 %v266
      %v275 = vunpack.c.l.bf16 %v267
      %v276 = vld [vmem:[%s3] sm:$0x1]
      %v277 = vlaneseq
      %v278 = vshrl.u32 %v277, 7
      %v279 = vsub.s32 0, %v278
      %v280 = vrot.slane %v276, %v279
      %v281 = vmul.f32 %v268, %v280
      %v282 = vmul.f32 %v269, %v280
      %v283 = vmul.f32 %v270, %v280
      %v284 = vmul.f32 %v271, %v280
      %v285 = vmul.f32 %v272, %v280
      %v286 = vmul.f32 %v273, %v280
      %v287 = vmul.f32 %v274, %v280
      %v288 = vmul.f32 %v275, %v280
      %v289 = vld [vmem:[%s3 + $0x1] sm:$0x1]
      %v290 = vlaneseq
      %v291 = vshrl.u32 %v290, 7
      %v292 = vsub.s32 0, %v291
      %v293 = vrot.slane %v289, %v292
      %v294 = vadd.f32 %v281, %v293
      %v295 = vadd.f32 %v282, %v293
      %v296 = vadd.f32 %v283, %v293
      %v297 = vadd.f32 %v284, %v293
      %v298 = vadd.f32 %v285, %v293
      %v299 = vadd.f32 %v286, %v293
      %v300 = vadd.f32 %v287, %v293
      %v301 = vadd.f32 %v288, %v293
      %v302 = vadd.f32 %v252, %v294
      %v303 = vadd.f32 %v253, %v295
      %v304 = vadd.f32 %v254, %v296
      %v305 = vadd.f32 %v255, %v297
      %v306 = vadd.f32 %v256, %v298
      %v307 = vadd.f32 %v257, %v299
      %v308 = vadd.f32 %v258, %v300
      %v309 = vadd.f32 %v259, %v301
      %v310 = vmax.f32 %v302, 0.0
      %v311 = vmax.f32 %v303, 0.0
      %v312 = vmax.f32 %v304, 0.0
      %v313 = vmax.f32 %v305, 0.0
      %v314 = vmax.f32 %v306, 0.0
      %v315 = vmax.f32 %v307, 0.0
      %v316 = vmax.f32 %v308, 0.0
      %v317 = vmax.f32 %v309, 0.0
      %318 = vst [vmem:[%s217] sm:$0xff] %v310
      %319 = vst [vmem:[%s217 + $0x8] sm:$0xff] %v311
      %320 = vst [vmem:[%s217 + $0x10] sm:$0xff] %v312
      %321 = vst [vmem:[%s217 + $0x18] sm:$0xff] %v313
      %322 = vst [vmem:[%s217 + $0x20] sm:$0xff] %v314
      %323 = vst [vmem:[%s217 + $0x28] sm:$0xff] %v315
      %324 = vst [vmem:[%s217 + $0x30] sm:$0xff] %v316
      %325 = vst [vmem:[%s217 + $0x38] sm:$0xff] %v317
      %p326 = scmp.lt.s32.totalorder %s15, 1
      %s327 = scalar_select %p326, %s15, 1
      %s328 = smul.addr %s327, 8
      %s329 = smul.addr %s328, 8
      %s330 = scalar_lea.vmem %s4, %s329
      // Predicated region
      $region37: #{residual_block_forward.5} parent=35 // pred_check
        %p331 = pneg %p127
      $region38: #{residual_block_forward.5} parent=35 // pred_check_branch
        %333 = sbr.rel (%p331) target = $region40
      $region39: #{residual_block_forward.5} parent=35 // pred_region
        _
      $region40: #{residual_block_forward.5} parent=35 // pred_fallthru
        _
    $region36: #{residual_block_forward.5} parent=5 // pred_fallthru
      _
    %p334 = scmp.le.s32.totalorder 2, %s10
    // Predicated region
    $region41: #{residual_block_forward.5} parent=5 // pred_check
      %p335 = pneg %p334
    $region42: #{residual_block_forward.5} parent=5 // pred_check_branch
      %337 = sbr.rel (%p335) target = $region44
    $region43: #{residual_block_forward.5} parent=5 // pred_region
      %s338 = ssub.s32 %s10, 2
      // Predicated region
      $region45: #{residual_block_forward.5} parent=43 // pred_check
        %p339 = pneg %p133
      $region46: #{residual_block_forward.5} parent=43 // pred_check_branch
        %341 = sbr.rel (%p339) target = $region48
      $region47: #{residual_block_forward.5} parent=43 // pred_region
        %p342 = scmp.lt.s32.totalorder %s16, 1
        %s343 = scalar_select %p342, %s16, 1
        %s344 = smul.addr %s343, 8
        %s345 = smul.addr %s344, 8
        %s346 = scalar_lea.vmem %s4, %s345
      $region48: #{residual_block_forward.5} parent=43 // pred_fallthru
        _
    $region44: #{residual_block_forward.5} parent=5 // pred_fallthru
      _
  $region6: #{residual_block_forward.5} parent=0 // loop_footer
    %s14 = sadd.s32 1, %s10
  $region7: #{residual_block_forward.5} parent=0 // loop_footer_branch
    %9 = sbr.rel target = $region3
  $region8: #{residual_block_forward.5} parent=0 // loop_exit
    _

// kernel: residual_block_forward.3
$region0: #{residual_block_forward.3}
  #allocation0 [shape = 'u32[]', space=smem, size = 0x4, offset = 0x4, fixed_abs, tag = 'smem constant byte address 0x4 - core index']
  #allocation1 [shape = 'u32[144,128]{1,0:T(1,128)}', space=vmem, size = 0x12000, scoped, tag = 'internal scratch']
  %s0 = inlined_call_operand.vmem [shape: bf16[2,36,9,16], index: 0, kind: input, shape index: {}]
  %s1 = inlined_call_operand.vmem [shape: bf16[3,3,16,128], index: 1, kind: input, shape index: {}]
  %s2 = inlined_call_operand.vmem [shape: bf16[16,128], index: 2, kind: input, shape index: {}]
  %s3 = inlined_call_operand.vmem [shape: bf16[2,8,8,128], index: 3, kind: output, shape index: {0}]
  %s4 = inlined_call_operand.vmem [shape: f32[16,128], index: 4, kind: output, shape index: {1}]
  %s5 = inlined_call_operand.vmem [shape: bf16[2,8,8,128], index: 5, kind: output, shape index: {2}]
  %s6 = inlined_call_operand.vmem [shape: f32[16,128], index: 6, kind: output, shape index: {3}]
  %7 = xla_tuple %s3, %s4, %s5, %s6
  %s8 = sld [smem:[#allocation0]]
  $region69: #{residual_block_forward.3} parent=0
    _
  %s10 = ssub.s32 1, %s8
  %s11 = scalar_select 0, %s10, %s8
  loop: start=0, step=1, limit=4
  $region2: #{residual_block_forward.3} parent=0 // loop_pre_header
    _
  $region3: #{residual_block_forward.3} parent=0 // loop_header
    %s13 = sphi 0, %s17
    %p14 = scmp.ge.s32.totalorder %s13, 4
    %s23 = sphi 0, %s25
    %s26 = sphi 0, %s23
    %s27 = sphi 0, %s26
    %s43 = sphi 0, %s27
    %s47 = sphi 0, %s47
    %s49 = sphi 0, %s47
    %s50 = sphi 0, %s49
    %s64 = sphi 0, %s50
    %s68 = sphi 0, %s68
    %s70 = sphi 0, %s68
    %s71 = sphi 0, %s70
    %s85 = sphi 0, %s71
    %s91 = sphi 0, %s93
    %s94 = sphi 0, %s91
    %s95 = sphi 0, %s94
    %s111 = sphi 0, %s95
    %s117 = sphi 0, %s119
    %s120 = sphi 0, %s117
    %s121 = sphi 0, %s120
    %s137 = sphi 0, %s121
    %s143 = sphi 0, %s145
    %s146 = sphi 0, %s143
    %s147 = sphi 0, %s146
    %s163 = sphi 0, %s147
    %s169 = sphi 0, %s171
    %s172 = sphi 0, %s169
    %s173 = sphi 0, %s172
    %s189 = sphi 0, %s173
  $region4: #{residual_block_forward.3} parent=0 // loop_header_branch
    %16 = sbr.rel (%p14) target = $region8
  $region5: #{residual_block_forward.3} parent=0 // loop_body
    %s18 = ssub.s32 %s13, 1
    %s19 = ssub.s32 %s13, 2
    %s20 = sadd.s32 %s13, 1
    %s21 = ssub.s32 %s13, %s20
    %p22 = scmp.eq.s32.totalorder %s21, 0
    %s24 = sadd.s32 %s23, 1
    %s25 = scalar_select %p22, %s23, %s24
    %p28 = pneg %p22
    %p29 = scmp.eq.s32.totalorder %s13, 1
    %p30 = por %p28, %p29
    %p31 = scmp.ne.s32.totalorder %s23, %s26
    %p32 = scmp.eq.s32.totalorder %s13, 0
    %p33 = por %p31, %p32
    %p34 = scmp.ne.s32.totalorder %s23, %s26
    %p35 = scmp.eq.s32.totalorder %s18, 1
    %p36 = por %p34, %p35
    %p37 = scmp.ne.s32.totalorder %s26, %s27
    %p38 = scmp.eq.s32.totalorder %s18, 0
    %p39 = por %p37, %p38
    %p40 = scmp.ne.s32.totalorder %s26, %s27
    %p41 = scmp.eq.s32.totalorder %s19, 1
    %p42 = por %p40, %p41
    %p44 = scmp.ne.s32.totalorder %s27, %s43
    %p45 = scmp.eq.s32.totalorder %s19, 0
    %p46 = por %p44, %p45
    %s48 = sadd.s32 %s47, 1
    %p51 = scmp.eq.s32.totalorder %s13, 1
    %p52 = scmp.ne.s32.totalorder %s47, %s49
    %p53 = scmp.eq.s32.totalorder %s13, 0
    %p54 = por %p52, %p53
    %p55 = scmp.ne.s32.totalorder %s47, %s49
    %p56 = scmp.eq.s32.totalorder %s18, 1
    %p57 = por %p55, %p56
    %p58 = scmp.ne.s32.totalorder %s49, %s50
    %p59 = scmp.eq.s32.totalorder %s18, 0
    %p60 = por %p58, %p59
    %p61 = scmp.ne.s32.totalorder %s49, %s50
    %p62 = scmp.eq.s32.totalorder %s19, 1
    %p63 = por %p61, %p62
    %p65 = scmp.ne.s32.totalorder %s50, %s64
    %p66 = scmp.eq.s32.totalorder %s19, 0
    %p67 = por %p65, %p66
    %s69 = sadd.s32 %s68, 1
    %p72 = scmp.eq.s32.totalorder %s13, 1
    %p73 = scmp.ne.s32.totalorder %s68, %s70
    %p74 = scmp.eq.s32.totalorder %s13, 0
    %p75 = por %p73, %p74
    %p76 = scmp.ne.s32.totalorder %s68, %s70
    %p77 = scmp.eq.s32.totalorder %s18, 1
    %p78 = por %p76, %p77
    %p79 = scmp.ne.s32.totalorder %s70, %s71
    %p80 = scmp.eq.s32.totalorder %s18, 0
    %p81 = por %p79, %p80
    %p82 = scmp.ne.s32.totalorder %s70, %s71
    %p83 = scmp.eq.s32.totalorder %s19, 1
    %p84 = por %p82, %p83
    %p86 = scmp.ne.s32.totalorder %s71, %s85
    %p87 = scmp.eq.s32.totalorder %s19, 0
    %p88 = por %p86, %p87
    %s89 = ssub.s32 %s13, %s20
    %p90 = scmp.eq.s32.totalorder %s89, 0
    %s92 = sadd.s32 %s91, 1
    %s93 = scalar_select %p90, %s91, %s92
    %p96 = pneg %p90
    %p97 = scmp.eq.s32.totalorder %s13, 1
    %p98 = por %p96, %p97
    %p99 = scmp.ne.s32.totalorder %s91, %s94
    %p100 = scmp.eq.s32.totalorder %s13, 0
    %p101 = por %p99, %p100
    %p102 = scmp.ne.s32.totalorder %s91, %s94
    %p103 = scmp.eq.s32.totalorder %s18, 1
    %p104 = por %p102, %p103
    %p105 = scmp.ne.s32.totalorder %s94, %s95
    %p106 = scmp.eq.s32.totalorder %s18, 0
    %p107 = por %p105, %p106
    %p108 = scmp.ne.s32.totalorder %s94, %s95
    %p109 = scmp.eq.s32.totalorder %s19, 1
    %p110 = por %p108, %p109
    %p112 = scmp.ne.s32.totalorder %s95, %s111
    %p113 = scmp.eq.s32.totalorder %s19, 0
    %p114 = por %p112, %p113
    %s115 = ssub.s32 %s13, %s20
    %p116 = scmp.eq.s32.totalorder %s115, 0
    %s118 = sadd.s32 %s117, 1
    %s119 = scalar_select %p116, %s117, %s118
    %p122 = pneg %p116
    %p123 = scmp.eq.s32.totalorder %s13, 1
    %p124 = por %p122, %p123
    %p125 = scmp.ne.s32.totalorder %s117, %s120
    %p126 = scmp.eq.s32.totalorder %s13, 0
    %p127 = por %p125, %p126
    %p128 = scmp.ne.s32.totalorder %s117, %s120
    %p129 = scmp.eq.s32.totalorder %s18, 1
    %p130 = por %p128, %p129
    %p131 = scmp.ne.s32.totalorder %s120, %s121
    %p132 = scmp.eq.s32.totalorder %s18, 0
    %p133 = por %p131, %p132
    %p134 = scmp.ne.s32.totalorder %s120, %s121
    %p135 = scmp.eq.s32.totalorder %s19, 1
    %p136 = por %p134, %p135
    %p138 = scmp.ne.s32.totalorder %s121, %s137
    %p139 = scmp.eq.s32.totalorder %s19, 0
    %p140 = por %p138, %p139
    %s141 = ssub.s32 %s13, %s20
    %p142 = scmp.eq.s32.totalorder %s141, 0
    %s144 = sadd.s32 %s143, 1
    %s145 = scalar_select %p142, %s143, %s144
    %p148 = pneg %p142
    %p149 = scmp.eq.s32.totalorder %s13, 1
    %p150 = por %p148, %p149
    %p151 = scmp.ne.s32.totalorder %s143, %s146
    %p152 = scmp.eq.s32.totalorder %s13, 0
    %p153 = por %p151, %p152
    %p154 = scmp.ne.s32.totalorder %s143, %s146
    %p155 = scmp.eq.s32.totalorder %s18, 1
    %p156 = por %p154, %p155
    %p157 = scmp.ne.s32.totalorder %s146, %s147
    %p158 = scmp.eq.s32.totalorder %s18, 0
    %p159 = por %p157, %p158
    %p160 = scmp.ne.s32.totalorder %s146, %s147
    %p161 = scmp.eq.s32.totalorder %s19, 1
    %p162 = por %p160, %p161
    %p164 = scmp.ne.s32.totalorder %s147, %s163
    %p165 = scmp.eq.s32.totalorder %s19, 0
    %p166 = por %p164, %p165
    %s167 = ssub.s32 %s13, %s20
    %p168 = scmp.eq.s32.totalorder %s167, 0
    %s170 = sadd.s32 %s169, 1
    %s171 = scalar_select %p168, %s169, %s170
    %p174 = pneg %p168
    %p175 = scmp.eq.s32.totalorder %s13, 1
    %p176 = por %p174, %p175
    %p177 = scmp.ne.s32.totalorder %s169, %s172
    %p178 = scmp.eq.s32.totalorder %s13, 0
    %p179 = por %p177, %p178
    %p180 = scmp.ne.s32.totalorder %s169, %s172
    %p181 = scmp.eq.s32.totalorder %s18, 1
    %p182 = por %p180, %p181
    %p183 = scmp.ne.s32.totalorder %s172, %s173
    %p184 = scmp.eq.s32.totalorder %s18, 0
    %p185 = por %p183, %p184
    %p186 = scmp.ne.s32.totalorder %s172, %s173
    %p187 = scmp.eq.s32.totalorder %s19, 1
    %p188 = por %p186, %p187
    %p190 = scmp.ne.s32.totalorder %s173, %s189
    %p191 = scmp.eq.s32.totalorder %s19, 0
    %p192 = por %p190, %p191
    %p193 = scmp.le.s32.totalorder 1, %s13
    %p194 = scmp.lt.s32.totalorder %s13, 3
    %p195 = pnand %p193, %p194
    %p196 = pneg %p195
    // Predicated region
    $region9: #{residual_block_forward.3} parent=5 // pred_check
      _
    $region10: #{residual_block_forward.3} parent=5 // pred_check_branch
      %198 = sbr.rel (%p195) target = $region12
    $region11: #{residual_block_forward.3} parent=5 // pred_region
      %s199 = ssub.s32 %s13, 1
      // Predicated region
      $region13: #{residual_block_forward.3} parent=11 // pred_check
        %p200 = pneg %p60
      $region14: #{residual_block_forward.3} parent=11 // pred_check_branch
        %202 = sbr.rel (%p200) target = $region16
      $region15: #{residual_block_forward.3} parent=11 // pred_region
        _
      $region16: #{residual_block_forward.3} parent=11 // pred_fallthru
        _
      // Predicated region
      $region17: #{residual_block_forward.3} parent=11 // pred_check
        %p203 = pneg %p81
      $region18: #{residual_block_forward.3} parent=11 // pred_check_branch
        %205 = sbr.rel (%p203) target = $region20
      $region19: #{residual_block_forward.3} parent=11 // pred_region
        _
      $region20: #{residual_block_forward.3} parent=11 // pred_fallthru
        _
    $region12: #{residual_block_forward.3} parent=5 // pred_fallthru
      _
    %p206 = scmp.lt.s32.totalorder %s13, 2
    // Predicated region
    $region21: #{residual_block_forward.3} parent=5 // pred_check
      %p207 = pneg %p206
    $region22: #{residual_block_forward.3} parent=5 // pred_check_branch
      %209 = sbr.rel (%p207) target = $region24
    $region23: #{residual_block_forward.3} parent=5 // pred_region
      // Predicated region
      $region25: #{residual_block_forward.3} parent=23 // pred_check
        %p210 = pneg %p33
      $region26: #{residual_block_forward.3} parent=23 // pred_check_branch
        %212 = sbr.rel (%p210) target = $region28
      $region27: #{residual_block_forward.3} parent=23 // pred_region
        %p213 = scmp.lt.s32.totalorder %s13, 1
        %s214 = scalar_select %p213, %s13, 1
        %s215 = smul.addr %s214, 72
        %s216 = smul.addr %s215, 4
        %s217 = scalar_lea.vmem %s0, %s216
      $region28: #{residual_block_forward.3} parent=23 // pred_fallthru
        _
    $region24: #{residual_block_forward.3} parent=5 // pred_fallthru
      _
    %p218 = scmp.le.s32.totalorder 1, %s13
    %p219 = scmp.lt.s32.totalorder %s13, 3
    %p220 = pnand %p218, %p219
    %p221 = pneg %p220
    // Predicated region
    $region29: #{residual_block_forward.3} parent=5 // pred_check
      _
    $region30: #{residual_block_forward.3} parent=5 // pred_check_branch
      %223 = sbr.rel (%p220) target = $region32
    $region31: #{residual_block_forward.3} parent=5 // pred_region
      %s224 = ssub.s32 %s13, 1
      %p225 = scmp.lt.s32.totalorder %s18, 1
      %s226 = scalar_select %p225, %s18, 1
      %s227 = smul.addr %s226, 72
      %s228 = smul.addr %s227, 4
      %s229 = scalar_lea.vmem %s0, %s228
      %p230 = pneg %p39
      %p231 = pneg %p36
      %p232 = pneg %p60
      %p233 = pneg %p57
      %p234 = pneg %p81
      %p235 = pneg %p78
      %p236 = pneg %p107
      %p237 = pneg %p104
      %p238 = scmp.lt.s32.totalorder %s18, 1
      %s239 = scalar_select %p238, %s18, 1
      %s240 = smul.addr %s239, 8
      %s241 = smul.addr %s240, 4
      %s242 = scalar_lea.vmem %s3, %s241
      %p243 = pneg %p133
      %p244 = pneg %p130
      %p245 = scmp.lt.s32.totalorder %s18, 1
      %s246 = scalar_select %p245, %s18, 1
      %s247 = smul.addr %s246, 8
      %s248 = scalar_lea.vmem %s4, %s247
      %p249 = pneg %p159
      %p250 = pneg %p156
      %p251 = scmp.lt.s32.totalorder %s18, 1
      %s252 = scalar_select %p251, %s18, 1
      %s253 = smul.addr %s252, 8
      %s254 = smul.addr %s253, 4
      %s255 = scalar_lea.vmem %s5, %s254
      %p256 = pneg %p185
      %p257 = pneg %p182
      %p258 = scmp.lt.s32.totalorder %s18, 1
      %s259 = scalar_select %p258, %s18, 1
      %s260 = smul.addr %s259, 8
      %s261 = scalar_lea.vmem %s6, %s260
      %p262 = scmp.lt.s32.totalorder %s18, 1
      %s263 = scalar_select %p262, %s18, 1
      %s264 = smul.addr %s263, 72
      %s265 = smul.addr %s264, 4
      %s266 = scalar_lea.vmem %s0, %s265
      %p267 = scmp.lt.s32.totalorder %s18, 1
      %s268 = scalar_select %p267, %s18, 1
      %s269 = smul.addr %s268, 8
      %s270 = smul.addr %s269, 4
      %s271 = scalar_lea.vmem %s3, %s270
      %p272 = scmp.lt.s32.totalorder %s18, 1
      %s273 = scalar_select %p272, %s18, 1
      %s274 = smul.addr %s273, 8
      %s275 = scalar_lea.vmem %s4, %s274
      %p276 = scmp.lt.s32.totalorder %s18, 1
      %s277 = scalar_select %p276, %s18, 1
      %s278 = smul.addr %s277, 8
      %s279 = smul.addr %s278, 4
      %s280 = scalar_lea.vmem %s5, %s279
      %p281 = scmp.lt.s32.totalorder %s18, 1
      %s282 = scalar_select %p281, %s18, 1
      %s283 = smul.addr %s282, 8
      %s284 = scalar_lea.vmem %s6, %s283
      %v286 = vld [vmem:[%s266] sm:$0xf]
      %v287 = vld [vmem:[%s266 + $0x8] sm:$0xf]
      %v288 = vld [vmem:[%s266 + $0x10] sm:$0xf]
      %v289 = vld [vmem:[%s266 + $0x18] sm:$0xf]
      %v290 = vld [vmem:[%s266 + $0x20] sm:$0xf]
      %v291 = vld [vmem:[%s266 + $0x28] sm:$0xf]
      %v292 = vld [vmem:[%s266 + $0x30] sm:$0xf]
      %v293 = vld [vmem:[%s266 + $0x38] sm:$0xf]
      %s294 = scalar_lea.vmem %s266, 72
      %v295 = vld [vmem:[%s294] sm:$0xf]
      %v296 = vld [vmem:[%s294 + $0x8] sm:$0xf]
      %v297 = vld [vmem:[%s294 + $0x10] sm:$0xf]
      %v298 = vld [vmem:[%s294 + $0x18] sm:$0xf]
      %v299 = vld [vmem:[%s294 + $0x20] sm:$0xf]
      %v300 = vld [vmem:[%s294 + $0x28] sm:$0xf]
      %v301 = vld [vmem:[%s294 + $0x30] sm:$0xf]
      %v302 = vld [vmem:[%s294 + $0x38] sm:$0xf]
      %v303 = vld [vmem:[%s266 + $0x4] sm:$0x1]
      %v304 = vld [vmem:[%s266 + $0xc] sm:$0x1]
      %v305 = vld [vmem:[%s266 + $0x14] sm:$0x1]
      %v306 = vld [vmem:[%s266 + $0x1c] sm:$0x1]
      %v307 = vld [vmem:[%s266 + $0x24] sm:$0x1]
      %v308 = vld [vmem:[%s266 + $0x2c] sm:$0x1]
      %v309 = vld [vmem:[%s266 + $0x34] sm:$0x1]
      %v310 = vld [vmem:[%s266 + $0x3c] sm:$0x1]
      %vm311 = vsmask.f32 3328
      %vm312 = vsmask.f32 7440
      %vm313 = vmor %vm311, %vm312
      %v315 = vshrl.u32 %v286, 16
      %v317 = vrot.slane %v315, 4
      %v318 = vshll.u32 %v286, 16
      %v320 = vrot.slane %v318, 5
      %v321 = vor.u32 %v317, %v320
      %v322 = vrot.slane %v321, 4
      %v324 = vshll.u32 %v303, 16
      %v326 = vrot.slane %v324, 5
      %v327 = vsel %vm313, %v322, %v326
      %v329 = vshrl.u32 %v287, 16
      %v331 = vrot.slane %v329, 4
      %v332 = vshll.u32 %v287, 16
      %v334 = vrot.slane %v332, 5
      %v335 = vor.u32 %v331, %v334
      %v336 = vrot.slane %v335, 4
      %v338 = vshll.u32 %v304, 16
      %v340 = vrot.slane %v338, 5
      %v341 = vsel %vm313, %v336, %v340
      %v343 = vshrl.u32 %v288, 16
      %v345 = vrot.slane %v343, 4
      %v346 = vshll.u32 %v288, 16
      %v348 = vrot.slane %v346, 5
      %v349 = vor.u32 %v345, %v348
      %v350 = vrot.slane %v349, 4
      %v352 = vshll.u32 %v305, 16
      %v354 = vrot.slane %v352, 5
      %v355 = vsel %vm313, %v350, %v354
      %v357 = vshrl.u32 %v289, 16
      %v359 = vrot.slane %v357, 4
      %v360 = vshll.u32 %v289, 16
      %v362 = vrot.slane %v360, 5
      %v363 = vor.u32 %v359, %v362
      %v364 = vrot.slane %v363, 4
      %v366 = vshll.u32 %v306, 16
      %v368 = vrot.slane %v366, 5
      %v369 = vsel %vm313, %v364, %v368
      %v371 = vshrl.u32 %v290, 16
      %v373 = vrot.slane %v371, 4
      %v374 = vshll.u32 %v290, 16
      %v376 = vrot.slane %v374, 5
      %v377 = vor.u32 %v373, %v376
      %v378 = vrot.slane %v377, 4
      %v380 = vshll.u32 %v307, 16
      %v382 = vrot.slane %v380, 5
      %v383 = vsel %vm313, %v378, %v382
      %v385 = vshrl.u32 %v291, 16
      %v387 = vrot.slane %v385, 4
      %v388 = vshll.u32 %v291, 16
      %v390 = vrot.slane %v388, 5
      %v391 = vor.u32 %v387, %v390
      %v392 = vrot.slane %v391, 4
      %v394 = vshll.u32 %v308, 16
      %v396 = vrot.slane %v394, 5
      %v397 = vsel %vm313, %v392, %v396
      %v399 = vshrl.u32 %v292, 16
      %v401 = vrot.slane %v399, 4
      %v402 = vshll.u32 %v292, 16
      %v404 = vrot.slane %v402, 5
      %v405 = vor.u32 %v401, %v404
      %v406 = vrot.slane %v405, 4
      %v408 = vshll.u32 %v309, 16
      %v410 = vrot.slane %v408, 5
      %v411 = vsel %vm313, %v406, %v410
      %v413 = vshrl.u32 %v293, 16
      %v415 = vrot.slane %v413, 4
      %v416 = vshll.u32 %v293, 16
      %v418 = vrot.slane %v416, 5
      %v419 = vor.u32 %v415, %v418
      %v420 = vrot.slane %v419, 4
      %v422 = vshll.u32 %v310, 16
      %v424 = vrot.slane %v422, 5
      %v425 = vsel %vm313, %v420, %v424
      %s426 = scalar_lea.vmem %s266, 144
      %v427 = vld [vmem:[%s426] sm:$0xf]
      %v428 = vld [vmem:[%s426 + $0x8] sm:$0xf]
      %v429 = vld [vmem:[%s426 + $0x10] sm:$0xf]
      %v430 = vld [vmem:[%s426 + $0x18] sm:$0xf]
      %v431 = vld [vmem:[%s426 + $0x20] sm:$0xf]
      %v432 = vld [vmem:[%s426 + $0x28] sm:$0xf]
      %v433 = vld [vmem:[%s426 + $0x30] sm:$0xf]
      %v434 = vld [vmem:[%s426 + $0x38] sm:$0xf]
      %s435 = scalar_lea.vmem %s266, 216
      %v436 = vld [vmem:[%s435] sm:$0xf]
      %v437 = vld [vmem:[%s435 + $0x8] sm:$0xf]
      %v438 = vld [vmem:[%s435 + $0x10] sm:$0xf]
      %v439 = vld [vmem:[%s435 + $0x18] sm:$0xf]
      %v440 = vld [vmem:[%s435 + $0x20] sm:$0xf]
      %v441 = vld [vmem:[%s435 + $0x28] sm:$0xf]
      %v442 = vld [vmem:[%s435 + $0x30] sm:$0xf]
      %v443 = vld [vmem:[%s435 + $0x38] sm:$0xf]
      %v444 = vld [vmem:[%s426 + $0x4] sm:$0x1]
      %v445 = vld [vmem:[%s426 + $0xc] sm:$0x1]
      %v446 = vld [vmem:[%s426 + $0x14] sm:$0x1]
      %v447 = vld [vmem:[%s426 + $0x1c] sm:$0x1]
      %v448 = vld [vmem:[%s426 + $0x24] sm:$0x1]
      %v449 = vld [vmem:[%s426 + $0x2c] sm:$0x1]
      %v450 = vld [vmem:[%s426 + $0x34] sm:$0x1]
      %v451 = vld [vmem:[%s426 + $0x3c] sm:$0x1]
      %v453 = vshrl.u32 %v427, 16
      %v455 = vrot.slane %v453, 4
      %v456 = vshll.u32 %v427, 16
      %v458 = vrot.slane %v456, 5
      %v459 = vor.u32 %v455, %v458
      %v460 = vrot.slane %v459, 4
      %v462 = vshll.u32 %v444, 16
      %v464 = vrot.slane %v462, 5
      %v465 = vsel %vm313, %v460, %v464
      %v467 = vshrl.u32 %v428, 16
      %v469 = vrot.slane %v467, 4
      %v470 = vshll.u32 %v428, 16
      %v472 = vrot.slane %v470, 5
      %v473 = vor.u32 %v469, %v472
      %v474 = vrot.slane %v473, 4
      %v476 = vshll.u32 %v445, 16
      %v478 = vrot.slane %v476, 5
      %v479 = vsel %vm313, %v474, %v478
      %v481 = vshrl.u32 %v429, 16
      %v483 = vrot.slane %v481, 4
      %v484 = vshll.u32 %v429, 16
      %v486 = vrot.slane %v484, 5
      %v487 = vor.u32 %v483, %v486
      %v488 = vrot.slane %v487, 4
      %v490 = vshll.u32 %v446, 16
      %v492 = vrot.slane %v490, 5
      %v493 = vsel %vm313, %v488, %v492
      %v495 = vshrl.u32 %v430, 16
      %v497 = vrot.slane %v495, 4
      %v498 = vshll.u32 %v430, 16
      %v500 = vrot.slane %v498, 5
      %v501 = vor.u32 %v497, %v500
      %v502 = vrot.slane %v501, 4
      %v504 = vshll.u32 %v447, 16
      %v506 = vrot.slane %v504, 5
      %v507 = vsel %vm313, %v502, %v506
      %v509 = vshrl.u32 %v431, 16
      %v511 = vrot.slane %v509, 4
      %v512 = vshll.u32 %v431, 16
      %v514 = vrot.slane %v512, 5
      %v515 = vor.u32 %v511, %v514
      %v516 = vrot.slane %v515, 4
      %v518 = vshll.u32 %v448, 16
      %v520 = vrot.slane %v518, 5
      %v521 = vsel %vm313, %v516, %v520
      %v523 = vshrl.u32 %v432, 16
      %v525 = vrot.slane %v523, 4
      %v526 = vshll.u32 %v432, 16
      %v528 = vrot.slane %v526, 5
      %v529 = vor.u32 %v525, %v528
      %v530 = vrot.slane %v529, 4
      %v532 = vshll.u32 %v449, 16
      %v534 = vrot.slane %v532, 5
      %v535 = vsel %vm313, %v530, %v534
      %v537 = vshrl.u32 %v433, 16
      %v539 = vrot.slane %v537, 4
      %v540 = vshll.u32 %v433, 16
      %v542 = vrot.slane %v540, 5
      %v543 = vor.u32 %v539, %v542
      %v544 = vrot.slane %v543, 4
      %v546 = vshll.u32 %v450, 16
      %v548 = vrot.slane %v546, 5
      %v549 = vsel %vm313, %v544, %v548
      %v551 = vshrl.u32 %v434, 16
      %v553 = vrot.slane %v551, 4
      %v554 = vshll.u32 %v434, 16
      %v556 = vrot.slane %v554, 5
      %v557 = vor.u32 %v553, %v556
      %v558 = vrot.slane %v557, 4
      %v560 = vshll.u32 %v451, 16
      %v562 = vrot.slane %v560, 5
      %v563 = vsel %vm313, %v558, %v562
      %s564 = scalar_lea.vmem %s266, 8
      %v565 = vld [vmem:[%s564] sm:$0xf]
      %v566 = vld [vmem:[%s564 + $0x8] sm:$0xf]
      %v567 = vld [vmem:[%s564 + $0x10] sm:$0xf]
      %v568 = vld [vmem:[%s564 + $0x18] sm:$0xf]
      %v569 = vld [vmem:[%s564 + $0x20] sm:$0xf]
      %v570 = vld [vmem:[%s564 + $0x28] sm:$0xf]
      %v571 = vld [vmem:[%s564 + $0x30] sm:$0xf]
      %v572 = vld [vmem:[%s564 + $0x38] sm:$0xf]
      %s573 = scalar_lea.vmem %s266, 80
      %v574 = vld [vmem:[%s573] sm:$0xf]
      %v575 = vld [vmem:[%s573 + $0x8] sm:$0xf]
      %v576 = vld [vmem:[%s573 + $0x10] sm:$0xf]
      %v577 = vld [vmem:[%s573 + $0x18] sm:$0xf]
      %v578 = vld [vmem:[%s573 + $0x20] sm:$0xf]
      %v579 = vld [vmem:[%s573 + $0x28] sm:$0xf]
      %v580 = vld [vmem:[%s573 + $0x30] sm:$0xf]
      %v581 = vld [vmem:[%s573 + $0x38] sm:$0xf]
      %v582 = vld [vmem:[%s564 + $0x4] sm:$0x1]
      %v583 = vld [vmem:[%s564 + $0xc] sm:$0x1]
      %v584 = vld [vmem:[%s564 + $0x14] sm:$0x1]
      %v585 = vld [vmem:[%s564 + $0x1c] sm:$0x1]
      %v586 = vld [vmem:[%s564 + $0x24] sm:$0x1]
      %v587 = vld [vmem:[%s564 + $0x2c] sm:$0x1]
      %v588 = vld [vmem:[%s564 + $0x34] sm:$0x1]
      %v589 = vld [vmem:[%s564 + $0x3c] sm:$0x1]
      %v591 = vshrl.u32 %v565, 16
      %v593 = vrot.slane %v591, 4
      %v594 = vshll.u32 %v565, 16
      %v596 = vrot.slane %v594, 5
      %v597 = vor.u32 %v593, %v596
      %v598 = vrot.slane %v597, 4
      %v600 = vshll.u32 %v582, 16
      %v602 = vrot.slane %v600, 5
      %v603 = vsel %vm313, %v598, %v602
      %v605 = vshrl.u32 %v566, 16
      %v607 = vrot.slane %v605, 4
      %v608 = vshll.u32 %v566, 16
      %v610 = vrot.slane %v608, 5
      %v611 = vor.u32 %v607, %v610
      %v612 = vrot.slane %v611, 4
      %v614 = vshll.u32 %v583, 16
      %v616 = vrot.slane %v614, 5
      %v617 = vsel %vm313, %v612, %v616
      %v619 = vshrl.u32 %v567, 16
      %v621 = vrot.slane %v619, 4
      %v622 = vshll.u32 %v567, 16
      %v624 = vrot.slane %v622, 5
      %v625 = vor.u32 %v621, %v624
      %v626 = vrot.slane %v625, 4
      %v628 = vshll.u32 %v584, 16
      %v630 = vrot.slane %v628, 5
      %v631 = vsel %vm313, %v626, %v630
      %v633 = vshrl.u32 %v568, 16
      %v635 = vrot.slane %v633, 4
      %v636 = vshll.u32 %v568, 16
      %v638 = vrot.slane %v636, 5
      %v639 = vor.u32 %v635, %v638
      %v640 = vrot.slane %v639, 4
      %v642 = vshll.u32 %v585, 16
      %v644 = vrot.slane %v642, 5
      %v645 = vsel %vm313, %v640, %v644
      %v647 = vshrl.u32 %v569, 16
      %v649 = vrot.slane %v647, 4
      %v650 = vshll.u32 %v569, 16
      %v652 = vrot.slane %v650, 5
      %v653 = vor.u32 %v649, %v652
      %v654 = vrot.slane %v653, 4
      %v656 = vshll.u32 %v586, 16
      %v658 = vrot.slane %v656, 5
      %v659 = vsel %vm313, %v654, %v658
      %v661 = vshrl.u32 %v570, 16
      %v663 = vrot.slane %v661, 4
      %v664 = vshll.u32 %v570, 16
      %v666 = vrot.slane %v664, 5
      %v667 = vor.u32 %v663, %v666
      %v668 = vrot.slane %v667, 4
      %v670 = vshll.u32 %v587, 16
      %v672 = vrot.slane %v670, 5
      %v673 = vsel %vm313, %v668, %v672
      %v675 = vshrl.u32 %v571, 16
      %v677 = vrot.slane %v675, 4
      %v678 = vshll.u32 %v571, 16
      %v680 = vrot.slane %v678, 5
      %v681 = vor.u32 %v677, %v680
      %v682 = vrot.slane %v681, 4
      %v684 = vshll.u32 %v588, 16
      %v686 = vrot.slane %v684, 5
      %v687 = vsel %vm313, %v682, %v686
      %v689 = vshrl.u32 %v572, 16
      %v691 = vrot.slane %v689, 4
      %v692 = vshll.u32 %v572, 16
      %v694 = vrot.slane %v692, 5
      %v695 = vor.u32 %v691, %v694
      %v696 = vrot.slane %v695, 4
      %v698 = vshll.u32 %v589, 16
      %v700 = vrot.slane %v698, 5
      %v701 = vsel %vm313, %v696, %v700
      %v710 = vunpack.c.l.b16 %v286
      %v711 = vunpack.c.l.b16 %v287
      %v712 = vunpack.c.l.b16 %v288
      %v713 = vunpack.c.l.b16 %v289
      %v714 = vunpack.c.l.b16 %v290
      %v715 = vunpack.c.l.b16 %v291
      %v716 = vunpack.c.l.b16 %v292
      %v717 = vunpack.c.l.b16 %v293
      %v718 = vpack.c.b16 %v711, %v710
      %v719 = vpack.c.b16 %v713, %v712
      %v720 = vpack.c.b16 %v715, %v714
      %v721 = vpack.c.b16 %v717, %v716
      %v730 = vunpack.c.l.b16 %v295
      %v731 = vunpack.c.l.b16 %v296
      %v732 = vunpack.c.l.b16 %v297
      %v733 = vunpack.c.l.b16 %v298
      %v734 = vunpack.c.l.b16 %v299
      %v735 = vunpack.c.l.b16 %v300
      %v736 = vunpack.c.l.b16 %v301
      %v737 = vunpack.c.l.b16 %v302
      %v738 = vpack.c.b16 %v731, %v730
      %v739 = vpack.c.b16 %v733, %v732
      %v740 = vpack.c.b16 %v735, %v734
      %v741 = vpack.c.b16 %v737, %v736
      %742 = vrot.lane.b32.xlu0 %v738, 16
      %v743 = vpop.permute.xlu0 %742
      %744 = vrot.lane.b32.xlu0 %v739, 16
      %v745 = vpop.permute.xlu0 %744
      %746 = vrot.lane.b32.xlu0 %v740, 16
      %v747 = vpop.permute.xlu0 %746
      %748 = vrot.lane.b32.xlu0 %v741, 16
      %v749 = vpop.permute.xlu0 %748
      %v750 = vunpack.c.l.b16 %v327
      %v751 = vunpack.c.l.b16 %v341
      %v752 = vunpack.c.l.b16 %v355
      %v753 = vunpack.c.l.b16 %v369
      %v754 = vunpack.c.l.b16 %v383
      %v755 = vunpack.c.l.b16 %v397
      %v756 = vunpack.c.l.b16 %v411
      %v757 = vunpack.c.l.b16 %v425
      %v758 = vpack.c.b16 %v751, %v750
      %v759 = vpack.c.b16 %v753, %v752
      %v760 = vpack.c.b16 %v755, %v754
      %v761 = vpack.c.b16 %v757, %v756
      %762 = vrot.lane.b32.xlu0 %v758, 32
      %v763 = vpop.permute.xlu0 %762
      %764 = vrot.lane.b32.xlu0 %v759, 32
      %v765 = vpop.permute.xlu0 %764
      %766 = vrot.lane.b32.xlu0 %v760, 32
      %v767 = vpop.permute.xlu0 %766
      %768 = vrot.lane.b32.xlu0 %v761, 32
      %v769 = vpop.permute.xlu0 %768
      %v778 = vunpack.c.l.b16 %v427
      %v779 = vunpack.c.l.b16 %v428
      %v780 = vunpack.c.l.b16 %v429
      %v781 = vunpack.c.l.b16 %v430
      %v782 = vunpack.c.l.b16 %v431
      %v783 = vunpack.c.l.b16 %v432
      %v784 = vunpack.c.l.b16 %v433
      %v785 = vunpack.c.l.b16 %v434
      %v786 = vpack.c.b16 %v779, %v778
      %v787 = vpack.c.b16 %v781, %v780
      %v788 = vpack.c.b16 %v783, %v782
      %v789 = vpack.c.b16 %v785, %v784
      %790 = vrot.lane.b32.xlu0 %v786, 48
      %v791 = vpop.permute.xlu0 %790
      %792 = vrot.lane.b32.xlu0 %v787, 48
      %v793 = vpop.permute.xlu0 %792
      %794 = vrot.lane.b32.xlu0 %v788, 48
      %v795 = vpop.permute.xlu0 %794
      %796 = vrot.lane.b32.xlu0 %v789, 48
      %v797 = vpop.permute.xlu0 %796
      %v806 = vunpack.c.l.b16 %v436
      %v807 = vunpack.c.l.b16 %v437
      %v808 = vunpack.c.l.b16 %v438
      %v809 = vunpack.c.l.b16 %v439
      %v810 = vunpack.c.l.b16 %v440
      %v811 = vunpack.c.l.b16 %v441
      %v812 = vunpack.c.l.b16 %v442
      %v813 = vunpack.c.l.b16 %v443
      %v814 = vpack.c.b16 %v807, %v806
      %v815 = vpack.c.b16 %v809, %v808
      %v816 = vpack.c.b16 %v811, %v810
      %v817 = vpack.c.b16 %v813, %v812
      %818 = vrot.lane.b32.xlu0 %v814, 64
      %v819 = vpop.permute.xlu0 %818
      %820 = vrot.lane.b32.xlu0 %v815, 64
      %v821 = vpop.permute.xlu0 %820
      %822 = vrot.lane.b32.xlu0 %v816, 64
      %v823 = vpop.permute.xlu0 %822
      %824 = vrot.lane.b32.xlu0 %v817, 64
      %v825 = vpop.permute.xlu0 %824
      %v826 = vunpack.c.l.b16 %v465
      %v827 = vunpack.c.l.b16 %v479
      %v828 = vunpack.c.l.b16 %v493
      %v829 = vunpack.c.l.b16 %v507
      %v830 = vunpack.c.l.b16 %v521
      %v831 = vunpack.c.l.b16 %v535
      %v832 = vunpack.c.l.b16 %v549
      %v833 = vunpack.c.l.b16 %v563
      %v834 = vpack.c.b16 %v827, %v826
      %v835 = vpack.c.b16 %v829, %v828
      %v836 = vpack.c.b16 %v831, %v830
      %v837 = vpack.c.b16 %v833, %v832
      %838 = vrot.lane.b32.xlu0 %v834, 80
      %v839 = vpop.permute.xlu0 %838
      %840 = vrot.lane.b32.xlu0 %v835, 80
      %v841 = vpop.permute.xlu0 %840
      %842 = vrot.lane.b32.xlu0 %v836, 80
      %v843 = vpop.permute.xlu0 %842
      %844 = vrot.lane.b32.xlu0 %v837, 80
      %v845 = vpop.permute.xlu0 %844
      %v854 = vunpack.c.l.b16 %v565
      %v855 = vunpack.c.l.b16 %v566
      %v856 = vunpack.c.l.b16 %v567
      %v857 = vunpack.c.l.b16 %v568
      %v858 = vunpack.c.l.b16 %v569
      %v859 = vunpack.c.l.b16 %v570
      %v860 = vunpack.c.l.b16 %v571
      %v861 = vunpack.c.l.b16 %v572
      %v862 = vpack.c.b16 %v855, %v854
      %v863 = vpack.c.b16 %v857, %v856
      %v864 = vpack.c.b16 %v859, %v858
      %v865 = vpack.c.b16 %v861, %v860
      %866 = vrot.lane.b32.xlu0 %v862, 96
      %v867 = vpop.permute.xlu0 %866
      %868 = vrot.lane.b32.xlu0 %v863, 96
      %v869 = vpop.permute.xlu0 %868
      %870 = vrot.lane.b32.xlu0 %v864, 96
      %v871 = vpop.permute.xlu0 %870
      %872 = vrot.lane.b32.xlu0 %v865, 96
      %v873 = vpop.permute.xlu0 %872
      %v882 = vunpack.c.l.b16 %v574
      %v883 = vunpack.c.l.b16 %v575
      %v884 = vunpack.c.l.b16 %v576
      %v885 = vunpack.c.l.b16 %v577
      %v886 = vunpack.c.l.b16 %v578
      %v887 = vunpack.c.l.b16 %v579
      %v888 = vunpack.c.l.b16 %v580
      %v889 = vunpack.c.l.b16 %v581
      %v890 = vpack.c.b16 %v883, %v882
      %v891 = vpack.c.b16 %v885, %v884
      %v892 = vpack.c.b16 %v887, %v886
      %v893 = vpack.c.b16 %v889, %v888
      %894 = vrot.lane.b32.xlu0 %v890, 112
      %v895 = vpop.permute.xlu0 %894
      %896 = vrot.lane.b32.xlu0 %v891, 112
      %v897 = vpop.permute.xlu0 %896
      %898 = vrot.lane.b32.xlu0 %v892, 112
      %v899 = vpop.permute.xlu0 %898
      %900 = vrot.lane.b32.xlu0 %v893, 112
      %v901 = vpop.permute.xlu0 %900
      %v902 = vunpack.c.l.b16 %v603
      %v903 = vunpack.c.l.b16 %v617
      %v904 = vunpack.c.l.b16 %v631
      %v905 = vunpack.c.l.b16 %v645
      %v906 = vunpack.c.l.b16 %v659
      %v907 = vunpack.c.l.b16 %v673
      %v908 = vunpack.c.l.b16 %v687
      %v909 = vunpack.c.l.b16 %v701
      %v910 = vpack.c.b16 %v903, %v902
      %v911 = vpack.c.b16 %v905, %v904
      %v912 = vpack.c.b16 %v907, %v906
      %v913 = vpack.c.b16 %v909, %v908
      %vm914 = vcmask 130048
      %v917 = vsel %vm914, %v718, %v743
      %v920 = vsel %vm914, %v719, %v745
      %v923 = vsel %vm914, %v720, %v747
      %v926 = vsel %vm914, %v721, %v749
      %vm927 = vcmask 261120
      %v929 = vsel %vm927, %v917, %v763
      %v931 = vsel %vm927, %v920, %v765
      %v933 = vsel %vm927, %v923, %v767
      %v935 = vsel %vm927, %v926, %v769
      %vm936 = vcmask 392192
      %v938 = vsel %vm936, %v929, %v791
      %v940 = vsel %vm936, %v931, %v793
      %v942 = vsel %vm936, %v933, %v795
      %v944 = vsel %vm936, %v935, %v797
      %vm945 = vcmask 523264
      %v947 = vsel %vm945, %v938, %v819
      %v949 = vsel %vm945, %v940, %v821
      %v951 = vsel %vm945, %v942, %v823
      %v953 = vsel %vm945, %v944, %v825
      %vm954 = vcmask 654336
      %v956 = vsel %vm954, %v947, %v839
      %v958 = vsel %vm954, %v949, %v841
      %v960 = vsel %vm954, %v951, %v843
      %v962 = vsel %vm954, %v953, %v845
      %vm963 = vcmask 785408
      %v965 = vsel %vm963, %v956, %v867
      %v967 = vsel %vm963, %v958, %v869
      %v969 = vsel %vm963, %v960, %v871
      %v971 = vsel %vm963, %v962, %v873
      %vm972 = vcmask 916480
      %v974 = vsel %vm972, %v965, %v895
      %v977 = vsel %vm972, %v967, %v897
      %v980 = vsel %vm972, %v969, %v899
      %v983 = vsel %vm972, %v971, %v901
      %v985 = vld [vmem:[%s1] sm:$0xf]
      %v986 = vld [vmem:[%s1 + $0x4] sm:$0xf]
      %v987 = vld [vmem:[%s1 + $0x8] sm:$0xf]
      %v988 = vld [vmem:[%s1 + $0xc] sm:$0xf]
      %v989 = vld [vmem:[%s1 + $0x10] sm:$0xf]
      %v990 = vld [vmem:[%s1 + $0x14] sm:$0xf]
      %v991 = vld [vmem:[%s1 + $0x18] sm:$0xf]
      %v992 = vld [vmem:[%s1 + $0x1c] sm:$0xf]
      %v993 = vld [vmem:[%s1 + $0x20] sm:$0xf]
      %v994 = vld [vmem:[%s1 + $0x24] sm:$0xf]
      %v995 = vld [vmem:[%s1 + $0x28] sm:$0xf]
      %v996 = vld [vmem:[%s1 + $0x2c] sm:$0xf]
      %v997 = vld [vmem:[%s1 + $0x30] sm:$0xf]
      %v998 = vld [vmem:[%s1 + $0x34] sm:$0xf]
      %v999 = vld [vmem:[%s1 + $0x38] sm:$0xf]
      %v1000 = vld [vmem:[%s1 + $0x3c] sm:$0xf]
      %v1001 = vld [vmem:[%s1 + $0x40] sm:$0xf]
      %v1002 = vld [vmem:[%s1 + $0x44] sm:$0xf]
      %v1021 = vunpack.c.l.b16 %v985
      %v1022 = vunpack.c.l.b16 %v986
      %v1023 = vunpack.c.l.b16 %v987
      %v1024 = vunpack.c.l.b16 %v988
      %v1025 = vunpack.c.l.b16 %v989
      %v1026 = vunpack.c.l.b16 %v990
      %v1027 = vunpack.c.l.b16 %v991
      %v1028 = vunpack.c.l.b16 %v992
      %v1029 = vunpack.c.l.b16 %v993
      %v1030 = vunpack.c.l.b16 %v994
      %v1031 = vunpack.c.l.b16 %v995
      %v1032 = vunpack.c.l.b16 %v996
      %v1033 = vunpack.c.l.b16 %v997
      %v1034 = vunpack.c.l.b16 %v998
      %v1035 = vunpack.c.l.b16 %v999
      %v1036 = vunpack.c.l.b16 %v1000
      %v1037 = vunpack.c.l.b16 %v1001
      %v1038 = vunpack.c.l.b16 %v1002
      %v1039 = vpack.c.b16 %v1022, %v1021
      %v1040 = vpack.c.b16 %v1024, %v1023
      %v1041 = vpack.c.b16 %v1026, %v1025
      %v1042 = vpack.c.b16 %v1028, %v1027
      %v1043 = vpack.c.b16 %v1030, %v1029
      %v1044 = vpack.c.b16 %v1032, %v1031
      %v1045 = vpack.c.b16 %v1034, %v1033
      %v1046 = vpack.c.b16 %v1036, %v1035
      %v1047 = vpack.c.b16 %v1038, %v1037
      %v1058 = vsel %vm914, %v910, 0
      %v1061 = vsel %vm914, %v911, 0
      %v1064 = vsel %vm914, %v912, 0
      %v1067 = vsel %vm914, %v913, 0
      %1069 = vmatprep.subr.bf16.mxu0 0
      %1070 = vmatpush1.bf16.msra.mxu0 %v1046
      %1071 = vmatprep.subr.bf16.mxu0 0
      %1072 = vmatpush1.bf16.msra.mxu0 %v1045
      %1073 = vmatprep.subr.bf16.mxu0 0
      %1074 = vmatpush1.bf16.msra.mxu0 %v1044
      %1075 = vmatprep.subr.bf16.mxu0 0
      %1076 = vmatpush1.bf16.msra.mxu0 %v1043
      %1077 = vmatprep.subr.bf16.mxu0 0
      %1078 = vmatpush1.bf16.msra.mxu0 %v1042
      %1079 = vmatprep.subr.bf16.mxu0 0
      %1080 = vmatpush1.bf16.msra.mxu0 %v1041
      %1081 = vmatprep.subr.bf16.mxu0 0
      %1082 = vmatpush1.bf16.msra.mxu0 %v1040
      %1083 = vmatprep.subr.bf16.mxu0 0
      %1084 = vmatpush1.bf16.msra.mxu0 %v1039
      %1085 = vmatprep.subr.bf16.mxu0 0
      %1086 = vmatpush2.bf16.msra.mxu0 0
      %1087 = vmatprep.subr.bf16.mxu0 0
      %1088 = vmatpush2.bf16.msra.mxu0 0
      %1089 = vmatprep.subr.bf16.mxu0 0
      %1090 = vmatpush2.bf16.msra.mxu0 0
      %1091 = vmatprep.subr.bf16.mxu0 0
      %1092 = vmatpush2.bf16.msra.mxu0 0
      %1093 = vmatprep.subr.bf16.mxu0 0
      %1094 = vmatpush2.bf16.msra.mxu0 0
      %1095 = vmatprep.subr.bf16.mxu0 0
      %1096 = vmatpush2.bf16.msra.mxu0 0
      %1097 = vmatprep.subr.bf16.mxu0 0
      %1098 = vmatpush2.bf16.msra.mxu0 0
      %1099 = vmatprep.subr.bf16.mxu0 0
      %1100 = vmatpush2.bf16.msra.mxu0 %v1047
      %1101 = vmatprep.mubr.bf16.mxu0 %v1058
      %1102 = vmatmul.mubr.bf16.gmra.mxu0 %v974
      %v1103 = vpop.f32.mrf.mxu0
      %v1104 = vadd.f32 0.0, %v1103
      %v1105 = vpop.f32.mrf.mxu0
      %v1106 = vpop.f32.mrf.mxu0
      %v1107 = vadd.f32 0.0, %v1106
      %v1108 = vpop.f32.mrf.mxu0
      %1109 = vmatprep.mubr.bf16.mxu0 %v1061
      %1110 = vmatmul.mubr.bf16.gmra.mxu0 %v977
      %v1111 = vpop.f32.mrf.mxu0
      %v1112 = vadd.f32 0.0, %v1111
      %v1113 = vpop.f32.mrf.mxu0
      %v1114 = vpop.f32.mrf.mxu0
      %v1115 = vadd.f32 0.0, %v1114
      %v1116 = vpop.f32.mrf.mxu0
      %1117 = vmatprep.mubr.bf16.mxu0 %v1064
      %1118 = vmatmul.mubr.bf16.gmra.mxu0 %v980
      %v1119 = vpop.f32.mrf.mxu0
      %v1120 = vadd.f32 0.0, %v1119
      %v1121 = vpop.f32.mrf.mxu0
      %v1122 = vpop.f32.mrf.mxu0
      %v1123 = vadd.f32 0.0, %v1122
      %v1124 = vpop.f32.mrf.mxu0
      %1125 = vmatprep.mubr.bf16.mxu0 %v1067
      %1126 = vmatmul.mubr.bf16.gmra.mxu0 %v983
      %v1127 = vpop.f32.mrf.mxu0
      %v1128 = vadd.f32 0.0, %v1127
      %v1129 = vpop.f32.mrf.mxu0
      %v1130 = vpop.f32.mrf.mxu0
      %v1131 = vadd.f32 0.0, %v1130
      %v1132 = vpop.f32.mrf.mxu0
      %1133 = vdwg.mxu0
      %v1134 = vpack.c.bf16 %v1104, %v1104
      %v1135 = vpack.c.bf16 %v1107, %v1107
      %v1136 = vpack.c.bf16 %v1112, %v1112
      %v1137 = vpack.c.bf16 %v1115, %v1115
      %v1138 = vpack.c.bf16 %v1120, %v1120
      %v1139 = vpack.c.bf16 %v1123, %v1123
      %v1140 = vpack.c.bf16 %v1128, %v1128
      %v1141 = vpack.c.bf16 %v1131, %v1131
      %1142 = vst [vmem:[%s271] sm:$0xf] %v1134
      %1143 = vst [vmem:[%s271 + $0x4] sm:$0xf] %v1135
      %1144 = vst [vmem:[%s271 + $0x8] sm:$0xf] %v1136
      %1145 = vst [vmem:[%s271 + $0xc] sm:$0xf] %v1137
      %1146 = vst [vmem:[%s271 + $0x10] sm:$0xf] %v1138
      %1147 = vst [vmem:[%s271 + $0x14] sm:$0xf] %v1139
      %1148 = vst [vmem:[%s271 + $0x18] sm:$0xf] %v1140
      %1149 = vst [vmem:[%s271 + $0x1c] sm:$0xf] %v1141
      %v1150 = vadd.f32 %v1104, %v1107
      %v1151 = vadd.f32 %v1150, %v1112
      %v1152 = vadd.f32 %v1151, %v1115
      %v1153 = vadd.f32 %v1152, %v1120
      %v1154 = vadd.f32 %v1153, %v1123
      %v1155 = vadd.f32 %v1154, %v1128
      %v1156 = vadd.f32 %v1155, %v1131
      %v1157 = vrot.slane %v1156, 4
      %v1158 = vadd.f32 %v1156, %v1157
      %v1159 = vrot.slane %v1158, 2
      %v1160 = vadd.f32 %v1158, %v1159
      %v1161 = vrot.slane %v1160, 1
      %v1162 = vadd.f32 %v1160, %v1161
      %v1163 = vmul.f32 %v1104, %v1104
      %v1164 = vmul.f32 %v1107, %v1107
      %v1165 = vmul.f32 %v1112, %v1112
      %v1166 = vmul.f32 %v1115, %v1115
      %v1167 = vmul.f32 %v1120, %v1120
      %v1168 = vmul.f32 %v1123, %v1123
      %v1169 = vmul.f32 %v1128, %v1128
      %v1170 = vmul.f32 %v1131, %v1131
      %v1171 = vadd.f32 %v1163, %v1164
      %v1172 = vadd.f32 %v1171, %v1165
      %v1173 = vadd.f32 %v1172, %v1166
      %v1174 = vadd.f32 %v1173, %v1167
      %v1175 = vadd.f32 %v1174, %v1168
      %v1176 = vadd.f32 %v1175, %v1169
      %v1177 = vadd.f32 %v1176, %v1170
      %v1178 = vrot.slane %v1177, 4
      %v1179 = vadd.f32 %v1177, %v1178
      %v1180 = vrot.slane %v1179, 2
      %v1181 = vadd.f32 %v1179, %v1180
      %v1182 = vrot.slane %v1181, 1
      %v1183 = vadd.f32 %v1181, %v1182
      %vm1184 = vcmask 1040384
      %v1185 = vsel %vm1184, %v1162, %v1183
      %vm1186 = vcmask 1041408
      %v1187 = vsel %vm1186, %v1185, 0.0
      %1188 = vst [vmem:[%s275] sm:$0xff] %v1187
      %v1189 = vld [vmem:[%s2] sm:$0xf]
      %v1190 = vld [vmem:[%s2 + $0x4] sm:$0xf]
      %v1193 = vunpack.c.l.b16 %v1189
      %v1194 = vunpack.c.l.b16 %v1190
      %v1195 = vpack.c.b16 %v1194, %v1193
      %v1198 = vsel %vm914, %v814, 0
      %v1201 = vsel %vm914, %v815, 0
      %v1204 = vsel %vm914, %v816, 0
      %v1207 = vsel %vm914, %v817, 0
      %1209 = vmatprep.subr.bf16.mxu0 0
      %1210 = vmatpush1.bf16.msra.mxu0 0
      %1211 = vmatprep.subr.bf16.mxu0 0
      %1212 = vmatpush1.bf16.msra.mxu0 0
      %1213 = vmatprep.subr.bf16.mxu0 0
      %1214 = vmatpush1.bf16.msra.mxu0 0
      %1215 = vmatprep.subr.bf16.mxu0 0
      %1216 = vmatpush1.bf16.msra.mxu0 0
      %1217 = vmatprep.subr.bf16.mxu0 0
      %1218 = vmatpush1.bf16.msra.mxu0 0
      %1219 = vmatprep.subr.bf16.mxu0 0
      %1220 = vmatpush1.bf16.msra.mxu0 0
      %1221 = vmatprep.subr.bf16.mxu0 0
      %1222 = vmatpush1.bf16.msra.mxu0 0
      %1223 = vmatprep.subr.bf16.mxu0 0
      %1224 = vmatpush1.bf16.msra.mxu0 %v1195
      %1225 = vmatprep.subr.bf16.mxu0 0
      %1226 = vmatpush2.bf16.msra.mxu0 0
      %1227 = vmatprep.subr.bf16.mxu0 0
      %1228 = vmatpush2.bf16.msra.mxu0 0
      %1229 = vmatprep.subr.bf16.mxu0 0
      %1230 = vmatpush2.bf16.msra.mxu0 0
      %1231 = vmatprep.subr.bf16.mxu0 0
      %1232 = vmatpush2.bf16.msra.mxu0 0
      %1233 = vmatprep.subr.bf16.mxu0 0
      %1234 = vmatpush2.bf16.msra.mxu0 0
      %1235 = vmatprep.subr.bf16.mxu0 0
      %1236 = vmatpush2.bf16.msra.mxu0 0
      %1237 = vmatprep.subr.bf16.mxu0 0
      %1238 = vmatpush2.bf16.msra.mxu0 0
      %1239 = vmatprep.subr.bf16.mxu0 0
      %1240 = vmatpush2.bf16.msra.mxu0 0
      %1241 = vmatprep.mubr.bf16.mxu0 0
      %1242 = vmatmul.mubr.bf16.gmra.mxu0 %v1198
      %v1243 = vpop.f32.mrf.mxu0
      %v1244 = vadd.f32 0.0, %v1243
      %v1245 = vpop.f32.mrf.mxu0
      %v1246 = vpop.f32.mrf.mxu0
      %v1247 = vadd.f32 0.0, %v1246
      %v1248 = vpop.f32.mrf.mxu0
      %1249 = vmatprep.mubr.bf16.mxu0 0
      %1250 = vmatmul.mubr.bf16.gmra.mxu0 %v1201
      %v1251 = vpop.f32.mrf.mxu0
      %v1252 = vadd.f32 0.0, %v1251
      %v1253 = vpop.f32.mrf.mxu0
      %v1254 = vpop.f32.mrf.mxu0
      %v1255 = vadd.f32 0.0, %v1254
      %v1256 = vpop.f32.mrf.mxu0
      %1257 = vmatprep.mubr.bf16.mxu0 0
      %1258 = vmatmul.mubr.bf16.gmra.mxu0 %v1204
      %v1259 = vpop.f32.mrf.mxu0
      %v1260 = vadd.f32 0.0, %v1259
      %v1261 = vpop.f32.mrf.mxu0
      %v1262 = vpop.f32.mrf.mxu0
      %v1263 = vadd.f32 0.0, %v1262
      %v1264 = vpop.f32.mrf.mxu0
      %1265 = vmatprep.mubr.bf16.mxu0 0
      %1266 = vmatmul.mubr.bf16.gmra.mxu0 %v1207
      %v1267 = vpop.f32.mrf.mxu0
      %v1268 = vadd.f32 0.0, %v1267
      %v1269 = vpop.f32.mrf.mxu0
      %v1270 = vpop.f32.mrf.mxu0
      %v1271 = vadd.f32 0.0, %v1270
      %v1272 = vpop.f32.mrf.mxu0
      %1273 = vdwg.mxu0
      %v1274 = vpack.c.bf16 %v1244, %v1244
      %v1275 = vpack.c.bf16 %v1247, %v1247
      %v1276 = vpack.c.bf16 %v1252, %v1252
      %v1277 = vpack.c.bf16 %v1255, %v1255
      %v1278 = vpack.c.bf16 %v1260, %v1260
      %v1279 = vpack.c.bf16 %v1263, %v1263
      %v1280 = vpack.c.bf16 %v1268, %v1268
      %v1281 = vpack.c.bf16 %v1271, %v1271
      %1282 = vst [vmem:[%s280] sm:$0xf] %v1274
      %1283 = vst [vmem:[%s280 + $0x4] sm:$0xf] %v1275
      %1284 = vst [vmem:[%s280 + $0x8] sm:$0xf] %v1276
      %1285 = vst [vmem:[%s280 + $0xc] sm:$0xf] %v1277
      %1286 = vst [vmem:[%s280 + $0x10] sm:$0xf] %v1278
      %1287 = vst [vmem:[%s280 + $0x14] sm:$0xf] %v1279
      %1288 = vst [vmem:[%s280 + $0x18] sm:$0xf] %v1280
      %1289 = vst [vmem:[%s280 + $0x1c] sm:$0xf] %v1281
      %v1290 = vadd.f32 %v1244, %v1247
      %v1291 = vadd.f32 %v1290, %v1252
      %v1292 = vadd.f32 %v1291, %v1255
      %v1293 = vadd.f32 %v1292, %v1260
      %v1294 = vadd.f32 %v1293, %v1263
      %v1295 = vadd.f32 %v1294, %v1268
      %v1296 = vadd.f32 %v1295, %v1271
      %v1297 = vrot.slane %v1296, 4
      %v1298 = vadd.f32 %v1296, %v1297
      %v1299 = vrot.slane %v1298, 2
      %v1300 = vadd.f32 %v1298, %v1299
      %v1301 = vrot.slane %v1300, 1
      %v1302 = vadd.f32 %v1300, %v1301
      %v1303 = vmul.f32 %v1244, %v1244
      %v1304 = vmul.f32 %v1247, %v1247
      %v1305 = vmul.f32 %v1252, %v1252
      %v1306 = vmul.f32 %v1255, %v1255
      %v1307 = vmul.f32 %v1260, %v1260
      %v1308 = vmul.f32 %v1263, %v1263
      %v1309 = vmul.f32 %v1268, %v1268
      %v1310 = vmul.f32 %v1271, %v1271
      %v1311 = vadd.f32 %v1303, %v1304
      %v1312 = vadd.f32 %v1311, %v1305
      %v1313 = vadd.f32 %v1312, %v1306
      %v1314 = vadd.f32 %v1313, %v1307
      %v1315 = vadd.f32 %v1314, %v1308
      %v1316 = vadd.f32 %v1315, %v1309
      %v1317 = vadd.f32 %v1316, %v1310
      %v1318 = vrot.slane %v1317, 4
      %v1319 = vadd.f32 %v1317, %v1318
      %v1320 = vrot.slane %v1319, 2
      %v1321 = vadd.f32 %v1319, %v1320
      %v1322 = vrot.slane %v1321, 1
      %v1323 = vadd.f32 %v1321, %v1322
      %v1324 = vsel %vm1184, %v1302, %v1323
      %v1325 = vsel %vm1186, %v1324, 0.0
      %1326 = vst [vmem:[%s284] sm:$0xff] %v1325
      %p1327 = scmp.lt.s32.totalorder %s18, 1
      %s1328 = scalar_select %p1327, %s18, 1
      %s1329 = smul.addr %s1328, 8
      %s1330 = smul.addr %s1329, 4
      %s1331 = scalar_lea.vmem %s3, %s1330
      %p1332 = scmp.lt.s32.totalorder %s18, 1
      %s1333 = scalar_select %p1332, %s18, 1
      %s1334 = smul.addr %s1333, 8
      %s1335 = scalar_lea.vmem %s4, %s1334
      %p1336 = scmp.lt.s32.totalorder %s18, 1
      %s1337 = scalar_select %p1336, %s18, 1
      %s1338 = smul.addr %s1337, 8
      %s1339 = smul.addr %s1338, 4
      %s1340 = scalar_lea.vmem %s5, %s1339
      %p1341 = scmp.lt.s32.totalorder %s18, 1
      %s1342 = scalar_select %p1341, %s18, 1
      %s1343 = smul.addr %s1342, 8
      %s1344 = scalar_lea.vmem %s6, %s1343
      // Predicated region
      $region33: #{residual_block_forward.3} parent=31 // pred_check
        %p1345 = pneg %p104
      $region34: #{residual_block_forward.3} parent=31 // pred_check_branch
        %1347 = sbr.rel (%p1345) target = $region36
      $region35: #{residual_block_forward.3} parent=31 // pred_region
        _
      $region36: #{residual_block_forward.3} parent=31 // pred_fallthru
        _
      // Predicated region
      $region37: #{residual_block_forward.3} parent=31 // pred_check
        %p1348 = pneg %p130
      $region38: #{residual_block_forward.3} parent=31 // pred_check_branch
        %1350 = sbr.rel (%p1348) target = $region40
      $region39: #{residual_block_forward.3} parent=31 // pred_region
        _
      $region40: #{residual_block_forward.3} parent=31 // pred_fallthru
        _
      // Predicated region
      $region41: #{residual_block_forward.3} parent=31 // pred_check
        %p1351 = pneg %p156
      $region42: #{residual_block_forward.3} parent=31 // pred_check_branch
        %1353 = sbr.rel (%p1351) target = $region44
      $region43: #{residual_block_forward.3} parent=31 // pred_region
        _
      $region44: #{residual_block_forward.3} parent=31 // pred_fallthru
        _
      // Predicated region
      $region45: #{residual_block_forward.3} parent=31 // pred_check
        %p1354 = pneg %p182
      $region46: #{residual_block_forward.3} parent=31 // pred_check_branch
        %1356 = sbr.rel (%p1354) target = $region48
      $region47: #{residual_block_forward.3} parent=31 // pred_region
        _
      $region48: #{residual_block_forward.3} parent=31 // pred_fallthru
        _
    $region32: #{residual_block_forward.3} parent=5 // pred_fallthru
      _
    %p1357 = scmp.le.s32.totalorder 2, %s13
    // Predicated region
    $region49: #{residual_block_forward.3} parent=5 // pred_check
      %p1358 = pneg %p1357
    $region50: #{residual_block_forward.3} parent=5 // pred_check_branch
      %1360 = sbr.rel (%p1358) target = $region52
    $region51: #{residual_block_forward.3} parent=5 // pred_region
      %s1361 = ssub.s32 %s13, 2
      // Predicated region
      $region53: #{residual_block_forward.3} parent=51 // pred_check
        %p1362 = pneg %p110
      $region54: #{residual_block_forward.3} parent=51 // pred_check_branch
        %1364 = sbr.rel (%p1362) target = $region56
      $region55: #{residual_block_forward.3} parent=51 // pred_region
        %p1365 = scmp.lt.s32.totalorder %s19, 1
        %s1366 = scalar_select %p1365, %s19, 1
        %s1367 = smul.addr %s1366, 8
        %s1368 = smul.addr %s1367, 4
        %s1369 = scalar_lea.vmem %s3, %s1368
      $region56: #{residual_block_forward.3} parent=51 // pred_fallthru
        _
      // Predicated region
      $region57: #{residual_block_forward.3} parent=51 // pred_check
        %p1370 = pneg %p136
      $region58: #{residual_block_forward.3} parent=51 // pred_check_branch
        %1372 = sbr.rel (%p1370) target = $region60
      $region59: #{residual_block_forward.3} parent=51 // pred_region
        %p1373 = scmp.lt.s32.totalorder %s19, 1
        %s1374 = scalar_select %p1373, %s19, 1
        %s1375 = smul.addr %s1374, 8
        %s1376 = scalar_lea.vmem %s4, %s1375
      $region60: #{residual_block_forward.3} parent=51 // pred_fallthru
        _
      // Predicated region
      $region61: #{residual_block_forward.3} parent=51 // pred_check
        %p1377 = pneg %p162
      $region62: #{residual_block_forward.3} parent=51 // pred_check_branch
        %1379 = sbr.rel (%p1377) target = $region64
      $region63: #{residual_block_forward.3} parent=51 // pred_region
        %p1380 = scmp.lt.s32.totalorder %s19, 1
        %s1381 = scalar_select %p1380, %s19, 1
        %s1382 = smul.addr %s1381, 8
        %s1383 = smul.addr %s1382, 4
        %s1384 = scalar_lea.vmem %s5, %s1383
      $region64: #{residual_block_forward.3} parent=51 // pred_fallthru
        _
      // Predicated region
      $region65: #{residual_block_forward.3} parent=51 // pred_check
        %p1385 = pneg %p188
      $region66: #{residual_block_forward.3} parent=51 // pred_check_branch
        %1387 = sbr.rel (%p1385) target = $region68
      $region67: #{residual_block_forward.3} parent=51 // pred_region
        %p1388 = scmp.lt.s32.totalorder %s19, 1
        %s1389 = scalar_select %p1388, %s19, 1
        %s1390 = smul.addr %s1389, 8
        %s1391 = scalar_lea.vmem %s6, %s1390
      $region68: #{residual_block_forward.3} parent=51 // pred_fallthru
        _
    $region52: #{residual_block_forward.3} parent=5 // pred_fallthru
      _
  $region6: #{residual_block_forward.3} parent=0 // loop_footer
    %s17 = sadd.s32 1, %s13
  $region7: #{residual_block_forward.3} parent=0 // loop_footer_branch
    %12 = sbr.rel target = $region3
  $region8: #{residual_block_forward.3} parent=0 // loop_exit
    _

// kernel: residual_block_forward.4
$region0: #{residual_block_forward.4}
  #allocation0 [shape = 'u32[]', space=smem, size = 0x4, offset = 0x4, fixed_abs, tag = 'smem constant byte address 0x4 - core index']
  #allocation1 [shape = 'u32[144,128]{1,0:T(1,128)}', space=vmem, size = 0x12000, scoped, tag = 'internal scratch']
  #allocation2 [shape = 'bf16[1,10,10,128]{3,2,1,0:T(8,128)(2,1)}', space=vmem, size = 0xa000, scoped, tag = 'scratch operand']
  %s0 = inlined_call_operand.vmem [shape: bf16[2,8,8,128], index: 0, kind: input, shape index: {}]
  %s1 = inlined_call_operand.vmem [shape: f32[2,128], index: 1, kind: input, shape index: {}]
  %s2 = inlined_call_operand.vmem [shape: bf16[3,3,128,128], index: 2, kind: input, shape index: {}]
  %s3 = inlined_call_operand.vmem [shape: bf16[2,8,8,128], index: 3, kind: output, shape index: {0}]
  %s4 = inlined_call_operand.vmem [shape: f32[16,128], index: 4, kind: output, shape index: {1}]
  %5 = xla_tuple %s3, %s4
  %s6 = sld [smem:[#allocation0]]
  $region53: #{residual_block_forward.4} parent=0
    _
  %s8 = ssub.s32 1, %s6
  %s9 = scalar_select 0, %s8, %s6
  loop: start=0, step=1, limit=4
  $region2: #{residual_block_forward.4} parent=0 // loop_pre_header
    _
  $region3: #{residual_block_forward.4} parent=0 // loop_header
    %s11 = sphi 0, %s15
    %p12 = scmp.ge.s32.totalorder %s11, 4
    %s21 = sphi 0, %s23
    %s24 = sphi 0, %s21
    %s25 = sphi 0, %s24
    %s41 = sphi 0, %s25
    %s45 = sphi 0, %s45
    %s47 = sphi 0, %s45
    %s48 = sphi 0, %s47
    %s62 = sphi 0, %s48
    %s66 = sphi 0, %s66
    %s68 = sphi 0, %s66
    %s69 = sphi 0, %s68
    %s83 = sphi 0, %s69
    %s89 = sphi 0, %s91
    %s92 = sphi 0, %s89
    %s93 = sphi 0, %s92
    %s109 = sphi 0, %s93
    %s115 = sphi 0, %s117
    %s118 = sphi 0, %s115
    %s119 = sphi 0, %s118
    %s135 = sphi 0, %s119
  $region4: #{residual_block_forward.4} parent=0 // loop_header_branch
    %14 = sbr.rel (%p12) target = $region8
  $region5: #{residual_block_forward.4} parent=0 // loop_body
    %s16 = ssub.s32 %s11, 1
    %s17 = ssub.s32 %s11, 2
    %s18 = sadd.s32 %s11, 1
    %s19 = ssub.s32 %s11, %s18
    %p20 = scmp.eq.s32.totalorder %s19, 0
    %s22 = sadd.s32 %s21, 1
    %s23 = scalar_select %p20, %s21, %s22
    %p26 = pneg %p20
    %p27 = scmp.eq.s32.totalorder %s11, 1
    %p28 = por %p26, %p27
    %p29 = scmp.ne.s32.totalorder %s21, %s24
    %p30 = scmp.eq.s32.totalorder %s11, 0
    %p31 = por %p29, %p30
    %p32 = scmp.ne.s32.totalorder %s21, %s24
    %p33 = scmp.eq.s32.totalorder %s16, 1
    %p34 = por %p32, %p33
    %p35 = scmp.ne.s32.totalorder %s24, %s25
    %p36 = scmp.eq.s32.totalorder %s16, 0
    %p37 = por %p35, %p36
    %p38 = scmp.ne.s32.totalorder %s24, %s25
    %p39 = scmp.eq.s32.totalorder %s17, 1
    %p40 = por %p38, %p39
    %p42 = scmp.ne.s32.totalorder %s25, %s41
    %p43 = scmp.eq.s32.totalorder %s17, 0
    %p44 = por %p42, %p43
    %s46 = sadd.s32 %s45, 1
    %p49 = scmp.eq.s32.totalorder %s11, 1
    %p50 = scmp.ne.s32.totalorder %s45, %s47
    %p51 = scmp.eq.s32.totalorder %s11, 0
    %p52 = por %p50, %p51
    %p53 = scmp.ne.s32.totalorder %s45, %s47
    %p54 = scmp.eq.s32.totalorder %s16, 1
    %p55 = por %p53, %p54
    %p56 = scmp.ne.s32.totalorder %s47, %s48
    %p57 = scmp.eq.s32.totalorder %s16, 0
    %p58 = por %p56, %p57
    %p59 = scmp.ne.s32.totalorder %s47, %s48
    %p60 = scmp.eq.s32.totalorder %s17, 1
    %p61 = por %p59, %p60
    %p63 = scmp.ne.s32.totalorder %s48, %s62
    %p64 = scmp.eq.s32.totalorder %s17, 0
    %p65 = por %p63, %p64
    %s67 = sadd.s32 %s66, 1
    %p70 = scmp.eq.s32.totalorder %s11, 1
    %p71 = scmp.ne.s32.totalorder %s66, %s68
    %p72 = scmp.eq.s32.totalorder %s11, 0
    %p73 = por %p71, %p72
    %p74 = scmp.ne.s32.totalorder %s66, %s68
    %p75 = scmp.eq.s32.totalorder %s16, 1
    %p76 = por %p74, %p75
    %p77 = scmp.ne.s32.totalorder %s68, %s69
    %p78 = scmp.eq.s32.totalorder %s16, 0
    %p79 = por %p77, %p78
    %p80 = scmp.ne.s32.totalorder %s68, %s69
    %p81 = scmp.eq.s32.totalorder %s17, 1
    %p82 = por %p80, %p81
    %p84 = scmp.ne.s32.totalorder %s69, %s83
    %p85 = scmp.eq.s32.totalorder %s17, 0
    %p86 = por %p84, %p85
    %s87 = ssub.s32 %s11, %s18
    %p88 = scmp.eq.s32.totalorder %s87, 0
    %s90 = sadd.s32 %s89, 1
    %s91 = scalar_select %p88, %s89, %s90
    %p94 = pneg %p88
    %p95 = scmp.eq.s32.totalorder %s11, 1
    %p96 = por %p94, %p95
    %p97 = scmp.ne.s32.totalorder %s89, %s92
    %p98 = scmp.eq.s32.totalorder %s11, 0
    %p99 = por %p97, %p98
    %p100 = scmp.ne.s32.totalorder %s89, %s92
    %p101 = scmp.eq.s32.totalorder %s16, 1
    %p102 = por %p100, %p101
    %p103 = scmp.ne.s32.totalorder %s92, %s93
    %p104 = scmp.eq.s32.totalorder %s16, 0
    %p105 = por %p103, %p104
    %p106 = scmp.ne.s32.totalorder %s92, %s93
    %p107 = scmp.eq.s32.totalorder %s17, 1
    %p108 = por %p106, %p107
    %p110 = scmp.ne.s32.totalorder %s93, %s109
    %p111 = scmp.eq.s32.totalorder %s17, 0
    %p112 = por %p110, %p111
    %s113 = ssub.s32 %s11, %s18
    %p114 = scmp.eq.s32.totalorder %s113, 0
    %s116 = sadd.s32 %s115, 1
    %s117 = scalar_select %p114, %s115, %s116
    %p120 = pneg %p114
    %p121 = scmp.eq.s32.totalorder %s11, 1
    %p122 = por %p120, %p121
    %p123 = scmp.ne.s32.totalorder %s115, %s118
    %p124 = scmp.eq.s32.totalorder %s11, 0
    %p125 = por %p123, %p124
    %p126 = scmp.ne.s32.totalorder %s115, %s118
    %p127 = scmp.eq.s32.totalorder %s16, 1
    %p128 = por %p126, %p127
    %p129 = scmp.ne.s32.totalorder %s118, %s119
    %p130 = scmp.eq.s32.totalorder %s16, 0
    %p131 = por %p129, %p130
    %p132 = scmp.ne.s32.totalorder %s118, %s119
    %p133 = scmp.eq.s32.totalorder %s17, 1
    %p134 = por %p132, %p133
    %p136 = scmp.ne.s32.totalorder %s119, %s135
    %p137 = scmp.eq.s32.totalorder %s17, 0
    %p138 = por %p136, %p137
    %p139 = scmp.le.s32.totalorder 1, %s11
    %p140 = scmp.lt.s32.totalorder %s11, 3
    %p141 = pnand %p139, %p140
    %p142 = pneg %p141
    // Predicated region
    $region9: #{residual_block_forward.4} parent=5 // pred_check
      _
    $region10: #{residual_block_forward.4} parent=5 // pred_check_branch
      %144 = sbr.rel (%p141) target = $region12
    $region11: #{residual_block_forward.4} parent=5 // pred_region
      %s145 = ssub.s32 %s11, 1
      // Predicated region
      $region13: #{residual_block_forward.4} parent=11 // pred_check
        %p146 = pneg %p58
      $region14: #{residual_block_forward.4} parent=11 // pred_check_branch
        %148 = sbr.rel (%p146) target = $region16
      $region15: #{residual_block_forward.4} parent=11 // pred_region
        _
      $region16: #{residual_block_forward.4} parent=11 // pred_fallthru
        _
      // Predicated region
      $region17: #{residual_block_forward.4} parent=11 // pred_check
        %p149 = pneg %p79
      $region18: #{residual_block_forward.4} parent=11 // pred_check_branch
        %151 = sbr.rel (%p149) target = $region20
      $region19: #{residual_block_forward.4} parent=11 // pred_region
        _
      $region20: #{residual_block_forward.4} parent=11 // pred_fallthru
        _
    $region12: #{residual_block_forward.4} parent=5 // pred_fallthru
      _
    %p152 = scmp.lt.s32.totalorder %s11, 2
    // Predicated region
    $region21: #{residual_block_forward.4} parent=5 // pred_check
      %p153 = pneg %p152
    $region22: #{residual_block_forward.4} parent=5 // pred_check_branch
      %155 = sbr.rel (%p153) target = $region24
    $region23: #{residual_block_forward.4} parent=5 // pred_region
      // Predicated region
      $region25: #{residual_block_forward.4} parent=23 // pred_check
        %p156 = pneg %p31
      $region26: #{residual_block_forward.4} parent=23 // pred_check_branch
        %158 = sbr.rel (%p156) target = $region28
      $region27: #{residual_block_forward.4} parent=23 // pred_region
        %p159 = scmp.lt.s32.totalorder %s11, 1
        %s160 = scalar_select %p159, %s11, 1
        %s161 = smul.addr %s160, 8
        %s162 = smul.addr %s161, 4
        %s163 = scalar_lea.vmem %s0, %s162
      $region28: #{residual_block_forward.4} parent=23 // pred_fallthru
        _
    $region24: #{residual_block_forward.4} parent=5 // pred_fallthru
      _
    %p164 = scmp.le.s32.totalorder 1, %s11
    %p165 = scmp.lt.s32.totalorder %s11, 3
    %p166 = pnand %p164, %p165
    %p167 = pneg %p166
    // Predicated region
    $region29: #{residual_block_forward.4} parent=5 // pred_check
      _
    $region30: #{residual_block_forward.4} parent=5 // pred_check_branch
      %169 = sbr.rel (%p166) target = $region32
    $region31: #{residual_block_forward.4} parent=5 // pred_region
      %s170 = ssub.s32 %s11, 1
      %p171 = scmp.lt.s32.totalorder %s16, 1
      %s172 = scalar_select %p171, %s16, 1
      %s173 = smul.addr %s172, 8
      %s174 = smul.addr %s173, 4
      %s175 = scalar_lea.vmem %s0, %s174
      %p176 = pneg %p37
      %p177 = pneg %p34
      %p178 = pneg %p58
      %p179 = pneg %p55
      %p180 = pneg %p79
      %p181 = pneg %p76
      %p182 = pneg %p105
      %p183 = pneg %p102
      %p184 = scmp.lt.s32.totalorder %s16, 1
      %s185 = scalar_select %p184, %s16, 1
      %s186 = smul.addr %s185, 8
      %s187 = smul.addr %s186, 4
      %s188 = scalar_lea.vmem %s3, %s187
      %p189 = pneg %p131
      %p190 = pneg %p128
      %p191 = scmp.lt.s32.totalorder %s16, 1
      %s192 = scalar_select %p191, %s16, 1
      %s193 = smul.addr %s192, 8
      %s194 = scalar_lea.vmem %s4, %s193
      %p195 = scmp.lt.s32.totalorder %s16, 1
      %s196 = scalar_select %p195, %s16, 1
      %s197 = smul.addr %s196, 8
      %s198 = smul.addr %s197, 4
      %s199 = scalar_lea.vmem %s0, %s198
      %p200 = scmp.lt.s32.totalorder %s16, 1
      %s201 = scalar_select %p200, %s16, 1
      %s202 = smul.addr %s201, 8
      %s203 = smul.addr %s202, 4
      %s204 = scalar_lea.vmem %s3, %s203
      %p205 = scmp.lt.s32.totalorder %s16, 1
      %s206 = scalar_select %p205, %s16, 1
      %s207 = smul.addr %s206, 8
      %s208 = scalar_lea.vmem %s4, %s207
      %v210 = vld [vmem:[%s199] sm:$0xf]
      %v211 = vld [vmem:[%s199 + $0x4] sm:$0xf]
      %v212 = vld [vmem:[%s199 + $0x8] sm:$0xf]
      %v213 = vld [vmem:[%s199 + $0xc] sm:$0xf]
      %v214 = vld [vmem:[%s199 + $0x10] sm:$0xf]
      %v215 = vld [vmem:[%s199 + $0x14] sm:$0xf]
      %v216 = vld [vmem:[%s199 + $0x18] sm:$0xf]
      %v217 = vld [vmem:[%s199 + $0x1c] sm:$0xf]
      %v218 = vunpack.c.l.bf16 %v210
      %v219 = vunpack.c.l.bf16 %v211
      %v220 = vunpack.c.l.bf16 %v212
      %v221 = vunpack.c.l.bf16 %v213
      %v222 = vunpack.c.l.bf16 %v214
      %v223 = vunpack.c.l.bf16 %v215
      %v224 = vunpack.c.l.bf16 %v216
      %v225 = vunpack.c.l.bf16 %v217
      %v226 = vld [vmem:[%s1] sm:$0x1]
      %v227 = vlaneseq
      %v228 = vshrl.u32 %v227, 7
      %v229 = vsub.s32 0, %v228
      %v230 = vrot.slane %v226, %v229
      %v231 = vmul.f32 %v218, %v230
      %v232 = vmul.f32 %v219, %v230
      %v233 = vmul.f32 %v220, %v230
      %v234 = vmul.f32 %v221, %v230
      %v235 = vmul.f32 %v222, %v230
      %v236 = vmul.f32 %v223, %v230
      %v237 = vmul.f32 %v224, %v230
      %v238 = vmul.f32 %v225, %v230
      %v239 = vld [vmem:[%s1 + $0x1] sm:$0x1]
      %v240 = vlaneseq
      %v241 = vshrl.u32 %v240, 7
      %v242 = vsub.s32 0, %v241
      %v243 = vrot.slane %v239, %v242
      %v244 = vadd.f32 %v231, %v243
      %v245 = vadd.f32 %v232, %v243
      %v246 = vadd.f32 %v233, %v243
      %v247 = vadd.f32 %v234, %v243
      %v248 = vadd.f32 %v235, %v243
      %v249 = vadd.f32 %v236, %v243
      %v250 = vadd.f32 %v237, %v243
      %v251 = vadd.f32 %v238, %v243
      %v252 = vmax.f32 %v244, 0.0
      %v253 = vmax.f32 %v245, 0.0
      %v254 = vmax.f32 %v246, 0.0
      %v255 = vmax.f32 %v247, 0.0
      %v256 = vmax.f32 %v248, 0.0
      %v257 = vmax.f32 %v249, 0.0
      %v258 = vmax.f32 %v250, 0.0
      %v259 = vmax.f32 %v251, 0.0
      %260 = vst [vmem:[#allocation2] sm:$0xf] 0
      %261 = vst [vmem:[#allocation2 + $0x4] sm:$0x1] 0
      %s262 = scalar_lea.vmem [#allocation2], 72
      %263 = vst [vmem:[%s262] sm:$0xf] 0
      %264 = vst [vmem:[%s262 + $0x4] sm:$0x1] 0
      %vm265 = vcmask 1040384
      %vm266 = vsmask.f32 256
      %vm267 = vmand %vm265, %vm266
      %v268 = vld [vmem:[#allocation2] sm:$0x1]
      %v269 = vsel %vm267, 0, %v268
      %270 = vst [vmem:[#allocation2] sm:$0x1] %v269
      %v271 = vld [vmem:[#allocation2 + $0x8] sm:$0x1]
      %v272 = vsel %vm267, 0, %v271
      %273 = vst [vmem:[#allocation2 + $0x8] sm:$0x1] %v272
      %v274 = vld [vmem:[#allocation2 + $0x10] sm:$0x1]
      %v275 = vsel %vm267, 0, %v274
      %276 = vst [vmem:[#allocation2 + $0x10] sm:$0x1] %v275
      %v277 = vld [vmem:[#allocation2 + $0x18] sm:$0x1]
      %v278 = vsel %vm267, 0, %v277
      %279 = vst [vmem:[#allocation2 + $0x18] sm:$0x1] %v278
      %v280 = vld [vmem:[#allocation2 + $0x20] sm:$0x1]
      %v281 = vsel %vm267, 0, %v280
      %282 = vst [vmem:[#allocation2 + $0x20] sm:$0x1] %v281
      %v283 = vld [vmem:[#allocation2 + $0x28] sm:$0x1]
      %v284 = vsel %vm267, 0, %v283
      %285 = vst [vmem:[#allocation2 + $0x28] sm:$0x1] %v284
      %v286 = vld [vmem:[#allocation2 + $0x30] sm:$0x1]
      %v287 = vsel %vm267, 0, %v286
      %288 = vst [vmem:[#allocation2 + $0x30] sm:$0x1] %v287
      %v289 = vld [vmem:[#allocation2 + $0x38] sm:$0x1]
      %v290 = vsel %vm267, 0, %v289
      %291 = vst [vmem:[#allocation2 + $0x38] sm:$0x1] %v290
      %v292 = vld [vmem:[#allocation2 + $0x40] sm:$0x1]
      %v293 = vsel %vm267, 0, %v292
      %294 = vst [vmem:[#allocation2 + $0x40] sm:$0x1] %v293
      %v295 = vld [vmem:[#allocation2 + $0x48] sm:$0x1]
      %v296 = vsel %vm267, 0, %v295
      %297 = vst [vmem:[#allocation2 + $0x48] sm:$0x1] %v296
      %vm298 = vsmask.f32 7938
      %vm299 = vmand %vm265, %vm298
      %v300 = vld [vmem:[#allocation2 + $0x4] sm:$0x1]
      %v301 = vsel %vm299, 0, %v300
      %302 = vst [vmem:[#allocation2 + $0x4] sm:$0x1] %v301
      %v303 = vld [vmem:[#allocation2 + $0xc] sm:$0x1]
      %v304 = vsel %vm299, 0, %v303
      %305 = vst [vmem:[#allocation2 + $0xc] sm:$0x1] %v304
      %v306 = vld [vmem:[#allocation2 + $0x14] sm:$0x1]
      %v307 = vsel %vm299, 0, %v306
      %308 = vst [vmem:[#allocation2 + $0x14] sm:$0x1] %v307
      %v309 = vld [vmem:[#allocation2 + $0x1c] sm:$0x1]
      %v310 = vsel %vm299, 0, %v309
      %311 = vst [vmem:[#allocation2 + $0x1c] sm:$0x1] %v310
      %v312 = vld [vmem:[#allocation2 + $0x24] sm:$0x1]
      %v313 = vsel %vm299, 0, %v312
      %314 = vst [vmem:[#allocation2 + $0x24] sm:$0x1] %v313
      %v315 = vld [vmem:[#allocation2 + $0x2c] sm:$0x1]
      %v316 = vsel %vm299, 0, %v315
      %317 = vst [vmem:[#allocation2 + $0x2c] sm:$0x1] %v316
      %v318 = vld [vmem:[#allocation2 + $0x34] sm:$0x1]
      %v319 = vsel %vm299, 0, %v318
      %320 = vst [vmem:[#allocation2 + $0x34] sm:$0x1] %v319
      %v321 = vld [vmem:[#allocation2 + $0x3c] sm:$0x1]
      %v322 = vsel %vm299, 0, %v321
      %323 = vst [vmem:[#allocation2 + $0x3c] sm:$0x1] %v322
      %v324 = vld [vmem:[#allocation2 + $0x44] sm:$0x1]
      %v325 = vsel %vm299, 0, %v324
      %326 = vst [vmem:[#allocation2 + $0x44] sm:$0x1] %v325
      %v327 = vld [vmem:[#allocation2 + $0x4c] sm:$0x1]
      %v328 = vsel %vm299, 0, %v327
      %329 = vst [vmem:[#allocation2 + $0x4c] sm:$0x1] %v328
      %v330 = vpack.c.bf16 %v252, %v252
      %v331 = vpack.c.bf16 %v253, %v253
      %v332 = vpack.c.bf16 %v254, %v254
      %v333 = vpack.c.bf16 %v255, %v255
      %v334 = vpack.c.bf16 %v256, %v256
      %v335 = vpack.c.bf16 %v257, %v257
      %v336 = vpack.c.bf16 %v258, %v258
      %v337 = vpack.c.bf16 %v259, %v259
      %v346 = vunpack.c.l.b16 %v330
      %v347 = vunpack.c.l.b16 %v331
      %v348 = vunpack.c.l.b16 %v332
      %v349 = vunpack.c.l.b16 %v333
      %v350 = vunpack.c.l.b16 %v334
      %v351 = vunpack.c.l.b16 %v335
      %v352 = vunpack.c.l.b16 %v336
      %v353 = vunpack.c.l.b16 %v337
      %v354 = vpack.c.b16 %v346, %v346
      %v355 = vpack.c.b16 %v347, %v347
      %v356 = vpack.c.b16 %v348, %v348
      %v357 = vpack.c.b16 %v349, %v349
      %v358 = vpack.c.b16 %v350, %v350
      %v359 = vpack.c.b16 %v351, %v351
      %v360 = vpack.c.b16 %v352, %v352
      %v361 = vpack.c.b16 %v353, %v353
      %v363 = vshrl.u32 %v354, 16
      %v365 = vrot.slane %v363, 7
      %v366 = vshll.u32 %v354, 16
      %v368 = vor.u32 %v365, %v366
      %v369 = vrot.slane %v365, 4
      %v371 = vshrl.u32 %v355, 16
      %v373 = vrot.slane %v371, 7
      %v374 = vshll.u32 %v355, 16
      %v376 = vor.u32 %v373, %v374
      %v377 = vrot.slane %v373, 4
      %v379 = vshrl.u32 %v356, 16
      %v381 = vrot.slane %v379, 7
      %v382 = vshll.u32 %v356, 16
      %v384 = vor.u32 %v381, %v382
      %v385 = vrot.slane %v381, 4
      %v387 = vshrl.u32 %v357, 16
      %v389 = vrot.slane %v387, 7
      %v390 = vshll.u32 %v357, 16
      %v392 = vor.u32 %v389, %v390
      %v393 = vrot.slane %v389, 4
      %v395 = vshrl.u32 %v358, 16
      %v397 = vrot.slane %v395, 7
      %v398 = vshll.u32 %v358, 16
      %v400 = vor.u32 %v397, %v398
      %v401 = vrot.slane %v397, 4
      %v403 = vshrl.u32 %v359, 16
      %v405 = vrot.slane %v403, 7
      %v406 = vshll.u32 %v359, 16
      %v408 = vor.u32 %v405, %v406
      %v409 = vrot.slane %v405, 4
      %v411 = vshrl.u32 %v360, 16
      %v413 = vrot.slane %v411, 7
      %v414 = vshll.u32 %v360, 16
      %v416 = vor.u32 %v413, %v414
      %v417 = vrot.slane %v413, 4
      %v419 = vshrl.u32 %v361, 16
      %v421 = vrot.slane %v419, 7
      %v422 = vshll.u32 %v361, 16
      %v424 = vor.u32 %v421, %v422
      %v425 = vrot.slane %v421, 4
      %s442 = scalar_lea.vmem [#allocation2], 8
      %vm443 = vcmask 1043456
      %vm444 = vmand %vm443, %vm298
      %v445 = vld [vmem:[%s442] sm:$0xf]
      %v446 = vsel %vm444, %v368, %v445
      %447 = vst [vmem:[%s442] sm:$0xf] %v446
      %v448 = vld [vmem:[%s442 + $0x4] sm:$0x1]
      %v449 = vsel %vm267, %v369, %v448
      %450 = vst [vmem:[%s442 + $0x4] sm:$0x1] %v449
      %v451 = vld [vmem:[%s442 + $0x8] sm:$0xf]
      %v452 = vsel %vm444, %v376, %v451
      %453 = vst [vmem:[%s442 + $0x8] sm:$0xf] %v452
      %v454 = vld [vmem:[%s442 + $0xc] sm:$0x1]
      %v455 = vsel %vm267, %v377, %v454
      %456 = vst [vmem:[%s442 + $0xc] sm:$0x1] %v455
      %v457 = vld [vmem:[%s442 + $0x10] sm:$0xf]
      %v458 = vsel %vm444, %v384, %v457
      %459 = vst [vmem:[%s442 + $0x10] sm:$0xf] %v458
      %v460 = vld [vmem:[%s442 + $0x14] sm:$0x1]
      %v461 = vsel %vm267, %v385, %v460
      %462 = vst [vmem:[%s442 + $0x14] sm:$0x1] %v461
      %v463 = vld [vmem:[%s442 + $0x18] sm:$0xf]
      %v464 = vsel %vm444, %v392, %v463
      %465 = vst [vmem:[%s442 + $0x18] sm:$0xf] %v464
      %v466 = vld [vmem:[%s442 + $0x1c] sm:$0x1]
      %v467 = vsel %vm267, %v393, %v466
      %468 = vst [vmem:[%s442 + $0x1c] sm:$0x1] %v467
      %v469 = vld [vmem:[%s442 + $0x20] sm:$0xf]
      %v470 = vsel %vm444, %v400, %v469
      %471 = vst [vmem:[%s442 + $0x20] sm:$0xf] %v470
      %v472 = vld [vmem:[%s442 + $0x24] sm:$0x1]
      %v473 = vsel %vm267, %v401, %v472
      %474 = vst [vmem:[%s442 + $0x24] sm:$0x1] %v473
      %v475 = vld [vmem:[%s442 + $0x28] sm:$0xf]
      %v476 = vsel %vm444, %v408, %v475
      %477 = vst [vmem:[%s442 + $0x28] sm:$0xf] %v476
      %v478 = vld [vmem:[%s442 + $0x2c] sm:$0x1]
      %v479 = vsel %vm267, %v409, %v478
      %480 = vst [vmem:[%s442 + $0x2c] sm:$0x1] %v479
      %v481 = vld [vmem:[%s442 + $0x30] sm:$0xf]
      %v482 = vsel %vm444, %v416, %v481
      %483 = vst [vmem:[%s442 + $0x30] sm:$0xf] %v482
      %v484 = vld [vmem:[%s442 + $0x34] sm:$0x1]
      %v485 = vsel %vm267, %v417, %v484
      %486 = vst [vmem:[%s442 + $0x34] sm:$0x1] %v485
      %v487 = vld [vmem:[%s442 + $0x38] sm:$0xf]
      %v488 = vsel %vm444, %v424, %v487
      %489 = vst [vmem:[%s442 + $0x38] sm:$0xf] %v488
      %v490 = vld [vmem:[%s442 + $0x3c] sm:$0x1]
      %v491 = vsel %vm267, %v425, %v490
      %492 = vst [vmem:[%s442 + $0x3c] sm:$0x1] %v491
      %v493 = vld [vmem:[#allocation2] sm:$0xf]
      %v494 = vld [vmem:[#allocation2 + $0x8] sm:$0xf]
      %v495 = vld [vmem:[#allocation2 + $0x10] sm:$0xf]
      %v496 = vld [vmem:[#allocation2 + $0x18] sm:$0xf]
      %v497 = vld [vmem:[#allocation2 + $0x20] sm:$0xf]
      %v498 = vld [vmem:[#allocation2 + $0x28] sm:$0xf]
      %v499 = vld [vmem:[#allocation2 + $0x30] sm:$0xf]
      %v500 = vld [vmem:[#allocation2 + $0x38] sm:$0xf]
      %v501 = vld [vmem:[#allocation2 + $0x4] sm:$0x1]
      %v502 = vld [vmem:[#allocation2 + $0xc] sm:$0x1]
      %v503 = vld [vmem:[#allocation2 + $0x14] sm:$0x1]
      %v504 = vld [vmem:[#allocation2 + $0x1c] sm:$0x1]
      %v505 = vld [vmem:[#allocation2 + $0x24] sm:$0x1]
      %v506 = vld [vmem:[#allocation2 + $0x2c] sm:$0x1]
      %v507 = vld [vmem:[#allocation2 + $0x34] sm:$0x1]
      %v508 = vld [vmem:[#allocation2 + $0x3c] sm:$0x1]
      %vm509 = vsmask.f32 3328
      %vm510 = vsmask.f32 7440
      %vm511 = vmor %vm509, %vm510
      %v513 = vshrl.u32 %v493, 16
      %v515 = vrot.slane %v513, 4
      %v516 = vshll.u32 %v493, 16
      %v518 = vrot.slane %v516, 5
      %v519 = vor.u32 %v515, %v518
      %v520 = vrot.slane %v519, 4
      %v522 = vshll.u32 %v501, 16
      %v524 = vrot.slane %v522, 5
      %v525 = vsel %vm511, %v520, %v524
      %v527 = vshrl.u32 %v494, 16
      %v529 = vrot.slane %v527, 4
      %v530 = vshll.u32 %v494, 16
      %v532 = vrot.slane %v530, 5
      %v533 = vor.u32 %v529, %v532
      %v534 = vrot.slane %v533, 4
      %v536 = vshll.u32 %v502, 16
      %v538 = vrot.slane %v536, 5
      %v539 = vsel %vm511, %v534, %v538
      %v541 = vshrl.u32 %v495, 16
      %v543 = vrot.slane %v541, 4
      %v544 = vshll.u32 %v495, 16
      %v546 = vrot.slane %v544, 5
      %v547 = vor.u32 %v543, %v546
      %v548 = vrot.slane %v547, 4
      %v550 = vshll.u32 %v503, 16
      %v552 = vrot.slane %v550, 5
      %v553 = vsel %vm511, %v548, %v552
      %v555 = vshrl.u32 %v496, 16
      %v557 = vrot.slane %v555, 4
      %v558 = vshll.u32 %v496, 16
      %v560 = vrot.slane %v558, 5
      %v561 = vor.u32 %v557, %v560
      %v562 = vrot.slane %v561, 4
      %v564 = vshll.u32 %v504, 16
      %v566 = vrot.slane %v564, 5
      %v567 = vsel %vm511, %v562, %v566
      %v569 = vshrl.u32 %v497, 16
      %v571 = vrot.slane %v569, 4
      %v572 = vshll.u32 %v497, 16
      %v574 = vrot.slane %v572, 5
      %v575 = vor.u32 %v571, %v574
      %v576 = vrot.slane %v575, 4
      %v578 = vshll.u32 %v505, 16
      %v580 = vrot.slane %v578, 5
      %v581 = vsel %vm511, %v576, %v580
      %v583 = vshrl.u32 %v498, 16
      %v585 = vrot.slane %v583, 4
      %v586 = vshll.u32 %v498, 16
      %v588 = vrot.slane %v586, 5
      %v589 = vor.u32 %v585, %v588
      %v590 = vrot.slane %v589, 4
      %v592 = vshll.u32 %v506, 16
      %v594 = vrot.slane %v592, 5
      %v595 = vsel %vm511, %v590, %v594
      %v597 = vshrl.u32 %v499, 16
      %v599 = vrot.slane %v597, 4
      %v600 = vshll.u32 %v499, 16
      %v602 = vrot.slane %v600, 5
      %v603 = vor.u32 %v599, %v602
      %v604 = vrot.slane %v603, 4
      %v606 = vshll.u32 %v507, 16
      %v608 = vrot.slane %v606, 5
      %v609 = vsel %vm511, %v604, %v608
      %v611 = vshrl.u32 %v500, 16
      %v613 = vrot.slane %v611, 4
      %v614 = vshll.u32 %v500, 16
      %v616 = vrot.slane %v614, 5
      %v617 = vor.u32 %v613, %v616
      %v618 = vrot.slane %v617, 4
      %v620 = vshll.u32 %v508, 16
      %v622 = vrot.slane %v620, 5
      %v623 = vsel %vm511, %v618, %v622
      %v624 = vld [vmem:[#allocation2] sm:$0xe]
      %v625 = vld [vmem:[#allocation2 + $0x8] sm:$0xe]
      %v626 = vld [vmem:[#allocation2 + $0x10] sm:$0xe]
      %v627 = vld [vmem:[#allocation2 + $0x18] sm:$0xe]
      %v628 = vld [vmem:[#allocation2 + $0x20] sm:$0xe]
      %v629 = vld [vmem:[#allocation2 + $0x28] sm:$0xe]
      %v630 = vld [vmem:[#allocation2 + $0x30] sm:$0xe]
      %v631 = vld [vmem:[#allocation2 + $0x38] sm:$0xe]
      %vm648 = vcmask 1042432
      %vm649 = vcmask 1046532
      %vm650 = vmor %vm648, %vm649
      %v651 = vrot.slane %v624, 5
      %v652 = vrot.slane %v651, 4
      %v653 = vrot.slane %v501, 5
      %v654 = vsel %vm650, %v652, %v653
      %v655 = vrot.slane %v625, 5
      %v656 = vrot.slane %v655, 4
      %v657 = vrot.slane %v502, 5
      %v658 = vsel %vm650, %v656, %v657
      %v659 = vrot.slane %v626, 5
      %v660 = vrot.slane %v659, 4
      %v661 = vrot.slane %v503, 5
      %v662 = vsel %vm650, %v660, %v661
      %v663 = vrot.slane %v627, 5
      %v664 = vrot.slane %v663, 4
      %v665 = vrot.slane %v504, 5
      %v666 = vsel %vm650, %v664, %v665
      %v667 = vrot.slane %v628, 5
      %v668 = vrot.slane %v667, 4
      %v669 = vrot.slane %v505, 5
      %v670 = vsel %vm650, %v668, %v669
      %v671 = vrot.slane %v629, 5
      %v672 = vrot.slane %v671, 4
      %v673 = vrot.slane %v506, 5
      %v674 = vsel %vm650, %v672, %v673
      %v675 = vrot.slane %v630, 5
      %v676 = vrot.slane %v675, 4
      %v677 = vrot.slane %v507, 5
      %v678 = vsel %vm650, %v676, %v677
      %v679 = vrot.slane %v631, 5
      %v680 = vrot.slane %v679, 4
      %v681 = vrot.slane %v508, 5
      %v682 = vsel %vm650, %v680, %v681
      %v683 = vld [vmem:[%s442] sm:$0xf]
      %v684 = vld [vmem:[%s442 + $0x8] sm:$0xf]
      %v685 = vld [vmem:[%s442 + $0x10] sm:$0xf]
      %v686 = vld [vmem:[%s442 + $0x18] sm:$0xf]
      %v687 = vld [vmem:[%s442 + $0x20] sm:$0xf]
      %v688 = vld [vmem:[%s442 + $0x28] sm:$0xf]
      %v689 = vld [vmem:[%s442 + $0x30] sm:$0xf]
      %v690 = vld [vmem:[%s442 + $0x38] sm:$0xf]
      %v691 = vld [vmem:[%s442 + $0x4] sm:$0x1]
      %v692 = vld [vmem:[%s442 + $0xc] sm:$0x1]
      %v693 = vld [vmem:[%s442 + $0x14] sm:$0x1]
      %v694 = vld [vmem:[%s442 + $0x1c] sm:$0x1]
      %v695 = vld [vmem:[%s442 + $0x24] sm:$0x1]
      %v696 = vld [vmem:[%s442 + $0x2c] sm:$0x1]
      %v697 = vld [vmem:[%s442 + $0x34] sm:$0x1]
      %v698 = vld [vmem:[%s442 + $0x3c] sm:$0x1]
      %v700 = vshrl.u32 %v683, 16
      %v702 = vrot.slane %v700, 4
      %v703 = vshll.u32 %v683, 16
      %v705 = vrot.slane %v703, 5
      %v706 = vor.u32 %v702, %v705
      %v707 = vrot.slane %v706, 4
      %v709 = vshll.u32 %v691, 16
      %v711 = vrot.slane %v709, 5
      %v712 = vsel %vm511, %v707, %v711
      %v714 = vshrl.u32 %v684, 16
      %v716 = vrot.slane %v714, 4
      %v717 = vshll.u32 %v684, 16
      %v719 = vrot.slane %v717, 5
      %v720 = vor.u32 %v716, %v719
      %v721 = vrot.slane %v720, 4
      %v723 = vshll.u32 %v692, 16
      %v725 = vrot.slane %v723, 5
      %v726 = vsel %vm511, %v721, %v725
      %v728 = vshrl.u32 %v685, 16
      %v730 = vrot.slane %v728, 4
      %v731 = vshll.u32 %v685, 16
      %v733 = vrot.slane %v731, 5
      %v734 = vor.u32 %v730, %v733
      %v735 = vrot.slane %v734, 4
      %v737 = vshll.u32 %v693, 16
      %v739 = vrot.slane %v737, 5
      %v740 = vsel %vm511, %v735, %v739
      %v742 = vshrl.u32 %v686, 16
      %v744 = vrot.slane %v742, 4
      %v745 = vshll.u32 %v686, 16
      %v747 = vrot.slane %v745, 5
      %v748 = vor.u32 %v744, %v747
      %v749 = vrot.slane %v748, 4
      %v751 = vshll.u32 %v694, 16
      %v753 = vrot.slane %v751, 5
      %v754 = vsel %vm511, %v749, %v753
      %v756 = vshrl.u32 %v687, 16
      %v758 = vrot.slane %v756, 4
      %v759 = vshll.u32 %v687, 16
      %v761 = vrot.slane %v759, 5
      %v762 = vor.u32 %v758, %v761
      %v763 = vrot.slane %v762, 4
      %v765 = vshll.u32 %v695, 16
      %v767 = vrot.slane %v765, 5
      %v768 = vsel %vm511, %v763, %v767
      %v770 = vshrl.u32 %v688, 16
      %v772 = vrot.slane %v770, 4
      %v773 = vshll.u32 %v688, 16
      %v775 = vrot.slane %v773, 5
      %v776 = vor.u32 %v772, %v775
      %v777 = vrot.slane %v776, 4
      %v779 = vshll.u32 %v696, 16
      %v781 = vrot.slane %v779, 5
      %v782 = vsel %vm511, %v777, %v781
      %v784 = vshrl.u32 %v689, 16
      %v786 = vrot.slane %v784, 4
      %v787 = vshll.u32 %v689, 16
      %v789 = vrot.slane %v787, 5
      %v790 = vor.u32 %v786, %v789
      %v791 = vrot.slane %v790, 4
      %v793 = vshll.u32 %v697, 16
      %v795 = vrot.slane %v793, 5
      %v796 = vsel %vm511, %v791, %v795
      %v798 = vshrl.u32 %v690, 16
      %v800 = vrot.slane %v798, 4
      %v801 = vshll.u32 %v690, 16
      %v803 = vrot.slane %v801, 5
      %v804 = vor.u32 %v800, %v803
      %v805 = vrot.slane %v804, 4
      %v807 = vshll.u32 %v698, 16
      %v809 = vrot.slane %v807, 5
      %v810 = vsel %vm511, %v805, %v809
      %v811 = vld [vmem:[%s442] sm:$0xe]
      %v812 = vld [vmem:[%s442 + $0x8] sm:$0xe]
      %v813 = vld [vmem:[%s442 + $0x10] sm:$0xe]
      %v814 = vld [vmem:[%s442 + $0x18] sm:$0xe]
      %v815 = vld [vmem:[%s442 + $0x20] sm:$0xe]
      %v816 = vld [vmem:[%s442 + $0x28] sm:$0xe]
      %v817 = vld [vmem:[%s442 + $0x30] sm:$0xe]
      %v818 = vld [vmem:[%s442 + $0x38] sm:$0xe]
      %v835 = vrot.slane %v811, 5
      %v836 = vrot.slane %v835, 4
      %v837 = vrot.slane %v691, 5
      %v838 = vsel %vm650, %v836, %v837
      %v839 = vrot.slane %v812, 5
      %v840 = vrot.slane %v839, 4
      %v841 = vrot.slane %v692, 5
      %v842 = vsel %vm650, %v840, %v841
      %v843 = vrot.slane %v813, 5
      %v844 = vrot.slane %v843, 4
      %v845 = vrot.slane %v693, 5
      %v846 = vsel %vm650, %v844, %v845
      %v847 = vrot.slane %v814, 5
      %v848 = vrot.slane %v847, 4
      %v849 = vrot.slane %v694, 5
      %v850 = vsel %vm650, %v848, %v849
      %v851 = vrot.slane %v815, 5
      %v852 = vrot.slane %v851, 4
      %v853 = vrot.slane %v695, 5
      %v854 = vsel %vm650, %v852, %v853
      %v855 = vrot.slane %v816, 5
      %v856 = vrot.slane %v855, 4
      %v857 = vrot.slane %v696, 5
      %v858 = vsel %vm650, %v856, %v857
      %v859 = vrot.slane %v817, 5
      %v860 = vrot.slane %v859, 4
      %v861 = vrot.slane %v697, 5
      %v862 = vsel %vm650, %v860, %v861
      %v863 = vrot.slane %v818, 5
      %v864 = vrot.slane %v863, 4
      %v865 = vrot.slane %v698, 5
      %v866 = vsel %vm650, %v864, %v865
      %s867 = scalar_lea.vmem [#allocation2], 16
      %v868 = vld [vmem:[%s867] sm:$0xf]
      %v869 = vld [vmem:[%s867 + $0x8] sm:$0xf]
      %v870 = vld [vmem:[%s867 + $0x10] sm:$0xf]
      %v871 = vld [vmem:[%s867 + $0x18] sm:$0xf]
      %v872 = vld [vmem:[%s867 + $0x20] sm:$0xf]
      %v873 = vld [vmem:[%s867 + $0x28] sm:$0xf]
      %v874 = vld [vmem:[%s867 + $0x30] sm:$0xf]
      %v875 = vld [vmem:[%s867 + $0x38] sm:$0xf]
      %v876 = vld [vmem:[%s867 + $0x4] sm:$0x1]
      %v877 = vld [vmem:[%s867 + $0xc] sm:$0x1]
      %v878 = vld [vmem:[%s867 + $0x14] sm:$0x1]
      %v879 = vld [vmem:[%s867 + $0x1c] sm:$0x1]
      %v880 = vld [vmem:[%s867 + $0x24] sm:$0x1]
      %v881 = vld [vmem:[%s867 + $0x2c] sm:$0x1]
      %v882 = vld [vmem:[%s867 + $0x34] sm:$0x1]
      %v883 = vld [vmem:[%s867 + $0x3c] sm:$0x1]
      %v885 = vshrl.u32 %v868, 16
      %v887 = vrot.slane %v885, 4
      %v888 = vshll.u32 %v868, 16
      %v890 = vrot.slane %v888, 5
      %v891 = vor.u32 %v887, %v890
      %v892 = vrot.slane %v891, 4
      %v894 = vshll.u32 %v876, 16
      %v896 = vrot.slane %v894, 5
      %v897 = vsel %vm511, %v892, %v896
      %v899 = vshrl.u32 %v869, 16
      %v901 = vrot.slane %v899, 4
      %v902 = vshll.u32 %v869, 16
      %v904 = vrot.slane %v902, 5
      %v905 = vor.u32 %v901, %v904
      %v906 = vrot.slane %v905, 4
      %v908 = vshll.u32 %v877, 16
      %v910 = vrot.slane %v908, 5
      %v911 = vsel %vm511, %v906, %v910
      %v913 = vshrl.u32 %v870, 16
      %v915 = vrot.slane %v913, 4
      %v916 = vshll.u32 %v870, 16
      %v918 = vrot.slane %v916, 5
      %v919 = vor.u32 %v915, %v918
      %v920 = vrot.slane %v919, 4
      %v922 = vshll.u32 %v878, 16
      %v924 = vrot.slane %v922, 5
      %v925 = vsel %vm511, %v920, %v924
      %v927 = vshrl.u32 %v871, 16
      %v929 = vrot.slane %v927, 4
      %v930 = vshll.u32 %v871, 16
      %v932 = vrot.slane %v930, 5
      %v933 = vor.u32 %v929, %v932
      %v934 = vrot.slane %v933, 4
      %v936 = vshll.u32 %v879, 16
      %v938 = vrot.slane %v936, 5
      %v939 = vsel %vm511, %v934, %v938
      %v941 = vshrl.u32 %v872, 16
      %v943 = vrot.slane %v941, 4
      %v944 = vshll.u32 %v872, 16
      %v946 = vrot.slane %v944, 5
      %v947 = vor.u32 %v943, %v946
      %v948 = vrot.slane %v947, 4
      %v950 = vshll.u32 %v880, 16
      %v952 = vrot.slane %v950, 5
      %v953 = vsel %vm511, %v948, %v952
      %v955 = vshrl.u32 %v873, 16
      %v957 = vrot.slane %v955, 4
      %v958 = vshll.u32 %v873, 16
      %v960 = vrot.slane %v958, 5
      %v961 = vor.u32 %v957, %v960
      %v962 = vrot.slane %v961, 4
      %v964 = vshll.u32 %v881, 16
      %v966 = vrot.slane %v964, 5
      %v967 = vsel %vm511, %v962, %v966
      %v969 = vshrl.u32 %v874, 16
      %v971 = vrot.slane %v969, 4
      %v972 = vshll.u32 %v874, 16
      %v974 = vrot.slane %v972, 5
      %v975 = vor.u32 %v971, %v974
      %v976 = vrot.slane %v975, 4
      %v978 = vshll.u32 %v882, 16
      %v980 = vrot.slane %v978, 5
      %v981 = vsel %vm511, %v976, %v980
      %v983 = vshrl.u32 %v875, 16
      %v985 = vrot.slane %v983, 4
      %v986 = vshll.u32 %v875, 16
      %v988 = vrot.slane %v986, 5
      %v989 = vor.u32 %v985, %v988
      %v990 = vrot.slane %v989, 4
      %v992 = vshll.u32 %v883, 16
      %v994 = vrot.slane %v992, 5
      %v995 = vsel %vm511, %v990, %v994
      %v996 = vld [vmem:[%s867] sm:$0xe]
      %v997 = vld [vmem:[%s867 + $0x8] sm:$0xe]
      %v998 = vld [vmem:[%s867 + $0x10] sm:$0xe]
      %v999 = vld [vmem:[%s867 + $0x18] sm:$0xe]
      %v1000 = vld [vmem:[%s867 + $0x20] sm:$0xe]
      %v1001 = vld [vmem:[%s867 + $0x28] sm:$0xe]
      %v1002 = vld [vmem:[%s867 + $0x30] sm:$0xe]
      %v1003 = vld [vmem:[%s867 + $0x38] sm:$0xe]
      %v1020 = vrot.slane %v996, 5
      %v1021 = vrot.slane %v1020, 4
      %v1022 = vrot.slane %v876, 5
      %v1023 = vsel %vm650, %v1021, %v1022
      %v1024 = vrot.slane %v997, 5
      %v1025 = vrot.slane %v1024, 4
      %v1026 = vrot.slane %v877, 5
      %v1027 = vsel %vm650, %v1025, %v1026
      %v1028 = vrot.slane %v998, 5
      %v1029 = vrot.slane %v1028, 4
      %v1030 = vrot.slane %v878, 5
      %v1031 = vsel %vm650, %v1029, %v1030
      %v1032 = vrot.slane %v999, 5
      %v1033 = vrot.slane %v1032, 4
      %v1034 = vrot.slane %v879, 5
      %v1035 = vsel %vm650, %v1033, %v1034
      %v1036 = vrot.slane %v1000, 5
      %v1037 = vrot.slane %v1036, 4
      %v1038 = vrot.slane %v880, 5
      %v1039 = vsel %vm650, %v1037, %v1038
      %v1040 = vrot.slane %v1001, 5
      %v1041 = vrot.slane %v1040, 4
      %v1042 = vrot.slane %v881, 5
      %v1043 = vsel %vm650, %v1041, %v1042
      %v1044 = vrot.slane %v1002, 5
      %v1045 = vrot.slane %v1044, 4
      %v1046 = vrot.slane %v882, 5
      %v1047 = vsel %vm650, %v1045, %v1046
      %v1048 = vrot.slane %v1003, 5
      %v1049 = vrot.slane %v1048, 4
      %v1050 = vrot.slane %v883, 5
      %v1051 = vsel %vm650, %v1049, %v1050
      %v1060 = vunpack.c.l.b16 %v493
      %v1061 = vunpack.c.l.b16 %v494
      %v1062 = vunpack.c.l.b16 %v495
      %v1063 = vunpack.c.l.b16 %v496
      %v1064 = vunpack.c.l.b16 %v497
      %v1065 = vunpack.c.l.b16 %v498
      %v1066 = vunpack.c.l.b16 %v499
      %v1067 = vunpack.c.l.b16 %v500
      %v1068 = vpack.c.b16 %v1061, %v1060
      %v1069 = vpack.c.b16 %v1063, %v1062
      %v1070 = vpack.c.b16 %v1065, %v1064
      %v1071 = vpack.c.b16 %v1067, %v1066
      %v1076 = vunpack.c.l.b16 %v525
      %v1077 = vunpack.c.l.b16 %v539
      %v1078 = vunpack.c.l.b16 %v553
      %v1079 = vunpack.c.l.b16 %v567
      %v1080 = vunpack.c.l.b16 %v581
      %v1081 = vunpack.c.l.b16 %v595
      %v1082 = vunpack.c.l.b16 %v609
      %v1083 = vunpack.c.l.b16 %v623
      %v1084 = vpack.c.b16 %v1077, %v1076
      %v1085 = vpack.c.b16 %v1079, %v1078
      %v1086 = vpack.c.b16 %v1081, %v1080
      %v1087 = vpack.c.b16 %v1083, %v1082
      %v1092 = vunpack.c.l.b16 %v654
      %v1093 = vunpack.c.l.b16 %v658
      %v1094 = vunpack.c.l.b16 %v662
      %v1095 = vunpack.c.l.b16 %v666
      %v1096 = vunpack.c.l.b16 %v670
      %v1097 = vunpack.c.l.b16 %v674
      %v1098 = vunpack.c.l.b16 %v678
      %v1099 = vunpack.c.l.b16 %v682
      %v1100 = vpack.c.b16 %v1093, %v1092
      %v1101 = vpack.c.b16 %v1095, %v1094
      %v1102 = vpack.c.b16 %v1097, %v1096
      %v1103 = vpack.c.b16 %v1099, %v1098
      %v1116 = vunpack.c.l.b16 %v683
      %v1117 = vunpack.c.l.b16 %v684
      %v1118 = vunpack.c.l.b16 %v685
      %v1119 = vunpack.c.l.b16 %v686
      %v1120 = vunpack.c.l.b16 %v687
      %v1121 = vunpack.c.l.b16 %v688
      %v1122 = vunpack.c.l.b16 %v689
      %v1123 = vunpack.c.l.b16 %v690
      %v1124 = vpack.c.b16 %v1117, %v1116
      %v1125 = vpack.c.b16 %v1119, %v1118
      %v1126 = vpack.c.b16 %v1121, %v1120
      %v1127 = vpack.c.b16 %v1123, %v1122
      %v1132 = vunpack.c.l.b16 %v712
      %v1133 = vunpack.c.l.b16 %v726
      %v1134 = vunpack.c.l.b16 %v740
      %v1135 = vunpack.c.l.b16 %v754
      %v1136 = vunpack.c.l.b16 %v768
      %v1137 = vunpack.c.l.b16 %v782
      %v1138 = vunpack.c.l.b16 %v796
      %v1139 = vunpack.c.l.b16 %v810
      %v1140 = vpack.c.b16 %v1133, %v1132
      %v1141 = vpack.c.b16 %v1135, %v1134
      %v1142 = vpack.c.b16 %v1137, %v1136
      %v1143 = vpack.c.b16 %v1139, %v1138
      %v1148 = vunpack.c.l.b16 %v838
      %v1149 = vunpack.c.l.b16 %v842
      %v1150 = vunpack.c.l.b16 %v846
      %v1151 = vunpack.c.l.b16 %v850
      %v1152 = vunpack.c.l.b16 %v854
      %v1153 = vunpack.c.l.b16 %v858
      %v1154 = vunpack.c.l.b16 %v862
      %v1155 = vunpack.c.l.b16 %v866
      %v1156 = vpack.c.b16 %v1149, %v1148
      %v1157 = vpack.c.b16 %v1151, %v1150
      %v1158 = vpack.c.b16 %v1153, %v1152
      %v1159 = vpack.c.b16 %v1155, %v1154
      %v1172 = vunpack.c.l.b16 %v868
      %v1173 = vunpack.c.l.b16 %v869
      %v1174 = vunpack.c.l.b16 %v870
      %v1175 = vunpack.c.l.b16 %v871
      %v1176 = vunpack.c.l.b16 %v872
      %v1177 = vunpack.c.l.b16 %v873
      %v1178 = vunpack.c.l.b16 %v874
      %v1179 = vunpack.c.l.b16 %v875
      %v1180 = vpack.c.b16 %v1173, %v1172
      %v1181 = vpack.c.b16 %v1175, %v1174
      %v1182 = vpack.c.b16 %v1177, %v1176
      %v1183 = vpack.c.b16 %v1179, %v1178
      %v1188 = vunpack.c.l.b16 %v897
      %v1189 = vunpack.c.l.b16 %v911
      %v1190 = vunpack.c.l.b16 %v925
      %v1191 = vunpack.c.l.b16 %v939
      %v1192 = vunpack.c.l.b16 %v953
      %v1193 = vunpack.c.l.b16 %v967
      %v1194 = vunpack.c.l.b16 %v981
      %v1195 = vunpack.c.l.b16 %v995
      %v1196 = vpack.c.b16 %v1189, %v1188
      %v1197 = vpack.c.b16 %v1191, %v1190
      %v1198 = vpack.c.b16 %v1193, %v1192
      %v1199 = vpack.c.b16 %v1195, %v1194
      %v1204 = vunpack.c.l.b16 %v1023
      %v1205 = vunpack.c.l.b16 %v1027
      %v1206 = vunpack.c.l.b16 %v1031
      %v1207 = vunpack.c.l.b16 %v1035
      %v1208 = vunpack.c.l.b16 %v1039
      %v1209 = vunpack.c.l.b16 %v1043
      %v1210 = vunpack.c.l.b16 %v1047
      %v1211 = vunpack.c.l.b16 %v1051
      %v1212 = vpack.c.b16 %v1205, %v1204
      %v1213 = vpack.c.b16 %v1207, %v1206
      %v1214 = vpack.c.b16 %v1209, %v1208
      %v1215 = vpack.c.b16 %v1211, %v1210
      %v1220 = vld [vmem:[%s2] sm:$0xf]
      %v1221 = vld [vmem:[%s2 + $0x4] sm:$0xf]
      %v1222 = vld [vmem:[%s2 + $0x8] sm:$0xf]
      %v1223 = vld [vmem:[%s2 + $0xc] sm:$0xf]
      %v1224 = vld [vmem:[%s2 + $0x10] sm:$0xf]
      %v1225 = vld [vmem:[%s2 + $0x14] sm:$0xf]
      %v1226 = vld [vmem:[%s2 + $0x18] sm:$0xf]
      %v1227 = vld [vmem:[%s2 + $0x1c] sm:$0xf]
      %v1228 = vld [vmem:[%s2 + $0x20] sm:$0xf]
      %v1229 = vld [vmem:[%s2 + $0x24] sm:$0xf]
      %v1230 = vld [vmem:[%s2 + $0x28] sm:$0xf]
      %v1231 = vld [vmem:[%s2 + $0x2c] sm:$0xf]
      %v1232 = vld [vmem:[%s2 + $0x30] sm:$0xf]
      %v1233 = vld [vmem:[%s2 + $0x34] sm:$0xf]
      %v1234 = vld [vmem:[%s2 + $0x38] sm:$0xf]
      %v1235 = vld [vmem:[%s2 + $0x3c] sm:$0xf]
      %v1236 = vld [vmem:[%s2 + $0x40] sm:$0xf]
      %v1237 = vld [vmem:[%s2 + $0x44] sm:$0xf]
      %v1238 = vld [vmem:[%s2 + $0x48] sm:$0xf]
      %v1239 = vld [vmem:[%s2 + $0x4c] sm:$0xf]
      %v1240 = vld [vmem:[%s2 + $0x50] sm:$0xf]
      %v1241 = vld [vmem:[%s2 + $0x54] sm:$0xf]
      %v1242 = vld [vmem:[%s2 + $0x58] sm:$0xf]
      %v1243 = vld [vmem:[%s2 + $0x5c] sm:$0xf]
      %v1244 = vld [vmem:[%s2 + $0x60] sm:$0xf]
      %v1245 = vld [vmem:[%s2 + $0x64] sm:$0xf]
      %v1246 = vld [vmem:[%s2 + $0x68] sm:$0xf]
      %v1247 = vld [vmem:[%s2 + $0x6c] sm:$0xf]
      %v1248 = vld [vmem:[%s2 + $0x70] sm:$0xf]
      %v1249 = vld [vmem:[%s2 + $0x74] sm:$0xf]
      %v1250 = vld [vmem:[%s2 + $0x78] sm:$0xf]
      %v1251 = vld [vmem:[%s2 + $0x7c] sm:$0xf]
      %v1252 = vld [vmem:[%s2 + $0x80] sm:$0xf]
      %v1253 = vld [vmem:[%s2 + $0x84] sm:$0xf]
      %v1254 = vld [vmem:[%s2 + $0x88] sm:$0xf]
      %v1255 = vld [vmem:[%s2 + $0x8c] sm:$0xf]
      %v1256 = vld [vmem:[%s2 + $0x90] sm:$0xf]
      %v1257 = vld [vmem:[%s2 + $0x94] sm:$0xf]
      %v1258 = vld [vmem:[%s2 + $0x98] sm:$0xf]
      %v1259 = vld [vmem:[%s2 + $0x9c] sm:$0xf]
      %v1260 = vld [vmem:[%s2 + $0xa0] sm:$0xf]
      %v1261 = vld [vmem:[%s2 + $0xa4] sm:$0xf]
      %v1262 = vld [vmem:[%s2 + $0xa8] sm:$0xf]
      %v1263 = vld [vmem:[%s2 + $0xac] sm:$0xf]
      %v1264 = vld [vmem:[%s2 + $0xb0] sm:$0xf]
      %v1265 = vld [vmem:[%s2 + $0xb4] sm:$0xf]
      %v1266 = vld [vmem:[%s2 + $0xb8] sm:$0xf]
      %v1267 = vld [vmem:[%s2 + $0xbc] sm:$0xf]
      %v1268 = vld [vmem:[%s2 + $0xc0] sm:$0xf]
      %v1269 = vld [vmem:[%s2 + $0xc4] sm:$0xf]
      %v1270 = vld [vmem:[%s2 + $0xc8] sm:$0xf]
      %v1271 = vld [vmem:[%s2 + $0xcc] sm:$0xf]
      %v1272 = vld [vmem:[%s2 + $0xd0] sm:$0xf]
      %v1273 = vld [vmem:[%s2 + $0xd4] sm:$0xf]
      %v1274 = vld [vmem:[%s2 + $0xd8] sm:$0xf]
      %v1275 = vld [vmem:[%s2 + $0xdc] sm:$0xf]
      %v1276 = vld [vmem:[%s2 + $0xe0] sm:$0xf]
      %v1277 = vld [vmem:[%s2 + $0xe4] sm:$0xf]
      %v1278 = vld [vmem:[%s2 + $0xe8] sm:$0xf]
      %v1279 = vld [vmem:[%s2 + $0xec] sm:$0xf]
      %v1280 = vld [vmem:[%s2 + $0xf0] sm:$0xf]
      %v1281 = vld [vmem:[%s2 + $0xf4] sm:$0xf]
      %v1282 = vld [vmem:[%s2 + $0xf8] sm:$0xf]
      %v1283 = vld [vmem:[%s2 + $0xfc] sm:$0xf]
      %v1284 = vld [vmem:[%s2 + $0x100] sm:$0xf]
      %v1285 = vld [vmem:[%s2 + $0x104] sm:$0xf]
      %v1286 = vld [vmem:[%s2 + $0x108] sm:$0xf]
      %v1287 = vld [vmem:[%s2 + $0x10c] sm:$0xf]
      %v1288 = vld [vmem:[%s2 + $0x110] sm:$0xf]
      %v1289 = vld [vmem:[%s2 + $0x114] sm:$0xf]
      %v1290 = vld [vmem:[%s2 + $0x118] sm:$0xf]
      %v1291 = vld [vmem:[%s2 + $0x11c] sm:$0xf]
      %v1292 = vld [vmem:[%s2 + $0x120] sm:$0xf]
      %v1293 = vld [vmem:[%s2 + $0x124] sm:$0xf]
      %v1294 = vld [vmem:[%s2 + $0x128] sm:$0xf]
      %v1295 = vld [vmem:[%s2 + $0x12c] sm:$0xf]
      %v1296 = vld [vmem:[%s2 + $0x130] sm:$0xf]
      %v1297 = vld [vmem:[%s2 + $0x134] sm:$0xf]
      %v1298 = vld [vmem:[%s2 + $0x138] sm:$0xf]
      %v1299 = vld [vmem:[%s2 + $0x13c] sm:$0xf]
      %v1300 = vld [vmem:[%s2 + $0x140] sm:$0xf]
      %v1301 = vld [vmem:[%s2 + $0x144] sm:$0xf]
      %v1302 = vld [vmem:[%s2 + $0x148] sm:$0xf]
      %v1303 = vld [vmem:[%s2 + $0x14c] sm:$0xf]
      %v1304 = vld [vmem:[%s2 + $0x150] sm:$0xf]
      %v1305 = vld [vmem:[%s2 + $0x154] sm:$0xf]
      %v1306 = vld [vmem:[%s2 + $0x158] sm:$0xf]
      %v1307 = vld [vmem:[%s2 + $0x15c] sm:$0xf]
      %v1308 = vld [vmem:[%s2 + $0x160] sm:$0xf]
      %v1309 = vld [vmem:[%s2 + $0x164] sm:$0xf]
      %v1310 = vld [vmem:[%s2 + $0x168] sm:$0xf]
      %v1311 = vld [vmem:[%s2 + $0x16c] sm:$0xf]
      %v1312 = vld [vmem:[%s2 + $0x170] sm:$0xf]
      %v1313 = vld [vmem:[%s2 + $0x174] sm:$0xf]
      %v1314 = vld [vmem:[%s2 + $0x178] sm:$0xf]
      %v1315 = vld [vmem:[%s2 + $0x17c] sm:$0xf]
      %v1316 = vld [vmem:[%s2 + $0x180] sm:$0xf]
      %v1317 = vld [vmem:[%s2 + $0x184] sm:$0xf]
      %v1318 = vld [vmem:[%s2 + $0x188] sm:$0xf]
      %v1319 = vld [vmem:[%s2 + $0x18c] sm:$0xf]
      %v1320 = vld [vmem:[%s2 + $0x190] sm:$0xf]
      %v1321 = vld [vmem:[%s2 + $0x194] sm:$0xf]
      %v1322 = vld [vmem:[%s2 + $0x198] sm:$0xf]
      %v1323 = vld [vmem:[%s2 + $0x19c] sm:$0xf]
      %v1324 = vld [vmem:[%s2 + $0x1a0] sm:$0xf]
      %v1325 = vld [vmem:[%s2 + $0x1a4] sm:$0xf]
      %v1326 = vld [vmem:[%s2 + $0x1a8] sm:$0xf]
      %v1327 = vld [vmem:[%s2 + $0x1ac] sm:$0xf]
      %v1328 = vld [vmem:[%s2 + $0x1b0] sm:$0xf]
      %v1329 = vld [vmem:[%s2 + $0x1b4] sm:$0xf]
      %v1330 = vld [vmem:[%s2 + $0x1b8] sm:$0xf]
      %v1331 = vld [vmem:[%s2 + $0x1bc] sm:$0xf]
      %v1332 = vld [vmem:[%s2 + $0x1c0] sm:$0xf]
      %v1333 = vld [vmem:[%s2 + $0x1c4] sm:$0xf]
      %v1334 = vld [vmem:[%s2 + $0x1c8] sm:$0xf]
      %v1335 = vld [vmem:[%s2 + $0x1cc] sm:$0xf]
      %v1336 = vld [vmem:[%s2 + $0x1d0] sm:$0xf]
      %v1337 = vld [vmem:[%s2 + $0x1d4] sm:$0xf]
      %v1338 = vld [vmem:[%s2 + $0x1d8] sm:$0xf]
      %v1339 = vld [vmem:[%s2 + $0x1dc] sm:$0xf]
      %v1340 = vld [vmem:[%s2 + $0x1e0] sm:$0xf]
      %v1341 = vld [vmem:[%s2 + $0x1e4] sm:$0xf]
      %v1342 = vld [vmem:[%s2 + $0x1e8] sm:$0xf]
      %v1343 = vld [vmem:[%s2 + $0x1ec] sm:$0xf]
      %v1344 = vld [vmem:[%s2 + $0x1f0] sm:$0xf]
      %v1345 = vld [vmem:[%s2 + $0x1f4] sm:$0xf]
      %v1346 = vld [vmem:[%s2 + $0x1f8] sm:$0xf]
      %v1347 = vld [vmem:[%s2 + $0x1fc] sm:$0xf]
      %v1348 = vld [vmem:[%s2 + $0x200] sm:$0xf]
      %v1349 = vld [vmem:[%s2 + $0x204] sm:$0xf]
      %v1350 = vld [vmem:[%s2 + $0x208] sm:$0xf]
      %v1351 = vld [vmem:[%s2 + $0x20c] sm:$0xf]
      %v1352 = vld [vmem:[%s2 + $0x210] sm:$0xf]
      %v1353 = vld [vmem:[%s2 + $0x214] sm:$0xf]
      %v1354 = vld [vmem:[%s2 + $0x218] sm:$0xf]
      %v1355 = vld [vmem:[%s2 + $0x21c] sm:$0xf]
      %v1356 = vld [vmem:[%s2 + $0x220] sm:$0xf]
      %v1357 = vld [vmem:[%s2 + $0x224] sm:$0xf]
      %v1358 = vld [vmem:[%s2 + $0x228] sm:$0xf]
      %v1359 = vld [vmem:[%s2 + $0x22c] sm:$0xf]
      %v1360 = vld [vmem:[%s2 + $0x230] sm:$0xf]
      %v1361 = vld [vmem:[%s2 + $0x234] sm:$0xf]
      %v1362 = vld [vmem:[%s2 + $0x238] sm:$0xf]
      %v1363 = vld [vmem:[%s2 + $0x23c] sm:$0xf]
      %v1508 = vunpack.c.l.b16 %v1220
      %v1509 = vunpack.c.l.b16 %v1221
      %v1510 = vunpack.c.l.b16 %v1222
      %v1511 = vunpack.c.l.b16 %v1223
      %v1512 = vunpack.c.l.b16 %v1224
      %v1513 = vunpack.c.l.b16 %v1225
      %v1514 = vunpack.c.l.b16 %v1226
      %v1515 = vunpack.c.l.b16 %v1227
      %v1516 = vunpack.c.l.b16 %v1228
      %v1517 = vunpack.c.l.b16 %v1229
      %v1518 = vunpack.c.l.b16 %v1230
      %v1519 = vunpack.c.l.b16 %v1231
      %v1520 = vunpack.c.l.b16 %v1232
      %v1521 = vunpack.c.l.b16 %v1233
      %v1522 = vunpack.c.l.b16 %v1234
      %v1523 = vunpack.c.l.b16 %v1235
      %v1524 = vunpack.c.l.b16 %v1236
      %v1525 = vunpack.c.l.b16 %v1237
      %v1526 = vunpack.c.l.b16 %v1238
      %v1527 = vunpack.c.l.b16 %v1239
      %v1528 = vunpack.c.l.b16 %v1240
      %v1529 = vunpack.c.l.b16 %v1241
      %v1530 = vunpack.c.l.b16 %v1242
      %v1531 = vunpack.c.l.b16 %v1243
      %v1532 = vunpack.c.l.b16 %v1244
      %v1533 = vunpack.c.l.b16 %v1245
      %v1534 = vunpack.c.l.b16 %v1246
      %v1535 = vunpack.c.l.b16 %v1247
      %v1536 = vunpack.c.l.b16 %v1248
      %v1537 = vunpack.c.l.b16 %v1249
      %v1538 = vunpack.c.l.b16 %v1250
      %v1539 = vunpack.c.l.b16 %v1251
      %v1540 = vunpack.c.l.b16 %v1252
      %v1541 = vunpack.c.l.b16 %v1253
      %v1542 = vunpack.c.l.b16 %v1254
      %v1543 = vunpack.c.l.b16 %v1255
      %v1544 = vunpack.c.l.b16 %v1256
      %v1545 = vunpack.c.l.b16 %v1257
      %v1546 = vunpack.c.l.b16 %v1258
      %v1547 = vunpack.c.l.b16 %v1259
      %v1548 = vunpack.c.l.b16 %v1260
      %v1549 = vunpack.c.l.b16 %v1261
      %v1550 = vunpack.c.l.b16 %v1262
      %v1551 = vunpack.c.l.b16 %v1263
      %v1552 = vunpack.c.l.b16 %v1264
      %v1553 = vunpack.c.l.b16 %v1265
      %v1554 = vunpack.c.l.b16 %v1266
      %v1555 = vunpack.c.l.b16 %v1267
      %v1556 = vunpack.c.l.b16 %v1268
      %v1557 = vunpack.c.l.b16 %v1269
      %v1558 = vunpack.c.l.b16 %v1270
      %v1559 = vunpack.c.l.b16 %v1271
      %v1560 = vunpack.c.l.b16 %v1272
      %v1561 = vunpack.c.l.b16 %v1273
      %v1562 = vunpack.c.l.b16 %v1274
      %v1563 = vunpack.c.l.b16 %v1275
      %v1564 = vunpack.c.l.b16 %v1276
      %v1565 = vunpack.c.l.b16 %v1277
      %v1566 = vunpack.c.l.b16 %v1278
      %v1567 = vunpack.c.l.b16 %v1279
      %v1568 = vunpack.c.l.b16 %v1280
      %v1569 = vunpack.c.l.b16 %v1281
      %v1570 = vunpack.c.l.b16 %v1282
      %v1571 = vunpack.c.l.b16 %v1283
      %v1572 = vunpack.c.l.b16 %v1284
      %v1573 = vunpack.c.l.b16 %v1285
      %v1574 = vunpack.c.l.b16 %v1286
      %v1575 = vunpack.c.l.b16 %v1287
      %v1576 = vunpack.c.l.b16 %v1288
      %v1577 = vunpack.c.l.b16 %v1289
      %v1578 = vunpack.c.l.b16 %v1290
      %v1579 = vunpack.c.l.b16 %v1291
      %v1580 = vunpack.c.l.b16 %v1292
      %v1581 = vunpack.c.l.b16 %v1293
      %v1582 = vunpack.c.l.b16 %v1294
      %v1583 = vunpack.c.l.b16 %v1295
      %v1584 = vunpack.c.l.b16 %v1296
      %v1585 = vunpack.c.l.b16 %v1297
      %v1586 = vunpack.c.l.b16 %v1298
      %v1587 = vunpack.c.l.b16 %v1299
      %v1588 = vunpack.c.l.b16 %v1300
      %v1589 = vunpack.c.l.b16 %v1301
      %v1590 = vunpack.c.l.b16 %v1302
      %v1591 = vunpack.c.l.b16 %v1303
      %v1592 = vunpack.c.l.b16 %v1304
      %v1593 = vunpack.c.l.b16 %v1305
      %v1594 = vunpack.c.l.b16 %v1306
      %v1595 = vunpack.c.l.b16 %v1307
      %v1596 = vunpack.c.l.b16 %v1308
      %v1597 = vunpack.c.l.b16 %v1309
      %v1598 = vunpack.c.l.b16 %v1310
      %v1599 = vunpack.c.l.b16 %v1311
      %v1600 = vunpack.c.l.b16 %v1312
      %v1601 = vunpack.c.l.b16 %v1313
      %v1602 = vunpack.c.l.b16 %v1314
      %v1603 = vunpack.c.l.b16 %v1315
      %v1604 = vunpack.c.l.b16 %v1316
      %v1605 = vunpack.c.l.b16 %v1317
      %v1606 = vunpack.c.l.b16 %v1318
      %v1607 = vunpack.c.l.b16 %v1319
      %v1608 = vunpack.c.l.b16 %v1320
      %v1609 = vunpack.c.l.b16 %v1321
      %v1610 = vunpack.c.l.b16 %v1322
      %v1611 = vunpack.c.l.b16 %v1323
      %v1612 = vunpack.c.l.b16 %v1324
      %v1613 = vunpack.c.l.b16 %v1325
      %v1614 = vunpack.c.l.b16 %v1326
      %v1615 = vunpack.c.l.b16 %v1327
      %v1616 = vunpack.c.l.b16 %v1328
      %v1617 = vunpack.c.l.b16 %v1329
      %v1618 = vunpack.c.l.b16 %v1330
      %v1619 = vunpack.c.l.b16 %v1331
      %v1620 = vunpack.c.l.b16 %v1332
      %v1621 = vunpack.c.l.b16 %v1333
      %v1622 = vunpack.c.l.b16 %v1334
      %v1623 = vunpack.c.l.b16 %v1335
      %v1624 = vunpack.c.l.b16 %v1336
      %v1625 = vunpack.c.l.b16 %v1337
      %v1626 = vunpack.c.l.b16 %v1338
      %v1627 = vunpack.c.l.b16 %v1339
      %v1628 = vunpack.c.l.b16 %v1340
      %v1629 = vunpack.c.l.b16 %v1341
      %v1630 = vunpack.c.l.b16 %v1342
      %v1631 = vunpack.c.l.b16 %v1343
      %v1632 = vunpack.c.l.b16 %v1344
      %v1633 = vunpack.c.l.b16 %v1345
      %v1634 = vunpack.c.l.b16 %v1346
      %v1635 = vunpack.c.l.b16 %v1347
      %v1636 = vunpack.c.l.b16 %v1348
      %v1637 = vunpack.c.l.b16 %v1349
      %v1638 = vunpack.c.l.b16 %v1350
      %v1639 = vunpack.c.l.b16 %v1351
      %v1640 = vunpack.c.l.b16 %v1352
      %v1641 = vunpack.c.l.b16 %v1353
      %v1642 = vunpack.c.l.b16 %v1354
      %v1643 = vunpack.c.l.b16 %v1355
      %v1644 = vunpack.c.l.b16 %v1356
      %v1645 = vunpack.c.l.b16 %v1357
      %v1646 = vunpack.c.l.b16 %v1358
      %v1647 = vunpack.c.l.b16 %v1359
      %v1648 = vunpack.c.l.b16 %v1360
      %v1649 = vunpack.c.l.b16 %v1361
      %v1650 = vunpack.c.l.b16 %v1362
      %v1651 = vunpack.c.l.b16 %v1363
      %v1652 = vpack.c.b16 %v1509, %v1508
      %v1653 = vpack.c.b16 %v1511, %v1510
      %v1654 = vpack.c.b16 %v1513, %v1512
      %v1655 = vpack.c.b16 %v1515, %v1514
      %v1656 = vpack.c.b16 %v1517, %v1516
      %v1657 = vpack.c.b16 %v1519, %v1518
      %v1658 = vpack.c.b16 %v1521, %v1520
      %v1659 = vpack.c.b16 %v1523, %v1522
      %v1660 = vpack.c.b16 %v1525, %v1524
      %v1661 = vpack.c.b16 %v1527, %v1526
      %v1662 = vpack.c.b16 %v1529, %v1528
      %v1663 = vpack.c.b16 %v1531, %v1530
      %v1664 = vpack.c.b16 %v1533, %v1532
      %v1665 = vpack.c.b16 %v1535, %v1534
      %v1666 = vpack.c.b16 %v1537, %v1536
      %v1667 = vpack.c.b16 %v1539, %v1538
      %v1668 = vpack.c.b16 %v1541, %v1540
      %v1669 = vpack.c.b16 %v1543, %v1542
      %v1670 = vpack.c.b16 %v1545, %v1544
      %v1671 = vpack.c.b16 %v1547, %v1546
      %v1672 = vpack.c.b16 %v1549, %v1548
      %v1673 = vpack.c.b16 %v1551, %v1550
      %v1674 = vpack.c.b16 %v1553, %v1552
      %v1675 = vpack.c.b16 %v1555, %v1554
      %v1676 = vpack.c.b16 %v1557, %v1556
      %v1677 = vpack.c.b16 %v1559, %v1558
      %v1678 = vpack.c.b16 %v1561, %v1560
      %v1679 = vpack.c.b16 %v1563, %v1562
      %v1680 = vpack.c.b16 %v1565, %v1564
      %v1681 = vpack.c.b16 %v1567, %v1566
      %v1682 = vpack.c.b16 %v1569, %v1568
      %v1683 = vpack.c.b16 %v1571, %v1570
      %v1684 = vpack.c.b16 %v1573, %v1572
      %v1685 = vpack.c.b16 %v1575, %v1574
      %v1686 = vpack.c.b16 %v1577, %v1576
      %v1687 = vpack.c.b16 %v1579, %v1578
      %v1688 = vpack.c.b16 %v1581, %v1580
      %v1689 = vpack.c.b16 %v1583, %v1582
      %v1690 = vpack.c.b16 %v1585, %v1584
      %v1691 = vpack.c.b16 %v1587, %v1586
      %v1692 = vpack.c.b16 %v1589, %v1588
      %v1693 = vpack.c.b16 %v1591, %v1590
      %v1694 = vpack.c.b16 %v1593, %v1592
      %v1695 = vpack.c.b16 %v1595, %v1594
      %v1696 = vpack.c.b16 %v1597, %v1596
      %v1697 = vpack.c.b16 %v1599, %v1598
      %v1698 = vpack.c.b16 %v1601, %v1600
      %v1699 = vpack.c.b16 %v1603, %v1602
      %v1700 = vpack.c.b16 %v1605, %v1604
      %v1701 = vpack.c.b16 %v1607, %v1606
      %v1702 = vpack.c.b16 %v1609, %v1608
      %v1703 = vpack.c.b16 %v1611, %v1610
      %v1704 = vpack.c.b16 %v1613, %v1612
      %v1705 = vpack.c.b16 %v1615, %v1614
      %v1706 = vpack.c.b16 %v1617, %v1616
      %v1707 = vpack.c.b16 %v1619, %v1618
      %v1708 = vpack.c.b16 %v1621, %v1620
      %v1709 = vpack.c.b16 %v1623, %v1622
      %v1710 = vpack.c.b16 %v1625, %v1624
      %v1711 = vpack.c.b16 %v1627, %v1626
      %v1712 = vpack.c.b16 %v1629, %v1628
      %v1713 = vpack.c.b16 %v1631, %v1630
      %v1714 = vpack.c.b16 %v1633, %v1632
      %v1715 = vpack.c.b16 %v1635, %v1634
      %v1716 = vpack.c.b16 %v1637, %v1636
      %v1717 = vpack.c.b16 %v1639, %v1638
      %v1718 = vpack.c.b16 %v1641, %v1640
      %v1719 = vpack.c.b16 %v1643, %v1642
      %v1720 = vpack.c.b16 %v1645, %v1644
      %v1721 = vpack.c.b16 %v1647, %v1646
      %v1722 = vpack.c.b16 %v1649, %v1648
      %v1723 = vpack.c.b16 %v1651, %v1650
      %1796 = vmatprep.subr.bf16.mxu0 0
      %1797 = vmatpush1.bf16.msra.mxu0 %v1659
      %1798 = vmatprep.subr.bf16.mxu0 0
      %1799 = vmatpush1.bf16.msra.mxu0 %v1658
      %1800 = vmatprep.subr.bf16.mxu0 0
      %1801 = vmatpush1.bf16.msra.mxu0 %v1657
      %1802 = vmatprep.subr.bf16.mxu0 0
      %1803 = vmatpush1.bf16.msra.mxu0 %v1656
      %1804 = vmatprep.subr.bf16.mxu0 0
      %1805 = vmatpush1.bf16.msra.mxu0 %v1655
      %1806 = vmatprep.subr.bf16.mxu0 0
      %1807 = vmatpush1.bf16.msra.mxu0 %v1654
      %1808 = vmatprep.subr.bf16.mxu0 0
      %1809 = vmatpush1.bf16.msra.mxu0 %v1653
      %1810 = vmatprep.subr.bf16.mxu0 0
      %1811 = vmatpush1.bf16.msra.mxu0 %v1652
      %1812 = vmatprep.subr.bf16.mxu0 0
      %1813 = vmatpush2.bf16.msra.mxu0 %v1667
      %1814 = vmatprep.subr.bf16.mxu0 0
      %1815 = vmatpush2.bf16.msra.mxu0 %v1666
      %1816 = vmatprep.subr.bf16.mxu0 0
      %1817 = vmatpush2.bf16.msra.mxu0 %v1665
      %1818 = vmatprep.subr.bf16.mxu0 0
      %1819 = vmatpush2.bf16.msra.mxu0 %v1664
      %1820 = vmatprep.subr.bf16.mxu0 0
      %1821 = vmatpush2.bf16.msra.mxu0 %v1663
      %1822 = vmatprep.subr.bf16.mxu0 0
      %1823 = vmatpush2.bf16.msra.mxu0 %v1662
      %1824 = vmatprep.subr.bf16.mxu0 0
      %1825 = vmatpush2.bf16.msra.mxu0 %v1661
      %1826 = vmatprep.subr.bf16.mxu0 0
      %1827 = vmatpush2.bf16.msra.mxu0 %v1660
      %1828 = vmatprep.mubr.bf16.mxu0 %v1084
      %1829 = vmatmul.mubr.bf16.gmra.mxu0 %v1068
      %v1830 = vpop.f32.mrf.mxu0
      %v1831 = vadd.f32 0.0, %v1830
      %v1832 = vpop.f32.mrf.mxu0
      %v1833 = vpop.f32.mrf.mxu0
      %v1834 = vadd.f32 0.0, %v1833
      %v1835 = vpop.f32.mrf.mxu0
      %1836 = vmatprep.mubr.bf16.mxu0 %v1085
      %1837 = vmatmul.mubr.bf16.gmra.mxu0 %v1069
      %v1838 = vpop.f32.mrf.mxu0
      %v1839 = vadd.f32 0.0, %v1838
      %v1840 = vpop.f32.mrf.mxu0
      %v1841 = vpop.f32.mrf.mxu0
      %v1842 = vadd.f32 0.0, %v1841
      %v1843 = vpop.f32.mrf.mxu0
      %1844 = vmatprep.mubr.bf16.mxu0 %v1086
      %1845 = vmatmul.mubr.bf16.gmra.mxu0 %v1070
      %v1846 = vpop.f32.mrf.mxu0
      %v1847 = vadd.f32 0.0, %v1846
      %v1848 = vpop.f32.mrf.mxu0
      %v1849 = vpop.f32.mrf.mxu0
      %v1850 = vadd.f32 0.0, %v1849
      %v1851 = vpop.f32.mrf.mxu0
      %1852 = vmatprep.mubr.bf16.mxu0 %v1087
      %1853 = vmatmul.mubr.bf16.gmra.mxu0 %v1071
      %v1854 = vpop.f32.mrf.mxu0
      %v1855 = vadd.f32 0.0, %v1854
      %v1856 = vpop.f32.mrf.mxu0
      %v1857 = vpop.f32.mrf.mxu0
      %v1858 = vadd.f32 0.0, %v1857
      %v1859 = vpop.f32.mrf.mxu0
      %1860 = vdwg.mxu0
      %1861 = vmatprep.subr.bf16.mxu0 0
      %1862 = vmatpush1.bf16.msra.mxu0 %v1675
      %1863 = vmatprep.subr.bf16.mxu0 0
      %1864 = vmatpush1.bf16.msra.mxu0 %v1674
      %1865 = vmatprep.subr.bf16.mxu0 0
      %1866 = vmatpush1.bf16.msra.mxu0 %v1673
      %1867 = vmatprep.subr.bf16.mxu0 0
      %1868 = vmatpush1.bf16.msra.mxu0 %v1672
      %1869 = vmatprep.subr.bf16.mxu0 0
      %1870 = vmatpush1.bf16.msra.mxu0 %v1671
      %1871 = vmatprep.subr.bf16.mxu0 0
      %1872 = vmatpush1.bf16.msra.mxu0 %v1670
      %1873 = vmatprep.subr.bf16.mxu0 0
      %1874 = vmatpush1.bf16.msra.mxu0 %v1669
      %1875 = vmatprep.subr.bf16.mxu0 0
      %1876 = vmatpush1.bf16.msra.mxu0 %v1668
      %1877 = vmatprep.subr.bf16.mxu0 0
      %1878 = vmatpush2.bf16.msra.mxu0 %v1683
      %1879 = vmatprep.subr.bf16.mxu0 0
      %1880 = vmatpush2.bf16.msra.mxu0 %v1682
      %1881 = vmatprep.subr.bf16.mxu0 0
      %1882 = vmatpush2.bf16.msra.mxu0 %v1681
      %1883 = vmatprep.subr.bf16.mxu0 0
      %1884 = vmatpush2.bf16.msra.mxu0 %v1680
      %1885 = vmatprep.subr.bf16.mxu0 0
      %1886 = vmatpush2.bf16.msra.mxu0 %v1679
      %1887 = vmatprep.subr.bf16.mxu0 0
      %1888 = vmatpush2.bf16.msra.mxu0 %v1678
      %1889 = vmatprep.subr.bf16.mxu0 0
      %1890 = vmatpush2.bf16.msra.mxu0 %v1677
      %1891 = vmatprep.subr.bf16.mxu0 0
      %1892 = vmatpush2.bf16.msra.mxu0 %v1676
      %1893 = vmatprep.mubr.bf16.mxu0 %v1124
      %1894 = vmatmul.mubr.bf16.gmra.mxu0 %v1100
      %v1895 = vpop.f32.mrf.mxu0
      %v1896 = vadd.f32 %v1831, %v1895
      %v1897 = vpop.f32.mrf.mxu0
      %v1898 = vpop.f32.mrf.mxu0
      %v1899 = vadd.f32 %v1834, %v1898
      %v1900 = vpop.f32.mrf.mxu0
      %1901 = vmatprep.mubr.bf16.mxu0 %v1125
      %1902 = vmatmul.mubr.bf16.gmra.mxu0 %v1101
      %v1903 = vpop.f32.mrf.mxu0
      %v1904 = vadd.f32 %v1839, %v1903
      %v1905 = vpop.f32.mrf.mxu0
      %v1906 = vpop.f32.mrf.mxu0
      %v1907 = vadd.f32 %v1842, %v1906
      %v1908 = vpop.f32.mrf.mxu0
      %1909 = vmatprep.mubr.bf16.mxu0 %v1126
      %1910 = vmatmul.mubr.bf16.gmra.mxu0 %v1102
      %v1911 = vpop.f32.mrf.mxu0
      %v1912 = vadd.f32 %v1847, %v1911
      %v1913 = vpop.f32.mrf.mxu0
      %v1914 = vpop.f32.mrf.mxu0
      %v1915 = vadd.f32 %v1850, %v1914
      %v1916 = vpop.f32.mrf.mxu0
      %1917 = vmatprep.mubr.bf16.mxu0 %v1127
      %1918 = vmatmul.mubr.bf16.gmra.mxu0 %v1103
      %v1919 = vpop.f32.mrf.mxu0
      %v1920 = vadd.f32 %v1855, %v1919
      %v1921 = vpop.f32.mrf.mxu0
      %v1922 = vpop.f32.mrf.mxu0
      %v1923 = vadd.f32 %v1858, %v1922
      %v1924 = vpop.f32.mrf.mxu0
      %1925 = vdwg.mxu0
      %1926 = vmatprep.subr.bf16.mxu0 0
      %1927 = vmatpush1.bf16.msra.mxu0 %v1691
      %1928 = vmatprep.subr.bf16.mxu0 0
      %1929 = vmatpush1.bf16.msra.mxu0 %v1690
      %1930 = vmatprep.subr.bf16.mxu0 0
      %1931 = vmatpush1.bf16.msra.mxu0 %v1689
      %1932 = vmatprep.subr.bf16.mxu0 0
      %1933 = vmatpush1.bf16.msra.mxu0 %v1688
      %1934 = vmatprep.subr.bf16.mxu0 0
      %1935 = vmatpush1.bf16.msra.mxu0 %v1687
      %1936 = vmatprep.subr.bf16.mxu0 0
      %1937 = vmatpush1.bf16.msra.mxu0 %v1686
      %1938 = vmatprep.subr.bf16.mxu0 0
      %1939 = vmatpush1.bf16.msra.mxu0 %v1685
      %1940 = vmatprep.subr.bf16.mxu0 0
      %1941 = vmatpush1.bf16.msra.mxu0 %v1684
      %1942 = vmatprep.subr.bf16.mxu0 0
      %1943 = vmatpush2.bf16.msra.mxu0 %v1699
      %1944 = vmatprep.subr.bf16.mxu0 0
      %1945 = vmatpush2.bf16.msra.mxu0 %v1698
      %1946 = vmatprep.subr.bf16.mxu0 0
      %1947 = vmatpush2.bf16.msra.mxu0 %v1697
      %1948 = vmatprep.subr.bf16.mxu0 0
      %1949 = vmatpush2.bf16.msra.mxu0 %v1696
      %1950 = vmatprep.subr.bf16.mxu0 0
      %1951 = vmatpush2.bf16.msra.mxu0 %v1695
      %1952 = vmatprep.subr.bf16.mxu0 0
      %1953 = vmatpush2.bf16.msra.mxu0 %v1694
      %1954 = vmatprep.subr.bf16.mxu0 0
      %1955 = vmatpush2.bf16.msra.mxu0 %v1693
      %1956 = vmatprep.subr.bf16.mxu0 0
      %1957 = vmatpush2.bf16.msra.mxu0 %v1692
      %1958 = vmatprep.mubr.bf16.mxu0 %v1156
      %1959 = vmatmul.mubr.bf16.gmra.mxu0 %v1140
      %v1960 = vpop.f32.mrf.mxu0
      %v1961 = vadd.f32 %v1896, %v1960
      %v1962 = vpop.f32.mrf.mxu0
      %v1963 = vpop.f32.mrf.mxu0
      %v1964 = vadd.f32 %v1899, %v1963
      %v1965 = vpop.f32.mrf.mxu0
      %1966 = vmatprep.mubr.bf16.mxu0 %v1157
      %1967 = vmatmul.mubr.bf16.gmra.mxu0 %v1141
      %v1968 = vpop.f32.mrf.mxu0
      %v1969 = vadd.f32 %v1904, %v1968
      %v1970 = vpop.f32.mrf.mxu0
      %v1971 = vpop.f32.mrf.mxu0
      %v1972 = vadd.f32 %v1907, %v1971
      %v1973 = vpop.f32.mrf.mxu0
      %1974 = vmatprep.mubr.bf16.mxu0 %v1158
      %1975 = vmatmul.mubr.bf16.gmra.mxu0 %v1142
      %v1976 = vpop.f32.mrf.mxu0
      %v1977 = vadd.f32 %v1912, %v1976
      %v1978 = vpop.f32.mrf.mxu0
      %v1979 = vpop.f32.mrf.mxu0
      %v1980 = vadd.f32 %v1915, %v1979
      %v1981 = vpop.f32.mrf.mxu0
      %1982 = vmatprep.mubr.bf16.mxu0 %v1159
      %1983 = vmatmul.mubr.bf16.gmra.mxu0 %v1143
      %v1984 = vpop.f32.mrf.mxu0
      %v1985 = vadd.f32 %v1920, %v1984
      %v1986 = vpop.f32.mrf.mxu0
      %v1987 = vpop.f32.mrf.mxu0
      %v1988 = vadd.f32 %v1923, %v1987
      %v1989 = vpop.f32.mrf.mxu0
      %1990 = vdwg.mxu0
      %1991 = vmatprep.subr.bf16.mxu0 0
      %1992 = vmatpush1.bf16.msra.mxu0 %v1707
      %1993 = vmatprep.subr.bf16.mxu0 0
      %1994 = vmatpush1.bf16.msra.mxu0 %v1706
      %1995 = vmatprep.subr.bf16.mxu0 0
      %1996 = vmatpush1.bf16.msra.mxu0 %v1705
      %1997 = vmatprep.subr.bf16.mxu0 0
      %1998 = vmatpush1.bf16.msra.mxu0 %v1704
      %1999 = vmatprep.subr.bf16.mxu0 0
      %2000 = vmatpush1.bf16.msra.mxu0 %v1703
      %2001 = vmatprep.subr.bf16.mxu0 0
      %2002 = vmatpush1.bf16.msra.mxu0 %v1702
      %2003 = vmatprep.subr.bf16.mxu0 0
      %2004 = vmatpush1.bf16.msra.mxu0 %v1701
      %2005 = vmatprep.subr.bf16.mxu0 0
      %2006 = vmatpush1.bf16.msra.mxu0 %v1700
      %2007 = vmatprep.subr.bf16.mxu0 0
      %2008 = vmatpush2.bf16.msra.mxu0 %v1715
      %2009 = vmatprep.subr.bf16.mxu0 0
      %2010 = vmatpush2.bf16.msra.mxu0 %v1714
      %2011 = vmatprep.subr.bf16.mxu0 0
      %2012 = vmatpush2.bf16.msra.mxu0 %v1713
      %2013 = vmatprep.subr.bf16.mxu0 0
      %2014 = vmatpush2.bf16.msra.mxu0 %v1712
      %2015 = vmatprep.subr.bf16.mxu0 0
      %2016 = vmatpush2.bf16.msra.mxu0 %v1711
      %2017 = vmatprep.subr.bf16.mxu0 0
      %2018 = vmatpush2.bf16.msra.mxu0 %v1710
      %2019 = vmatprep.subr.bf16.mxu0 0
      %2020 = vmatpush2.bf16.msra.mxu0 %v1709
      %2021 = vmatprep.subr.bf16.mxu0 0
      %2022 = vmatpush2.bf16.msra.mxu0 %v1708
      %2023 = vmatprep.mubr.bf16.mxu0 %v1196
      %2024 = vmatmul.mubr.bf16.gmra.mxu0 %v1180
      %v2025 = vpop.f32.mrf.mxu0
      %v2026 = vadd.f32 %v1961, %v2025
      %v2027 = vpop.f32.mrf.mxu0
      %v2028 = vpop.f32.mrf.mxu0
      %v2029 = vadd.f32 %v1964, %v2028
      %v2030 = vpop.f32.mrf.mxu0
      %2031 = vmatprep.mubr.bf16.mxu0 %v1197
      %2032 = vmatmul.mubr.bf16.gmra.mxu0 %v1181
      %v2033 = vpop.f32.mrf.mxu0
      %v2034 = vadd.f32 %v1969, %v2033
      %v2035 = vpop.f32.mrf.mxu0
      %v2036 = vpop.f32.mrf.mxu0
      %v2037 = vadd.f32 %v1972, %v2036
      %v2038 = vpop.f32.mrf.mxu0
      %2039 = vmatprep.mubr.bf16.mxu0 %v1198
      %2040 = vmatmul.mubr.bf16.gmra.mxu0 %v1182
      %v2041 = vpop.f32.mrf.mxu0
      %v2042 = vadd.f32 %v1977, %v2041
      %v2043 = vpop.f32.mrf.mxu0
      %v2044 = vpop.f32.mrf.mxu0
      %v2045 = vadd.f32 %v1980, %v2044
      %v2046 = vpop.f32.mrf.mxu0
      %2047 = vmatprep.mubr.bf16.mxu0 %v1199
      %2048 = vmatmul.mubr.bf16.gmra.mxu0 %v1183
      %v2049 = vpop.f32.mrf.mxu0
      %v2050 = vadd.f32 %v1985, %v2049
      %v2051 = vpop.f32.mrf.mxu0
      %v2052 = vpop.f32.mrf.mxu0
      %v2053 = vadd.f32 %v1988, %v2052
      %v2054 = vpop.f32.mrf.mxu0
      %2055 = vdwg.mxu0
      %2056 = vmatprep.subr.bf16.mxu0 0
      %2057 = vmatpush1.bf16.msra.mxu0 %v1723
      %2058 = vmatprep.subr.bf16.mxu0 0
      %2059 = vmatpush1.bf16.msra.mxu0 %v1722
      %2060 = vmatprep.subr.bf16.mxu0 0
      %2061 = vmatpush1.bf16.msra.mxu0 %v1721
      %2062 = vmatprep.subr.bf16.mxu0 0
      %2063 = vmatpush1.bf16.msra.mxu0 %v1720
      %2064 = vmatprep.subr.bf16.mxu0 0
      %2065 = vmatpush1.bf16.msra.mxu0 %v1719
      %2066 = vmatprep.subr.bf16.mxu0 0
      %2067 = vmatpush1.bf16.msra.mxu0 %v1718
      %2068 = vmatprep.subr.bf16.mxu0 0
      %2069 = vmatpush1.bf16.msra.mxu0 %v1717
      %2070 = vmatprep.subr.bf16.mxu0 0
      %2071 = vmatpush1.bf16.msra.mxu0 %v1716
      %2072 = vmatprep.subr.bf16.mxu0 0
      %2073 = vmatpush2.bf16.msra.mxu0 0
      %2074 = vmatprep.subr.bf16.mxu0 0
      %2075 = vmatpush2.bf16.msra.mxu0 0
      %2076 = vmatprep.subr.bf16.mxu0 0
      %2077 = vmatpush2.bf16.msra.mxu0 0
      %2078 = vmatprep.subr.bf16.mxu0 0
      %2079 = vmatpush2.bf16.msra.mxu0 0
      %2080 = vmatprep.subr.bf16.mxu0 0
      %2081 = vmatpush2.bf16.msra.mxu0 0
      %2082 = vmatprep.subr.bf16.mxu0 0
      %2083 = vmatpush2.bf16.msra.mxu0 0
      %2084 = vmatprep.subr.bf16.mxu0 0
      %2085 = vmatpush2.bf16.msra.mxu0 0
      %2086 = vmatprep.subr.bf16.mxu0 0
      %2087 = vmatpush2.bf16.msra.mxu0 0
      %2088 = vmatprep.mubr.bf16.mxu0 0
      %2089 = vmatmul.mubr.bf16.gmra.mxu0 %v1212
      %v2090 = vpop.f32.mrf.mxu0
      %v2091 = vadd.f32 %v2026, %v2090
      %v2092 = vpop.f32.mrf.mxu0
      %v2093 = vpop.f32.mrf.mxu0
      %v2094 = vadd.f32 %v2029, %v2093
      %v2095 = vpop.f32.mrf.mxu0
      %2096 = vmatprep.mubr.bf16.mxu0 0
      %2097 = vmatmul.mubr.bf16.gmra.mxu0 %v1213
      %v2098 = vpop.f32.mrf.mxu0
      %v2099 = vadd.f32 %v2034, %v2098
      %v2100 = vpop.f32.mrf.mxu0
      %v2101 = vpop.f32.mrf.mxu0
      %v2102 = vadd.f32 %v2037, %v2101
      %v2103 = vpop.f32.mrf.mxu0
      %2104 = vmatprep.mubr.bf16.mxu0 0
      %2105 = vmatmul.mubr.bf16.gmra.mxu0 %v1214
      %v2106 = vpop.f32.mrf.mxu0
      %v2107 = vadd.f32 %v2042, %v2106
      %v2108 = vpop.f32.mrf.mxu0
      %v2109 = vpop.f32.mrf.mxu0
      %v2110 = vadd.f32 %v2045, %v2109
      %v2111 = vpop.f32.mrf.mxu0
      %2112 = vmatprep.mubr.bf16.mxu0 0
      %2113 = vmatmul.mubr.bf16.gmra.mxu0 %v1215
      %v2114 = vpop.f32.mrf.mxu0
      %v2115 = vadd.f32 %v2050, %v2114
      %v2116 = vpop.f32.mrf.mxu0
      %v2117 = vpop.f32.mrf.mxu0
      %v2118 = vadd.f32 %v2053, %v2117
      %v2119 = vpop.f32.mrf.mxu0
      %2120 = vdwg.mxu0
      %v2121 = vpack.c.bf16 %v2091, %v2091
      %v2122 = vpack.c.bf16 %v2094, %v2094
      %v2123 = vpack.c.bf16 %v2099, %v2099
      %v2124 = vpack.c.bf16 %v2102, %v2102
      %v2125 = vpack.c.bf16 %v2107, %v2107
      %v2126 = vpack.c.bf16 %v2110, %v2110
      %v2127 = vpack.c.bf16 %v2115, %v2115
      %v2128 = vpack.c.bf16 %v2118, %v2118
      %2129 = vst [vmem:[%s204] sm:$0xf] %v2121
      %2130 = vst [vmem:[%s204 + $0x4] sm:$0xf] %v2122
      %2131 = vst [vmem:[%s204 + $0x8] sm:$0xf] %v2123
      %2132 = vst [vmem:[%s204 + $0xc] sm:$0xf] %v2124
      %2133 = vst [vmem:[%s204 + $0x10] sm:$0xf] %v2125
      %2134 = vst [vmem:[%s204 + $0x14] sm:$0xf] %v2126
      %2135 = vst [vmem:[%s204 + $0x18] sm:$0xf] %v2127
      %2136 = vst [vmem:[%s204 + $0x1c] sm:$0xf] %v2128
      %v2137 = vadd.f32 %v2091, %v2094
      %v2138 = vadd.f32 %v2137, %v2099
      %v2139 = vadd.f32 %v2138, %v2102
      %v2140 = vadd.f32 %v2139, %v2107
      %v2141 = vadd.f32 %v2140, %v2110
      %v2142 = vadd.f32 %v2141, %v2115
      %v2143 = vadd.f32 %v2142, %v2118
      %v2144 = vrot.slane %v2143, 4
      %v2145 = vadd.f32 %v2143, %v2144
      %v2146 = vrot.slane %v2145, 2
      %v2147 = vadd.f32 %v2145, %v2146
      %v2148 = vrot.slane %v2147, 1
      %v2149 = vadd.f32 %v2147, %v2148
      %v2150 = vmul.f32 %v2091, %v2091
      %v2151 = vmul.f32 %v2094, %v2094
      %v2152 = vmul.f32 %v2099, %v2099
      %v2153 = vmul.f32 %v2102, %v2102
      %v2154 = vmul.f32 %v2107, %v2107
      %v2155 = vmul.f32 %v2110, %v2110
      %v2156 = vmul.f32 %v2115, %v2115
      %v2157 = vmul.f32 %v2118, %v2118
      %v2158 = vadd.f32 %v2150, %v2151
      %v2159 = vadd.f32 %v2158, %v2152
      %v2160 = vadd.f32 %v2159, %v2153
      %v2161 = vadd.f32 %v2160, %v2154
      %v2162 = vadd.f32 %v2161, %v2155
      %v2163 = vadd.f32 %v2162, %v2156
      %v2164 = vadd.f32 %v2163, %v2157
      %v2165 = vrot.slane %v2164, 4
      %v2166 = vadd.f32 %v2164, %v2165
      %v2167 = vrot.slane %v2166, 2
      %v2168 = vadd.f32 %v2166, %v2167
      %v2169 = vrot.slane %v2168, 1
      %v2170 = vadd.f32 %v2168, %v2169
      %vm2171 = vcmask 1040384
      %v2172 = vsel %vm2171, %v2149, %v2170
      %vm2173 = vcmask 1041408
      %v2174 = vsel %vm2173, %v2172, 0.0
      %2175 = vst [vmem:[%s208] sm:$0xff] %v2174
      %p2176 = scmp.lt.s32.totalorder %s16, 1
      %s2177 = scalar_select %p2176, %s16, 1
      %s2178 = smul.addr %s2177, 8
      %s2179 = smul.addr %s2178, 4
      %s2180 = scalar_lea.vmem %s3, %s2179
      %p2181 = scmp.lt.s32.totalorder %s16, 1
      %s2182 = scalar_select %p2181, %s16, 1
      %s2183 = smul.addr %s2182, 8
      %s2184 = scalar_lea.vmem %s4, %s2183
      // Predicated region
      $region33: #{residual_block_forward.4} parent=31 // pred_check
        %p2185 = pneg %p102
      $region34: #{residual_block_forward.4} parent=31 // pred_check_branch
        %2187 = sbr.rel (%p2185) target = $region36
      $region35: #{residual_block_forward.4} parent=31 // pred_region
        _
      $region36: #{residual_block_forward.4} parent=31 // pred_fallthru
        _
      // Predicated region
      $region37: #{residual_block_forward.4} parent=31 // pred_check
        %p2188 = pneg %p128
      $region38: #{residual_block_forward.4} parent=31 // pred_check_branch
        %2190 = sbr.rel (%p2188) target = $region40
      $region39: #{residual_block_forward.4} parent=31 // pred_region
        _
      $region40: #{residual_block_forward.4} parent=31 // pred_fallthru
        _
    $region32: #{residual_block_forward.4} parent=5 // pred_fallthru
      _
    %p2191 = scmp.le.s32.totalorder 2, %s11
    // Predicated region
    $region41: #{residual_block_forward.4} parent=5 // pred_check
      %p2192 = pneg %p2191
    $region42: #{residual_block_forward.4} parent=5 // pred_check_branch
      %2194 = sbr.rel (%p2192) target = $region44
    $region43: #{residual_block_forward.4} parent=5 // pred_region
      %s2195 = ssub.s32 %s11, 2
      // Predicated region
      $region45: #{residual_block_forward.4} parent=43 // pred_check
        %p2196 = pneg %p108
      $region46: #{residual_block_forward.4} parent=43 // pred_check_branch
        %2198 = sbr.rel (%p2196) target = $region48
      $region47: #{residual_block_forward.4} parent=43 // pred_region
        %p2199 = scmp.lt.s32.totalorder %s17, 1
        %s2200 = scalar_select %p2199, %s17, 1
        %s2201 = smul.addr %s2200, 8
        %s2202 = smul.addr %s2201, 4
        %s2203 = scalar_lea.vmem %s3, %s2202
      $region48: #{residual_block_forward.4} parent=43 // pred_fallthru
        _
      // Predicated region
      $region49: #{residual_block_forward.4} parent=43 // pred_check
        %p2204 = pneg %p134
      $region50: #{residual_block_forward.4} parent=43 // pred_check_branch
        %2206 = sbr.rel (%p2204) target = $region52
      $region51: #{residual_block_forward.4} parent=43 // pred_region
        %p2207 = scmp.lt.s32.totalorder %s17, 1
        %s2208 = scalar_select %p2207, %s17, 1
        %s2209 = smul.addr %s2208, 8
        %s2210 = scalar_lea.vmem %s4, %s2209
      $region52: #{residual_block_forward.4} parent=43 // pred_fallthru
        _
    $region44: #{residual_block_forward.4} parent=5 // pred_fallthru
      _
  $region6: #{residual_block_forward.4} parent=0 // loop_footer
    %s15 = sadd.s32 1, %s11
  $region7: #{residual_block_forward.4} parent=0 // loop_footer_branch
    %10 = sbr.rel target = $region3
  $region8: #{residual_block_forward.4} parent=0 // loop_exit
    _

</llo_original>
